<compile_context>
chip_gen: v5e
topology: v5e:2x2
jax: 0.10.0
libtpu: 0.0.40
codegen_flags: <defaults>
</compile_context>

<pallas_src>
import jax
import jax.numpy as jnp
from jax.experimental import pallas as pl
from jax.experimental.pallas import tpu as pltpu


def _round_up(x, m):
    return ((x + m - 1) // m) * m


# ----------------------------------------------------------------------------
# Kernel 1: full LSTM recurrence in one invocation.
# ----------------------------------------------------------------------------
def _lstm_recurrent_kernel(emb_ref, h0_ref, c0_ref, w_ih_ref, w_hh_ref, b_ref,
                           hs_ref, gx_scr):
    T, B, Hp = emb_ref.shape

    # Prologue: input projection for ALL timesteps as one big MXU matmul (M = T*B),
    # bf16 operands, f32 accumulation. Stored in VMEM scratch, read per step.
    x_all = emb_ref[...].reshape(T * B, Hp)                       # bf16
    gx = jnp.dot(x_all, w_ih_ref[...],
                 preferred_element_type=jnp.float32) + b_ref[...]  # (T*B, 4Hp) f32
    gx_scr[...] = gx.reshape(T, B, 4 * Hp)

    # Sequential recurrence over time, fully unrolled for the LLO scheduler.
    def step(t, carry):
        h, c = carry                                               # f32 (B, Hp)
        gates = gx_scr[t] + jnp.dot(h.astype(jnp.bfloat16), w_hh_ref[...],
                                    preferred_element_type=jnp.float32)
        # Each gate block is exactly Hp (=128k) lanes wide -> lane-aligned slices.
        i = jax.nn.sigmoid(gates[:, 0 * Hp:1 * Hp])
        f = jax.nn.sigmoid(gates[:, 1 * Hp:2 * Hp])
        g = jnp.tanh(gates[:, 2 * Hp:3 * Hp])
        o = jax.nn.sigmoid(gates[:, 3 * Hp:4 * Hp])
        c = f * c + i * g
        h = o * jnp.tanh(c)
        hs_ref[t] = h
        return (h, c)

    jax.lax.fori_loop(0, T, step, (h0_ref[...], c0_ref[...]), unroll=True)


# ----------------------------------------------------------------------------
# Kernel 2: decoder projection (tied weight), batched over all T*B rows.
# ----------------------------------------------------------------------------
def _decoder_kernel(h_ref, w_ref, b_ref, out_ref):
    out_ref[...] = (jnp.dot(h_ref[...].astype(jnp.bfloat16), w_ref[...],
                            preferred_element_type=jnp.float32)
                    + b_ref[...]).astype(out_ref.dtype)


# ----------------------------------------------------------------------------
# Wrapper
# ----------------------------------------------------------------------------
def lstm_forward_pallas(x_tokens, pp, h0p, c0p):
    """x_tokens: (B, T) int32 token ids. Returns (B, T, V) float32 logits."""
    B, T = x_tokens.shape
    H, V, Hp, Vp = pp["H"], pp["V"], pp["Hp"], pp["Vp"]

    # Glue: embedding gather (padded table), eval-mode dropout = identity,
    # time-major layout, bf16 for the MXU feed.
    # TODO(synk): nn.Dropout(emb_dropout) is treated as eval-mode identity (no RNG mask).
    emb = jnp.take(pp["enc_w_pad"], x_tokens, axis=0).astype(jnp.bfloat16)  # (B,T,Hp)
    emb_tm = jnp.transpose(emb, (1, 0, 2))                                  # (T,B,Hp)

    # --- recurrence: single pallas_call, everything VMEM-resident -------------
    rec_spec = pltpu.PrefetchScalarGridSpec(
        num_scalar_prefetch=0,
        grid=(1,),
        in_specs=[
            pl.BlockSpec((T, B, Hp), lambda i: (0, 0, 0)),       # emb (bf16)
            pl.BlockSpec((B, Hp), lambda i: (0, 0)),             # h0 (f32)
            pl.BlockSpec((B, Hp), lambda i: (0, 0)),             # c0 (f32)
            pl.BlockSpec((Hp, 4 * Hp), lambda i: (0, 0)),        # w_ih (bf16)
            pl.BlockSpec((Hp, 4 * Hp), lambda i: (0, 0)),        # w_hh (bf16)
            pl.BlockSpec((1, 4 * Hp), lambda i: (0, 0)),         # bias (f32)
        ],
        out_specs=pl.BlockSpec((T, B, Hp), lambda i: (0, 0, 0)),  # all hidden states
        scratch_shapes=[pltpu.VMEM((T, B, 4 * Hp), jnp.float32)],  # precomputed x@W_ih
    )
    hs = pl.pallas_call(
        _lstm_recurrent_kernel,
        out_shape=jax.ShapeDtypeStruct((T, B, Hp), jnp.float32),
        grid_spec=rec_spec,
        compiler_params=pltpu.CompilerParams(
            dimension_semantics=("arbitrary",)),   # recurrence is sequential
    )(emb_tm, h0p, c0p, pp["w_ih"], pp["w_hh"], pp["b"])

    # --- decoder: one lane-dense batched matmul, parallel over row tiles ------
    rows = T * B
    hs_flat = hs.reshape(rows, Hp)
    TM = 32 if (rows % 32 == 0 and rows > 32) else rows

    dec_spec = pltpu.PrefetchScalarGridSpec(
        num_scalar_prefetch=0,
        grid=(rows // TM,),
        in_specs=[
            pl.BlockSpec((TM, Hp), lambda i: (i, 0)),            # hidden rows
            pl.BlockSpec((Hp, Vp), lambda i: (0, 0)),            # tied decoder weight
            pl.BlockSpec((1, Vp), lambda i: (0, 0)),             # decoder bias
        ],
        out_specs=pl.BlockSpec((TM, Vp), lambda i: (i, 0)),
    )
    logits_flat = pl.pallas_call(
        _decoder_kernel,
        out_shape=jax.ShapeDtypeStruct((rows, Vp), jnp.float32),
        grid_spec=dec_spec,
        compiler_params=pltpu.CompilerParams(
            dimension_semantics=("parallel",)),    # independent tiles -> 2 TCs on v7x
    )(hs_flat, pp["w_dec"], pp["b_dec"])

    logits = jnp.transpose(logits_flat.reshape(T, B, Vp), (1, 0, 2))  # (B, T, Vp)
    return logits[:, :, :V]


# ----------------------------------------------------------------------------
# Pure-JAX reference mirroring the exact kernel math (for correctness check).
# ----------------------------------------------------------------------------
def lstm_forward_ref(x_tokens, pp, h0p, c0p):
    B, T = x_tokens.shape
    Hp, Vp, V = pp["Hp"], pp["Vp"], pp["V"]
    emb = jnp.take(pp["enc_w_pad"], x_tokens, axis=0).astype(jnp.bfloat16)
    emb_tm = jnp.transpose(emb, (1, 0, 2))                                  # (T,B,Hp)

    gx = (jnp.dot(emb_tm.reshape(T * B, Hp), pp["w_ih"],
                  preferred_element_type=jnp.float32) + pp["b"]).reshape(T, B, 4 * Hp)

    def step(carry, g_x):
        h, c = carry
        gates = g_x + jnp.dot(h.astype(jnp.bfloat16), pp["w_hh"],
                              preferred_element_type=jnp.float32)
        i = jax.nn.sigmoid(gates[:, 0 * Hp:1 * Hp])
        f = jax.nn.sigmoid(gates[:, 1 * Hp:2 * Hp])
        g = jnp.tanh(gates[:, 2 * Hp:3 * Hp])
        o = jax.nn.sigmoid(gates[:, 3 * Hp:4 * Hp])
        c = f * c + i * g
        h = o * jnp.tanh(c)
        return (h, c), h

    _, hs = jax.lax.scan(step, (h0p, c0p), gx)                              # (T,B,Hp)
    logits = (jnp.dot(hs.reshape(T * B, Hp).astype(jnp.bfloat16), pp["w_dec"],
                      preferred_element_type=jnp.float32) + pp["b_dec"])
    return jnp.transpose(logits.reshape(T, B, Vp), (1, 0, 2))[:, :, :V]


# ----------------------------------------------------------------------------
# Parameter init (mirrors the PyTorch module) + padding / bf16 prep.
# ----------------------------------------------------------------------------
def init_params(key, input_size, output_size):
    H, V = input_size, output_size
    k_enc, k_wih, k_whh, k_bih, k_bhh = jax.random.split(key, 5)

    # encoder/decoder tied weight: uniform(-0.1, 0.1); decoder bias = 0
    enc_w = jax.random.uniform(k_enc, (V, H), jnp.float32, -0.1, 0.1)

    # nn.LSTM default init: uniform(-1/sqrt(H), 1/sqrt(H)), gate order i,f,g,o
    s = 1.0 / jnp.sqrt(jnp.float32(H))
    w_ih_pt = jax.random.uniform(k_wih, (4 * H, H), jnp.float32, -s, s)
    w_hh_pt = jax.random.uniform(k_whh, (4 * H, H), jnp.float32, -s, s)
    b_ih = jax.random.uniform(k_bih, (4 * H,), jnp.float32, -s, s)
    b_hh = jax.random.uniform(k_bhh, (4 * H,), jnp.float32, -s, s)

    return {
        "enc_w": enc_w,                       # (V, H) tied weight
        "w_ih": w_ih_pt.T,                    # (H, 4H)
        "w_hh": w_hh_pt.T,                    # (H, 4H)
        "b": (b_ih + b_hh)[None, :],          # (1, 4H)
        "b_dec": jnp.zeros((1, V), jnp.float32),
    }


def _pad_gate_matrix(w, H, Hp):
    """(H, 4H) gate-ordered weight -> (Hp, 4*Hp), each gate block zero-padded."""
    w4 = w.reshape(H, 4, H)
    w4p = jnp.zeros((Hp, 4, Hp), w.dtype).at[:H, :, :H].set(w4)
    return w4p.reshape(Hp, 4 * Hp)


def prepare_padded_params(params):
    enc_w = params["enc_w"]
    V, H = enc_w.shape
    Hp = _round_up(H, 128)
    Vp = _round_up(V, 128)

    enc_w_pad = jnp.zeros((V, Hp), jnp.float32).at[:, :H].set(enc_w)
    w_ih = _pad_gate_matrix(params["w_ih"], H, Hp).astype(jnp.bfloat16)
    w_hh = _pad_gate_matrix(params["w_hh"], H, Hp).astype(jnp.bfloat16)
    b4 = params["b"].reshape(4, H)
    b = jnp.zeros((4, Hp), jnp.float32).at[:, :H].set(b4).reshape(1, 4 * Hp)
    w_dec = (jnp.zeros((Hp, Vp), jnp.float32).at[:H, :V].set(enc_w.T)
             .astype(jnp.bfloat16))                         # tied: decoder.weight = encoder.weight
    b_dec = jnp.zeros((1, Vp), jnp.float32).at[:, :V].set(params["b_dec"])

    return {"enc_w_pad": enc_w_pad, "w_ih": w_ih, "w_hh": w_hh, "b": b,
            "w_dec": w_dec, "b_dec": b_dec, "H": H, "V": V, "Hp": Hp, "Vp": Vp}


if __name__ == "__main__":
    # Small shapes consistent with the module. B=8 fills the sublane dimension.
    B, T = 8, 8
    input_size, output_size = 32, 64   # H=32 hidden/embed dim, V=64 vocab

    key = jax.random.PRNGKey(0)
    k_par, k_tok, k_h0, k_c0 = jax.random.split(key, 4)

    params = init_params(k_par, input_size, output_size)
    pp = prepare_padded_params(params)
    x_tokens = jax.random.randint(k_tok, (B, T), 0, output_size, dtype=jnp.int32)

    # h0, c0 = randn(1, B, H) in the PyTorch forward — generated deterministically here,
    # zero-padded to Hp lanes (padded lanes stay exactly zero through the recurrence).
    h0 = jax.random.normal(k_h0, (B, input_size), jnp.float32)
    c0 = jax.random.normal(k_c0, (B, input_size), jnp.float32)
    Hp = pp["Hp"]
    h0p = jnp.zeros((B, Hp), jnp.float32).at[:, :input_size].set(h0)
    c0p = jnp.zeros((B, Hp), jnp.float32).at[:, :input_size].set(c0)

    out = jax.block_until_ready(lstm_forward_pallas(x_tokens, pp, h0p, c0p))
    ref = jax.block_until_ready(lstm_forward_ref(x_tokens, pp, h0p, c0p))

    assert out.shape == (B, T, output_size)
    assert jnp.allclose(out, ref, atol=1e-4, rtol=1e-4), "mismatch vs pure-JAX reference"

    print("KERNEL_OK")
</pallas_src>

<mosaic_0001>
module attributes {stable_mosaic.version = 11 : i64} {
  func.func @_lstm_recurrent_kernel(%arg0: i32, %arg1: memref<8x8x128xbf16, #tpu.memory_space<vmem>>, %arg2: memref<8x128xf32, #tpu.memory_space<vmem>>, %arg3: memref<8x128xf32, #tpu.memory_space<vmem>>, %arg4: memref<128x512xbf16, #tpu.memory_space<vmem>>, %arg5: memref<128x512xbf16, #tpu.memory_space<vmem>>, %arg6: memref<1x512xf32, #tpu.memory_space<vmem>>, %arg7: memref<8x8x128xf32, #tpu.memory_space<vmem>>, %arg8: memref<8x8x512xf32, #tpu.memory_space<vmem>>) attributes {dimension_semantics = [#tpu.dimension_semantics<arbitrary>], iteration_bounds = array<i64: 1>, scalar_prefetch = 0 : i64, scratch_operands = 1 : i64, tpu.core_type = #tpu.core_type<tc>, window_params = [{pipeline_mode = #tpu.pipeline_mode<synchronous>, transform_indices = @transform_0, window_bounds = array<i64: 8, 8, 128>}, {pipeline_mode = #tpu.pipeline_mode<synchronous>, transform_indices = @transform_1, window_bounds = array<i64: 8, 128>}, {pipeline_mode = #tpu.pipeline_mode<synchronous>, transform_indices = @transform_2, window_bounds = array<i64: 8, 128>}, {pipeline_mode = #tpu.pipeline_mode<synchronous>, transform_indices = @transform_3, window_bounds = array<i64: 128, 512>}, {pipeline_mode = #tpu.pipeline_mode<synchronous>, transform_indices = @transform_4, window_bounds = array<i64: 128, 512>}, {pipeline_mode = #tpu.pipeline_mode<synchronous>, transform_indices = @transform_5, window_bounds = array<i64: 1, 512>}, {pipeline_mode = #tpu.pipeline_mode<synchronous>, transform_indices = @transform_6, window_bounds = array<i64: 8, 8, 128>}]} {
    %c0 = arith.constant 0 : index
    %c0_0 = arith.constant 0 : index
    %c0_1 = arith.constant 0 : index
    %0 = vector.load %arg1[%c0, %c0_0, %c0_1] : memref<8x8x128xbf16, #tpu.memory_space<vmem>>, vector<8x8x128xbf16>
    %1 = vector.shape_cast %0 : vector<8x8x128xbf16> to vector<64x128xbf16>
    %c0_2 = arith.constant 0 : index
    %c0_3 = arith.constant 0 : index
    %2 = vector.load %arg4[%c0_2, %c0_3] : memref<128x512xbf16, #tpu.memory_space<vmem>>, vector<128x512xbf16>
    %cst = arith.constant dense<0.000000e+00> : vector<64x512xf32>
    %3 = tpu.matmul %1, %2, %cst {dimension_numbers = #tpu.dot_dimension_numbers<[1], [0], [0], [1], [0, 0, 1, 1], [], []>} : vector<64x128xbf16>, vector<128x512xbf16>, vector<64x512xf32> -> vector<64x512xf32>
    %c0_4 = arith.constant 0 : index
    %c0_5 = arith.constant 0 : index
    %4 = vector.load %arg6[%c0_4, %c0_5] : memref<1x512xf32, #tpu.memory_space<vmem>>, vector<1x512xf32>
    %5 = vector.broadcast %4 : vector<1x512xf32> to vector<64x512xf32>
    %6 = arith.addf %3, %5 : vector<64x512xf32>
    %7 = vector.shape_cast %6 : vector<64x512xf32> to vector<8x8x512xf32>
    %c0_6 = arith.constant 0 : index
    %c0_7 = arith.constant 0 : index
    %c0_8 = arith.constant 0 : index
    %8 = vector.load %arg8[%c0_6, %c0_7, %c0_8] : memref<8x8x512xf32, #tpu.memory_space<vmem>>, vector<8x8x512xf32>
    tpu.vector_store %arg8[%c0_6, %c0_7, %c0_8], %7 {strides = array<i32>} : memref<8x8x512xf32, #tpu.memory_space<vmem>>, vector<8x8x512xf32>,
    %c0_9 = arith.constant 0 : index
    %c0_10 = arith.constant 0 : index
    %9 = vector.load %arg2[%c0_9, %c0_10] : memref<8x128xf32, #tpu.memory_space<vmem>>, vector<8x128xf32>
    %c0_11 = arith.constant 0 : index
    %c0_12 = arith.constant 0 : index
    %10 = vector.load %arg3[%c0_11, %c0_12] : memref<8x128xf32, #tpu.memory_space<vmem>>, vector<8x128xf32>
    %c0_i32 = arith.constant 0 : i32
    %11 = arith.index_cast %c0_i32 : i32 to index
    %c0_13 = arith.constant 0 : index
    %c0_14 = arith.constant 0 : index
    %12 = vector.load %arg8[%11, %c0_13, %c0_14] : memref<8x8x512xf32, #tpu.memory_space<vmem>>, vector<1x8x512xf32>
    %13 = vector.shape_cast %12 : vector<1x8x512xf32> to vector<8x512xf32>
    %14 = arith.truncf %9 : vector<8x128xf32> to vector<8x128xbf16>
    %c0_15 = arith.constant 0 : index
    %c0_16 = arith.constant 0 : index
    %15 = vector.load %arg5[%c0_15, %c0_16] : memref<128x512xbf16, #tpu.memory_space<vmem>>, vector<128x512xbf16>
    %cst_17 = arith.constant dense<0.000000e+00> : vector<8x512xf32>
    %16 = tpu.matmul %14, %15, %cst_17 {dimension_numbers = #tpu.dot_dimension_numbers<[1], [0], [0], [1], [0, 0, 1, 1], [], []>} : vector<8x128xbf16>, vector<128x512xbf16>, vector<8x512xf32> -> vector<8x512xf32>
    %17 = arith.addf %13, %16 : vector<8x512xf32>
    %18 = vector.extract_strided_slice %17 {offsets = [0, 0], sizes = [8, 128], strides = [1, 1]} : vector<8x512xf32> to vector<8x128xf32>
    %19 = arith.negf %18 : vector<8x128xf32>
    %20 = math.exp %19 : vector<8x128xf32>
    %cst_18 = arith.constant 1.000000e+00 : f32
    %21 = vector.broadcast %cst_18 : f32 to vector<8x128xf32>
    %22 = arith.addf %21, %20 : vector<8x128xf32>
    %23 = arith.divf %21, %22 : vector<8x128xf32>
    %24 = vector.extract_strided_slice %17 {offsets = [0, 128], sizes = [8, 128], strides = [1, 1]} : vector<8x512xf32> to vector<8x128xf32>
    %25 = arith.negf %24 : vector<8x128xf32>
    %26 = math.exp %25 : vector<8x128xf32>
    %cst_19 = arith.constant 1.000000e+00 : f32
    %27 = vector.broadcast %cst_19 : f32 to vector<8x128xf32>
    %28 = arith.addf %27, %26 : vector<8x128xf32>
    %29 = arith.divf %27, %28 : vector<8x128xf32>
    %30 = vector.extract_strided_slice %17 {offsets = [0, 256], sizes = [8, 128], strides = [1, 1]} : vector<8x512xf32> to vector<8x128xf32>
    %31 = math.tanh %30 : vector<8x128xf32>
    %32 = vector.extract_strided_slice %17 {offsets = [0, 384], sizes = [8, 128], strides = [1, 1]} : vector<8x512xf32> to vector<8x128xf32>
    %33 = arith.negf %32 : vector<8x128xf32>
    %34 = math.exp %33 : vector<8x128xf32>
    %cst_20 = arith.constant 1.000000e+00 : f32
    %35 = vector.broadcast %cst_20 : f32 to vector<8x128xf32>
    %36 = arith.addf %35, %34 : vector<8x128xf32>
    %37 = arith.divf %35, %36 : vector<8x128xf32>
    %38 = arith.mulf %29, %10 : vector<8x128xf32>
    %39 = arith.mulf %23, %31 : vector<8x128xf32>
    %40 = arith.addf %38, %39 : vector<8x128xf32>
    %41 = math.tanh %40 : vector<8x128xf32>
    %42 = arith.mulf %37, %41 : vector<8x128xf32>
    %43 = arith.index_cast %c0_i32 : i32 to index
    %c0_21 = arith.constant 0 : index
    %c0_22 = arith.constant 0 : index
    %44 = vector.load %arg7[%43, %c0_21, %c0_22] : memref<8x8x128xf32, #tpu.memory_space<vmem>>, vector<1x8x128xf32>
    %45 = vector.shape_cast %44 : vector<1x8x128xf32> to vector<8x128xf32>
    %46 = vector.shape_cast %42 : vector<8x128xf32> to vector<1x8x128xf32>
    tpu.vector_store %arg7[%43, %c0_21, %c0_22], %46 {strides = array<i32>} : memref<8x8x128xf32, #tpu.memory_space<vmem>>, vector<1x8x128xf32>,
    %c1_i32 = arith.constant 1 : i32
    %47 = arith.index_cast %c1_i32 : i32 to index
    %c0_23 = arith.constant 0 : index
    %c0_24 = arith.constant 0 : index
    %48 = vector.load %arg8[%47, %c0_23, %c0_24] : memref<8x8x512xf32, #tpu.memory_space<vmem>>, vector<1x8x512xf32>
    %49 = vector.shape_cast %48 : vector<1x8x512xf32> to vector<8x512xf32>
    %50 = arith.truncf %42 : vector<8x128xf32> to vector<8x128xbf16>
    %c0_25 = arith.constant 0 : index
    %c0_26 = arith.constant 0 : index
    %51 = vector.load %arg5[%c0_25, %c0_26] : memref<128x512xbf16, #tpu.memory_space<vmem>>, vector<128x512xbf16>
    %cst_27 = arith.constant dense<0.000000e+00> : vector<8x512xf32>
    %52 = tpu.matmul %50, %51, %cst_27 {dimension_numbers = #tpu.dot_dimension_numbers<[1], [0], [0], [1], [0, 0, 1, 1], [], []>} : vector<8x128xbf16>, vector<128x512xbf16>, vector<8x512xf32> -> vector<8x512xf32>
    %53 = arith.addf %49, %52 : vector<8x512xf32>
    %54 = vector.extract_strided_slice %53 {offsets = [0, 0], sizes = [8, 128], strides = [1, 1]} : vector<8x512xf32> to vector<8x128xf32>
    %55 = arith.negf %54 : vector<8x128xf32>
    %56 = math.exp %55 : vector<8x128xf32>
    %cst_28 = arith.constant 1.000000e+00 : f32
    %57 = vector.broadcast %cst_28 : f32 to vector<8x128xf32>
    %58 = arith.addf %57, %56 : vector<8x128xf32>
    %59 = arith.divf %57, %58 : vector<8x128xf32>
    %60 = vector.extract_strided_slice %53 {offsets = [0, 128], sizes = [8, 128], strides = [1, 1]} : vector<8x512xf32> to vector<8x128xf32>
    %61 = arith.negf %60 : vector<8x128xf32>
    %62 = math.exp %61 : vector<8x128xf32>
    %cst_29 = arith.constant 1.000000e+00 : f32
    %63 = vector.broadcast %cst_29 : f32 to vector<8x128xf32>
    %64 = arith.addf %63, %62 : vector<8x128xf32>
    %65 = arith.divf %63, %64 : vector<8x128xf32>
    %66 = vector.extract_strided_slice %53 {offsets = [0, 256], sizes = [8, 128], strides = [1, 1]} : vector<8x512xf32> to vector<8x128xf32>
    %67 = math.tanh %66 : vector<8x128xf32>
    %68 = vector.extract_strided_slice %53 {offsets = [0, 384], sizes = [8, 128], strides = [1, 1]} : vector<8x512xf32> to vector<8x128xf32>
    %69 = arith.negf %68 : vector<8x128xf32>
    %70 = math.exp %69 : vector<8x128xf32>
    %cst_30 = arith.constant 1.000000e+00 : f32
    %71 = vector.broadcast %cst_30 : f32 to vector<8x128xf32>
    %72 = arith.addf %71, %70 : vector<8x128xf32>
    %73 = arith.divf %71, %72 : vector<8x128xf32>
    %74 = arith.mulf %65, %40 : vector<8x128xf32>
    %75 = arith.mulf %59, %67 : vector<8x128xf32>
    %76 = arith.addf %74, %75 : vector<8x128xf32>
    %77 = math.tanh %76 : vector<8x128xf32>
    %78 = arith.mulf %73, %77 : vector<8x128xf32>
    %79 = arith.index_cast %c1_i32 : i32 to index
    %c0_31 = arith.constant 0 : index
    %c0_32 = arith.constant 0 : index
    %80 = vector.load %arg7[%79, %c0_31, %c0_32] : memref<8x8x128xf32, #tpu.memory_space<vmem>>, vector<1x8x128xf32>
    %81 = vector.shape_cast %80 : vector<1x8x128xf32> to vector<8x128xf32>
    %82 = vector.shape_cast %78 : vector<8x128xf32> to vector<1x8x128xf32>
    tpu.vector_store %arg7[%79, %c0_31, %c0_32], %82 {strides = array<i32>} : memref<8x8x128xf32, #tpu.memory_space<vmem>>, vector<1x8x128xf32>,
    %c2_i32 = arith.constant 2 : i32
    %83 = arith.index_cast %c2_i32 : i32 to index
    %c0_33 = arith.constant 0 : index
    %c0_34 = arith.constant 0 : index
    %84 = vector.load %arg8[%83, %c0_33, %c0_34] : memref<8x8x512xf32, #tpu.memory_space<vmem>>, vector<1x8x512xf32>
    %85 = vector.shape_cast %84 : vector<1x8x512xf32> to vector<8x512xf32>
    %86 = arith.truncf %78 : vector<8x128xf32> to vector<8x128xbf16>
    %c0_35 = arith.constant 0 : index
    %c0_36 = arith.constant 0 : index
    %87 = vector.load %arg5[%c0_35, %c0_36] : memref<128x512xbf16, #tpu.memory_space<vmem>>, vector<128x512xbf16>
    %cst_37 = arith.constant dense<0.000000e+00> : vector<8x512xf32>
    %88 = tpu.matmul %86, %87, %cst_37 {dimension_numbers = #tpu.dot_dimension_numbers<[1], [0], [0], [1], [0, 0, 1, 1], [], []>} : vector<8x128xbf16>, vector<128x512xbf16>, vector<8x512xf32> -> vector<8x512xf32>
    %89 = arith.addf %85, %88 : vector<8x512xf32>
    %90 = vector.extract_strided_slice %89 {offsets = [0, 0], sizes = [8, 128], strides = [1, 1]} : vector<8x512xf32> to vector<8x128xf32>
    %91 = arith.negf %90 : vector<8x128xf32>
    %92 = math.exp %91 : vector<8x128xf32>
    %cst_38 = arith.constant 1.000000e+00 : f32
    %93 = vector.broadcast %cst_38 : f32 to vector<8x128xf32>
    %94 = arith.addf %93, %92 : vector<8x128xf32>
    %95 = arith.divf %93, %94 : vector<8x128xf32>
    %96 = vector.extract_strided_slice %89 {offsets = [0, 128], sizes = [8, 128], strides = [1, 1]} : vector<8x512xf32> to vector<8x128xf32>
    %97 = arith.negf %96 : vector<8x128xf32>
    %98 = math.exp %97 : vector<8x128xf32>
    %cst_39 = arith.constant 1.000000e+00 : f32
    %99 = vector.broadcast %cst_39 : f32 to vector<8x128xf32>
    %100 = arith.addf %99, %98 : vector<8x128xf32>
    %101 = arith.divf %99, %100 : vector<8x128xf32>
    %102 = vector.extract_strided_slice %89 {offsets = [0, 256], sizes = [8, 128], strides = [1, 1]} : vector<8x512xf32> to vector<8x128xf32>
    %103 = math.tanh %102 : vector<8x128xf32>
    %104 = vector.extract_strided_slice %89 {offsets = [0, 384], sizes = [8, 128], strides = [1, 1]} : vector<8x512xf32> to vector<8x128xf32>
    %105 = arith.negf %104 : vector<8x128xf32>
    %106 = math.exp %105 : vector<8x128xf32>
    %cst_40 = arith.constant 1.000000e+00 : f32
    %107 = vector.broadcast %cst_40 : f32 to vector<8x128xf32>
    %108 = arith.addf %107, %106 : vector<8x128xf32>
    %109 = arith.divf %107, %108 : vector<8x128xf32>
    %110 = arith.mulf %101, %76 : vector<8x128xf32>
    %111 = arith.mulf %95, %103 : vector<8x128xf32>
    %112 = arith.addf %110, %111 : vector<8x128xf32>
    %113 = math.tanh %112 : vector<8x128xf32>
    %114 = arith.mulf %109, %113 : vector<8x128xf32>
    %115 = arith.index_cast %c2_i32 : i32 to index
    %c0_41 = arith.constant 0 : index
    %c0_42 = arith.constant 0 : index
    %116 = vector.load %arg7[%115, %c0_41, %c0_42] : memref<8x8x128xf32, #tpu.memory_space<vmem>>, vector<1x8x128xf32>
    %117 = vector.shape_cast %116 : vector<1x8x128xf32> to vector<8x128xf32>
    %118 = vector.shape_cast %114 : vector<8x128xf32> to vector<1x8x128xf32>
    tpu.vector_store %arg7[%115, %c0_41, %c0_42], %118 {strides = array<i32>} : memref<8x8x128xf32, #tpu.memory_space<vmem>>, vector<1x8x128xf32>,
    %c3_i32 = arith.constant 3 : i32
    %119 = arith.index_cast %c3_i32 : i32 to index
    %c0_43 = arith.constant 0 : index
    %c0_44 = arith.constant 0 : index
    %120 = vector.load %arg8[%119, %c0_43, %c0_44] : memref<8x8x512xf32, #tpu.memory_space<vmem>>, vector<1x8x512xf32>
    %121 = vector.shape_cast %120 : vector<1x8x512xf32> to vector<8x512xf32>
    %122 = arith.truncf %114 : vector<8x128xf32> to vector<8x128xbf16>
    %c0_45 = arith.constant 0 : index
    %c0_46 = arith.constant 0 : index
    %123 = vector.load %arg5[%c0_45, %c0_46] : memref<128x512xbf16, #tpu.memory_space<vmem>>, vector<128x512xbf16>
    %cst_47 = arith.constant dense<0.000000e+00> : vector<8x512xf32>
    %124 = tpu.matmul %122, %123, %cst_47 {dimension_numbers = #tpu.dot_dimension_numbers<[1], [0], [0], [1], [0, 0, 1, 1], [], []>} : vector<8x128xbf16>, vector<128x512xbf16>, vector<8x512xf32> -> vector<8x512xf32>
    %125 = arith.addf %121, %124 : vector<8x512xf32>
    %126 = vector.extract_strided_slice %125 {offsets = [0, 0], sizes = [8, 128], strides = [1, 1]} : vector<8x512xf32> to vector<8x128xf32>
    %127 = arith.negf %126 : vector<8x128xf32>
    %128 = math.exp %127 : vector<8x128xf32>
    %cst_48 = arith.constant 1.000000e+00 : f32
    %129 = vector.broadcast %cst_48 : f32 to vector<8x128xf32>
    %130 = arith.addf %129, %128 : vector<8x128xf32>
    %131 = arith.divf %129, %130 : vector<8x128xf32>
    %132 = vector.extract_strided_slice %125 {offsets = [0, 128], sizes = [8, 128], strides = [1, 1]} : vector<8x512xf32> to vector<8x128xf32>
    %133 = arith.negf %132 : vector<8x128xf32>
    %134 = math.exp %133 : vector<8x128xf32>
    %cst_49 = arith.constant 1.000000e+00 : f32
    %135 = vector.broadcast %cst_49 : f32 to vector<8x128xf32>
    %136 = arith.addf %135, %134 : vector<8x128xf32>
    %137 = arith.divf %135, %136 : vector<8x128xf32>
    %138 = vector.extract_strided_slice %125 {offsets = [0, 256], sizes = [8, 128], strides = [1, 1]} : vector<8x512xf32> to vector<8x128xf32>
    %139 = math.tanh %138 : vector<8x128xf32>
    %140 = vector.extract_strided_slice %125 {offsets = [0, 384], sizes = [8, 128], strides = [1, 1]} : vector<8x512xf32> to vector<8x128xf32>
    %141 = arith.negf %140 : vector<8x128xf32>
    %142 = math.exp %141 : vector<8x128xf32>
    %cst_50 = arith.constant 1.000000e+00 : f32
    %143 = vector.broadcast %cst_50 : f32 to vector<8x128xf32>
    %144 = arith.addf %143, %142 : vector<8x128xf32>
    %145 = arith.divf %143, %144 : vector<8x128xf32>
    %146 = arith.mulf %137, %112 : vector<8x128xf32>
    %147 = arith.mulf %131, %139 : vector<8x128xf32>
    %148 = arith.addf %146, %147 : vector<8x128xf32>
    %149 = math.tanh %148 : vector<8x128xf32>
    %150 = arith.mulf %145, %149 : vector<8x128xf32>
    %151 = arith.index_cast %c3_i32 : i32 to index
    %c0_51 = arith.constant 0 : index
    %c0_52 = arith.constant 0 : index
    %152 = vector.load %arg7[%151, %c0_51, %c0_52] : memref<8x8x128xf32, #tpu.memory_space<vmem>>, vector<1x8x128xf32>
    %153 = vector.shape_cast %152 : vector<1x8x128xf32> to vector<8x128xf32>
    %154 = vector.shape_cast %150 : vector<8x128xf32> to vector<1x8x128xf32>
    tpu.vector_store %arg7[%151, %c0_51, %c0_52], %154 {strides = array<i32>} : memref<8x8x128xf32, #tpu.memory_space<vmem>>, vector<1x8x128xf32>,
    %c4_i32 = arith.constant 4 : i32
    %155 = arith.index_cast %c4_i32 : i32 to index
    %c0_53 = arith.constant 0 : index
    %c0_54 = arith.constant 0 : index
    %156 = vector.load %arg8[%155, %c0_53, %c0_54] : memref<8x8x512xf32, #tpu.memory_space<vmem>>, vector<1x8x512xf32>
    %157 = vector.shape_cast %156 : vector<1x8x512xf32> to vector<8x512xf32>
    %158 = arith.truncf %150 : vector<8x128xf32> to vector<8x128xbf16>
    %c0_55 = arith.constant 0 : index
    %c0_56 = arith.constant 0 : index
    %159 = vector.load %arg5[%c0_55, %c0_56] : memref<128x512xbf16, #tpu.memory_space<vmem>>, vector<128x512xbf16>
    %cst_57 = arith.constant dense<0.000000e+00> : vector<8x512xf32>
    %160 = tpu.matmul %158, %159, %cst_57 {dimension_numbers = #tpu.dot_dimension_numbers<[1], [0], [0], [1], [0, 0, 1, 1], [], []>} : vector<8x128xbf16>, vector<128x512xbf16>, vector<8x512xf32> -> vector<8x512xf32>
    %161 = arith.addf %157, %160 : vector<8x512xf32>
    %162 = vector.extract_strided_slice %161 {offsets = [0, 0], sizes = [8, 128], strides = [1, 1]} : vector<8x512xf32> to vector<8x128xf32>
    %163 = arith.negf %162 : vector<8x128xf32>
    %164 = math.exp %163 : vector<8x128xf32>
    %cst_58 = arith.constant 1.000000e+00 : f32
    %165 = vector.broadcast %cst_58 : f32 to vector<8x128xf32>
    %166 = arith.addf %165, %164 : vector<8x128xf32>
    %167 = arith.divf %165, %166 : vector<8x128xf32>
    %168 = vector.extract_strided_slice %161 {offsets = [0, 128], sizes = [8, 128], strides = [1, 1]} : vector<8x512xf32> to vector<8x128xf32>
    %169 = arith.negf %168 : vector<8x128xf32>
    %170 = math.exp %169 : vector<8x128xf32>
    %cst_59 = arith.constant 1.000000e+00 : f32
    %171 = vector.broadcast %cst_59 : f32 to vector<8x128xf32>
    %172 = arith.addf %171, %170 : vector<8x128xf32>
    %173 = arith.divf %171, %172 : vector<8x128xf32>
    %174 = vector.extract_strided_slice %161 {offsets = [0, 256], sizes = [8, 128], strides = [1, 1]} : vector<8x512xf32> to vector<8x128xf32>
    %175 = math.tanh %174 : vector<8x128xf32>
    %176 = vector.extract_strided_slice %161 {offsets = [0, 384], sizes = [8, 128], strides = [1, 1]} : vector<8x512xf32> to vector<8x128xf32>
    %177 = arith.negf %176 : vector<8x128xf32>
    %178 = math.exp %177 : vector<8x128xf32>
    %cst_60 = arith.constant 1.000000e+00 : f32
    %179 = vector.broadcast %cst_60 : f32 to vector<8x128xf32>
    %180 = arith.addf %179, %178 : vector<8x128xf32>
    %181 = arith.divf %179, %180 : vector<8x128xf32>
    %182 = arith.mulf %173, %148 : vector<8x128xf32>
    %183 = arith.mulf %167, %175 : vector<8x128xf32>
    %184 = arith.addf %182, %183 : vector<8x128xf32>
    %185 = math.tanh %184 : vector<8x128xf32>
    %186 = arith.mulf %181, %185 : vector<8x128xf32>
    %187 = arith.index_cast %c4_i32 : i32 to index
    %c0_61 = arith.constant 0 : index
    %c0_62 = arith.constant 0 : index
    %188 = vector.load %arg7[%187, %c0_61, %c0_62] : memref<8x8x128xf32, #tpu.memory_space<vmem>>, vector<1x8x128xf32>
    %189 = vector.shape_cast %188 : vector<1x8x128xf32> to vector<8x128xf32>
    %190 = vector.shape_cast %186 : vector<8x128xf32> to vector<1x8x128xf32>
    tpu.vector_store %arg7[%187, %c0_61, %c0_62], %190 {strides = array<i32>} : memref<8x8x128xf32, #tpu.memory_space<vmem>>, vector<1x8x128xf32>,
    %c5_i32 = arith.constant 5 : i32
    %191 = arith.index_cast %c5_i32 : i32 to index
    %c0_63 = arith.constant 0 : index
    %c0_64 = arith.constant 0 : index
    %192 = vector.load %arg8[%191, %c0_63, %c0_64] : memref<8x8x512xf32, #tpu.memory_space<vmem>>, vector<1x8x512xf32>
    %193 = vector.shape_cast %192 : vector<1x8x512xf32> to vector<8x512xf32>
    %194 = arith.truncf %186 : vector<8x128xf32> to vector<8x128xbf16>
    %c0_65 = arith.constant 0 : index
    %c0_66 = arith.constant 0 : index
    %195 = vector.load %arg5[%c0_65, %c0_66] : memref<128x512xbf16, #tpu.memory_space<vmem>>, vector<128x512xbf16>
    %cst_67 = arith.constant dense<0.000000e+00> : vector<8x512xf32>
    %196 = tpu.matmul %194, %195, %cst_67 {dimension_numbers = #tpu.dot_dimension_numbers<[1], [0], [0], [1], [0, 0, 1, 1], [], []>} : vector<8x128xbf16>, vector<128x512xbf16>, vector<8x512xf32> -> vector<8x512xf32>
    %197 = arith.addf %193, %196 : vector<8x512xf32>
    %198 = vector.extract_strided_slice %197 {offsets = [0, 0], sizes = [8, 128], strides = [1, 1]} : vector<8x512xf32> to vector<8x128xf32>
    %199 = arith.negf %198 : vector<8x128xf32>
    %200 = math.exp %199 : vector<8x128xf32>
    %cst_68 = arith.constant 1.000000e+00 : f32
    %201 = vector.broadcast %cst_68 : f32 to vector<8x128xf32>
    %202 = arith.addf %201, %200 : vector<8x128xf32>
    %203 = arith.divf %201, %202 : vector<8x128xf32>
    %204 = vector.extract_strided_slice %197 {offsets = [0, 128], sizes = [8, 128], strides = [1, 1]} : vector<8x512xf32> to vector<8x128xf32>
    %205 = arith.negf %204 : vector<8x128xf32>
    %206 = math.exp %205 : vector<8x128xf32>
    %cst_69 = arith.constant 1.000000e+00 : f32
    %207 = vector.broadcast %cst_69 : f32 to vector<8x128xf32>
    %208 = arith.addf %207, %206 : vector<8x128xf32>
    %209 = arith.divf %207, %208 : vector<8x128xf32>
    %210 = vector.extract_strided_slice %197 {offsets = [0, 256], sizes = [8, 128], strides = [1, 1]} : vector<8x512xf32> to vector<8x128xf32>
    %211 = math.tanh %210 : vector<8x128xf32>
    %212 = vector.extract_strided_slice %197 {offsets = [0, 384], sizes = [8, 128], strides = [1, 1]} : vector<8x512xf32> to vector<8x128xf32>
    %213 = arith.negf %212 : vector<8x128xf32>
    %214 = math.exp %213 : vector<8x128xf32>
    %cst_70 = arith.constant 1.000000e+00 : f32
    %215 = vector.broadcast %cst_70 : f32 to vector<8x128xf32>
    %216 = arith.addf %215, %214 : vector<8x128xf32>
    %217 = arith.divf %215, %216 : vector<8x128xf32>
    %218 = arith.mulf %209, %184 : vector<8x128xf32>
    %219 = arith.mulf %203, %211 : vector<8x128xf32>
    %220 = arith.addf %218, %219 : vector<8x128xf32>
    %221 = math.tanh %220 : vector<8x128xf32>
    %222 = arith.mulf %217, %221 : vector<8x128xf32>
    %223 = arith.index_cast %c5_i32 : i32 to index
    %c0_71 = arith.constant 0 : index
    %c0_72 = arith.constant 0 : index
    %224 = vector.load %arg7[%223, %c0_71, %c0_72] : memref<8x8x128xf32, #tpu.memory_space<vmem>>, vector<1x8x128xf32>
    %225 = vector.shape_cast %224 : vector<1x8x128xf32> to vector<8x128xf32>
    %226 = vector.shape_cast %222 : vector<8x128xf32> to vector<1x8x128xf32>
    tpu.vector_store %arg7[%223, %c0_71, %c0_72], %226 {strides = array<i32>} : memref<8x8x128xf32, #tpu.memory_space<vmem>>, vector<1x8x128xf32>,
    %c6_i32 = arith.constant 6 : i32
    %227 = arith.index_cast %c6_i32 : i32 to index
    %c0_73 = arith.constant 0 : index
    %c0_74 = arith.constant 0 : index
    %228 = vector.load %arg8[%227, %c0_73, %c0_74] : memref<8x8x512xf32, #tpu.memory_space<vmem>>, vector<1x8x512xf32>
    %229 = vector.shape_cast %228 : vector<1x8x512xf32> to vector<8x512xf32>
    %230 = arith.truncf %222 : vector<8x128xf32> to vector<8x128xbf16>
    %c0_75 = arith.constant 0 : index
    %c0_76 = arith.constant 0 : index
    %231 = vector.load %arg5[%c0_75, %c0_76] : memref<128x512xbf16, #tpu.memory_space<vmem>>, vector<128x512xbf16>
    %cst_77 = arith.constant dense<0.000000e+00> : vector<8x512xf32>
    %232 = tpu.matmul %230, %231, %cst_77 {dimension_numbers = #tpu.dot_dimension_numbers<[1], [0], [0], [1], [0, 0, 1, 1], [], []>} : vector<8x128xbf16>, vector<128x512xbf16>, vector<8x512xf32> -> vector<8x512xf32>
    %233 = arith.addf %229, %232 : vector<8x512xf32>
    %234 = vector.extract_strided_slice %233 {offsets = [0, 0], sizes = [8, 128], strides = [1, 1]} : vector<8x512xf32> to vector<8x128xf32>
    %235 = arith.negf %234 : vector<8x128xf32>
    %236 = math.exp %235 : vector<8x128xf32>
    %cst_78 = arith.constant 1.000000e+00 : f32
    %237 = vector.broadcast %cst_78 : f32 to vector<8x128xf32>
    %238 = arith.addf %237, %236 : vector<8x128xf32>
    %239 = arith.divf %237, %238 : vector<8x128xf32>
    %240 = vector.extract_strided_slice %233 {offsets = [0, 128], sizes = [8, 128], strides = [1, 1]} : vector<8x512xf32> to vector<8x128xf32>
    %241 = arith.negf %240 : vector<8x128xf32>
    %242 = math.exp %241 : vector<8x128xf32>
    %cst_79 = arith.constant 1.000000e+00 : f32
    %243 = vector.broadcast %cst_79 : f32 to vector<8x128xf32>
    %244 = arith.addf %243, %242 : vector<8x128xf32>
    %245 = arith.divf %243, %244 : vector<8x128xf32>
    %246 = vector.extract_strided_slice %233 {offsets = [0, 256], sizes = [8, 128], strides = [1, 1]} : vector<8x512xf32> to vector<8x128xf32>
    %247 = math.tanh %246 : vector<8x128xf32>
    %248 = vector.extract_strided_slice %233 {offsets = [0, 384], sizes = [8, 128], strides = [1, 1]} : vector<8x512xf32> to vector<8x128xf32>
    %249 = arith.negf %248 : vector<8x128xf32>
    %250 = math.exp %249 : vector<8x128xf32>
    %cst_80 = arith.constant 1.000000e+00 : f32
    %251 = vector.broadcast %cst_80 : f32 to vector<8x128xf32>
    %252 = arith.addf %251, %250 : vector<8x128xf32>
    %253 = arith.divf %251, %252 : vector<8x128xf32>
    %254 = arith.mulf %245, %220 : vector<8x128xf32>
    %255 = arith.mulf %239, %247 : vector<8x128xf32>
    %256 = arith.addf %254, %255 : vector<8x128xf32>
    %257 = math.tanh %256 : vector<8x128xf32>
    %258 = arith.mulf %253, %257 : vector<8x128xf32>
    %259 = arith.index_cast %c6_i32 : i32 to index
    %c0_81 = arith.constant 0 : index
    %c0_82 = arith.constant 0 : index
    %260 = vector.load %arg7[%259, %c0_81, %c0_82] : memref<8x8x128xf32, #tpu.memory_space<vmem>>, vector<1x8x128xf32>
    %261 = vector.shape_cast %260 : vector<1x8x128xf32> to vector<8x128xf32>
    %262 = vector.shape_cast %258 : vector<8x128xf32> to vector<1x8x128xf32>
    tpu.vector_store %arg7[%259, %c0_81, %c0_82], %262 {strides = array<i32>} : memref<8x8x128xf32, #tpu.memory_space<vmem>>, vector<1x8x128xf32>,
    %c7_i32 = arith.constant 7 : i32
    %263 = arith.index_cast %c7_i32 : i32 to index
    %c0_83 = arith.constant 0 : index
    %c0_84 = arith.constant 0 : index
    %264 = vector.load %arg8[%263, %c0_83, %c0_84] : memref<8x8x512xf32, #tpu.memory_space<vmem>>, vector<1x8x512xf32>
    %265 = vector.shape_cast %264 : vector<1x8x512xf32> to vector<8x512xf32>
    %266 = arith.truncf %258 : vector<8x128xf32> to vector<8x128xbf16>
    %c0_85 = arith.constant 0 : index
    %c0_86 = arith.constant 0 : index
    %267 = vector.load %arg5[%c0_85, %c0_86] : memref<128x512xbf16, #tpu.memory_space<vmem>>, vector<128x512xbf16>
    %cst_87 = arith.constant dense<0.000000e+00> : vector<8x512xf32>
    %268 = tpu.matmul %266, %267, %cst_87 {dimension_numbers = #tpu.dot_dimension_numbers<[1], [0], [0], [1], [0, 0, 1, 1], [], []>} : vector<8x128xbf16>, vector<128x512xbf16>, vector<8x512xf32> -> vector<8x512xf32>
    %269 = arith.addf %265, %268 : vector<8x512xf32>
    %270 = vector.extract_strided_slice %269 {offsets = [0, 0], sizes = [8, 128], strides = [1, 1]} : vector<8x512xf32> to vector<8x128xf32>
    %271 = arith.negf %270 : vector<8x128xf32>
    %272 = math.exp %271 : vector<8x128xf32>
    %cst_88 = arith.constant 1.000000e+00 : f32
    %273 = vector.broadcast %cst_88 : f32 to vector<8x128xf32>
    %274 = arith.addf %273, %272 : vector<8x128xf32>
    %275 = arith.divf %273, %274 : vector<8x128xf32>
    %276 = vector.extract_strided_slice %269 {offsets = [0, 128], sizes = [8, 128], strides = [1, 1]} : vector<8x512xf32> to vector<8x128xf32>
    %277 = arith.negf %276 : vector<8x128xf32>
    %278 = math.exp %277 : vector<8x128xf32>
    %cst_89 = arith.constant 1.000000e+00 : f32
    %279 = vector.broadcast %cst_89 : f32 to vector<8x128xf32>
    %280 = arith.addf %279, %278 : vector<8x128xf32>
    %281 = arith.divf %279, %280 : vector<8x128xf32>
    %282 = vector.extract_strided_slice %269 {offsets = [0, 256], sizes = [8, 128], strides = [1, 1]} : vector<8x512xf32> to vector<8x128xf32>
    %283 = math.tanh %282 : vector<8x128xf32>
    %284 = vector.extract_strided_slice %269 {offsets = [0, 384], sizes = [8, 128], strides = [1, 1]} : vector<8x512xf32> to vector<8x128xf32>
    %285 = arith.negf %284 : vector<8x128xf32>
    %286 = math.exp %285 : vector<8x128xf32>
    %cst_90 = arith.constant 1.000000e+00 : f32
    %287 = vector.broadcast %cst_90 : f32 to vector<8x128xf32>
    %288 = arith.addf %287, %286 : vector<8x128xf32>
    %289 = arith.divf %287, %288 : vector<8x128xf32>
    %290 = arith.mulf %281, %256 : vector<8x128xf32>
    %291 = arith.mulf %275, %283 : vector<8x128xf32>
    %292 = arith.addf %290, %291 : vector<8x128xf32>
    %293 = math.tanh %292 : vector<8x128xf32>
    %294 = arith.mulf %289, %293 : vector<8x128xf32>
    %295 = arith.index_cast %c7_i32 : i32 to index
    %c0_91 = arith.constant 0 : index
    %c0_92 = arith.constant 0 : index
    %296 = vector.load %arg7[%295, %c0_91, %c0_92] : memref<8x8x128xf32, #tpu.memory_space<vmem>>, vector<1x8x128xf32>
    %297 = vector.shape_cast %296 : vector<1x8x128xf32> to vector<8x128xf32>
    %298 = vector.shape_cast %294 : vector<8x128xf32> to vector<1x8x128xf32>
    tpu.vector_store %arg7[%295, %c0_91, %c0_92], %298 {strides = array<i32>} : memref<8x8x128xf32, #tpu.memory_space<vmem>>, vector<1x8x128xf32>,
    %c8_i32 = arith.constant 8 : i32
    return
  }
  func.func @transform_0(%arg0: i32) -> (i32, i32, i32) {
    %c0_i32 = arith.constant 0 : i32
    %c0_i32_0 = arith.constant 0 : i32
    %c0_i32_1 = arith.constant 0 : i32
    %c0_i32_2 = arith.constant 0 : i32
    return %c0_i32, %c0_i32_0, %c0_i32_1 : i32, i32, i32
  }
  func.func @transform_1(%arg0: i32) -> (i32, i32) {
    %c0_i32 = arith.constant 0 : i32
    %c0_i32_0 = arith.constant 0 : i32
    %c0_i32_1 = arith.constant 0 : i32
    return %c0_i32, %c0_i32_0 : i32, i32
  }
  func.func @transform_2(%arg0: i32) -> (i32, i32) {
    %c0_i32 = arith.constant 0 : i32
    %c0_i32_0 = arith.constant 0 : i32
    %c0_i32_1 = arith.constant 0 : i32
    return %c0_i32, %c0_i32_0 : i32, i32
  }
  func.func @transform_3(%arg0: i32) -> (i32, i32) {
    %c0_i32 = arith.constant 0 : i32
    %c0_i32_0 = arith.constant 0 : i32
    %c0_i32_1 = arith.constant 0 : i32
    return %c0_i32, %c0_i32_0 : i32, i32
  }
  func.func @transform_4(%arg0: i32) -> (i32, i32) {
    %c0_i32 = arith.constant 0 : i32
    %c0_i32_0 = arith.constant 0 : i32
    %c0_i32_1 = arith.constant 0 : i32
    return %c0_i32, %c0_i32_0 : i32, i32
  }
  func.func @transform_5(%arg0: i32) -> (i32, i32) {
    %c0_i32 = arith.constant 0 : i32
    %c0_i32_0 = arith.constant 0 : i32
    %c0_i32_1 = arith.constant 0 : i32
    return %c0_i32, %c0_i32_0 : i32, i32
  }
  func.func @transform_6(%arg0: i32) -> (i32, i32, i32) {
    %c0_i32 = arith.constant 0 : i32
    %c0_i32_0 = arith.constant 0 : i32
    %c0_i32_1 = arith.constant 0 : i32
    %c0_i32_2 = arith.constant 0 : i32
    return %c0_i32, %c0_i32_0, %c0_i32_1 : i32, i32, i32
  }
}

</mosaic_0001>

<llo_original>
// kernel: tpu_custom_call.1
$region0: #{tpu_custom_call.1}
  #allocation0 [shape = 'u32[]', space=smem, size = 0x4, offset = 0x4, fixed_abs, tag = 'smem constant byte address 0x4 - core index']
  #allocation1 [shape = 'u32[72,128]{1,0:T(1,128)}', space=vmem, size = 0x9000, scoped, tag = 'internal scratch']
  #allocation2 [shape = 'f32[8,8,512]{2,1,0:T(8,128)}', space=vmem, size = 0x20000, scoped, tag = 'scratch operand']
  %s0 = inlined_call_operand.hbm [shape: bf16[8,8,128], index: 0, kind: input, shape index: {}]
  %s1 = inlined_call_operand.hbm [shape: f32[8,128], index: 1, kind: input, shape index: {}]
  %s2 = inlined_call_operand.hbm [shape: f32[8,128], index: 2, kind: input, shape index: {}]
  %s3 = inlined_call_operand.hbm [shape: bf16[128,512], index: 3, kind: input, shape index: {}]
  %s4 = inlined_call_operand.hbm [shape: bf16[128,512], index: 4, kind: input, shape index: {}]
  %s5 = inlined_call_operand.vmem [shape: f32[1,512], index: 5, kind: input, shape index: {}]
  %s6 = inlined_call_operand.hbm [shape: f32[8,8,128], index: 6, kind: output, shape index: {}]
  %s7 = sld [smem:[#allocation0]]
  $region54: #{tpu_custom_call.1} parent=0
    _
  %s9 = ssub.s32 1, %s7
  %s10 = scalar_select 0, %s9, %s7
  $region1: #{tpu_custom_call.1} parent=0
    #allocation3 [shape = 'u8[16384]{0}', space=vmem, size = 0x4000, scoped, tag = 'input window, operand 0, single buffered']
    #allocation4 [shape = 's32[1]{0}', space=sflag, size = 0x4, scoped, tag = 'scoped memory for tpu_custom_call.1']
    #allocation5 [shape = 's32[1]{0}', space=sflag, size = 0x4, scoped, tag = 'scoped memory for tpu_custom_call.1']
    #allocation6 [shape = 'u8[4096]{0}', space=vmem, size = 0x1000, scoped, tag = 'input window, operand 1, single buffered']
    #allocation7 [shape = 's32[1]{0}', space=sflag, size = 0x4, scoped, tag = 'scoped memory for tpu_custom_call.1']
    #allocation8 [shape = 'u8[4096]{0}', space=vmem, size = 0x1000, scoped, tag = 'input window, operand 2, single buffered']
    #allocation9 [shape = 'u8[131072]{0}', space=vmem, size = 0x20000, scoped, tag = 'input window, operand 3, single buffered']
    #allocation10 [shape = 's32[1]{0}', space=sflag, size = 0x4, scoped, tag = 'scoped memory for tpu_custom_call.1']
    #allocation11 [shape = 'u8[131072]{0}', space=vmem, size = 0x20000, scoped, tag = 'input window, operand 4, single buffered']
    #allocation12 [shape = 'u8[32768]{0}', space=vmem, size = 0x8000, scoped, tag = 'output window, operand 0, single buffered']
    %11 = vsyncpa [#allocation4], 0
    %12 = vsyncpa [#allocation7], 0
    %13 = vsyncpa [#allocation10], 0
    %14 = vsyncpa [#allocation5], 0
    // Predicated region
    $region2: #{tpu_custom_call.1} parent=1 // pred_check
      _
    $region3: #{tpu_custom_call.1} parent=1 // pred_check_branch
      %16 = sbr.rel (0) target = $region5
    $region4: #{tpu_custom_call.1} parent=1 // pred_region
      %18 = vsyncadd [#allocation4], 0
      %s19 = sshll.u32 %s0, 4
      %s20 = int_to_ptr.hbm [resolvable:$true] %s19
      %s21 = sshll.u32 [#allocation3], 4
      %s22 = int_to_ptr.vmem [resolvable:$true] %s21
      %27 = dma.hbm_to_vmem [thread:$0]  %s20, 512, %s22, [#allocation4], 64, 64, 4
    $region5: #{tpu_custom_call.1} parent=1 // pred_fallthru
      _
    // Predicated region
    $region6: #{tpu_custom_call.1} parent=1 // pred_check
      _
    $region7: #{tpu_custom_call.1} parent=1 // pred_check_branch
      %29 = sbr.rel (0) target = $region9
    $region8: #{tpu_custom_call.1} parent=1 // pred_region
      %31 = vsyncadd [#allocation7], 0
      %s33 = sshll.u32 %s1, 4
      %s34 = int_to_ptr.hbm [resolvable:$true] %s33
      %s35 = sshll.u32 [#allocation6], 4
      %s36 = int_to_ptr.vmem [resolvable:$true] %s35
      %38 = dma.hbm_to_vmem [thread:$0]  %s34, 128, %s36, [#allocation7]
    $region9: #{tpu_custom_call.1} parent=1 // pred_fallthru
      _
    // Predicated region
    $region10: #{tpu_custom_call.1} parent=1 // pred_check
      _
    $region11: #{tpu_custom_call.1} parent=1 // pred_check_branch
      %40 = sbr.rel (0) target = $region13
    $region12: #{tpu_custom_call.1} parent=1 // pred_region
      %42 = vsyncadd [#allocation7], 0
      %s44 = sshll.u32 %s2, 4
      %s45 = int_to_ptr.hbm [resolvable:$true] %s44
      %s46 = sshll.u32 [#allocation8], 4
      %s47 = int_to_ptr.vmem [resolvable:$true] %s46
      %49 = dma.hbm_to_vmem [thread:$0]  %s45, 128, %s47, [#allocation7]
    $region13: #{tpu_custom_call.1} parent=1 // pred_fallthru
      _
    // Predicated region
    $region14: #{tpu_custom_call.1} parent=1 // pred_check
      _
    $region15: #{tpu_custom_call.1} parent=1 // pred_check_branch
      %51 = sbr.rel (0) target = $region17
    $region16: #{tpu_custom_call.1} parent=1 // pred_region
      %53 = vsyncadd [#allocation10], 0
      %s54 = sshll.u32 %s3, 4
      %s55 = int_to_ptr.hbm [resolvable:$true] %s54
      %s56 = sshll.u32 [#allocation9], 4
      %s57 = int_to_ptr.vmem [resolvable:$true] %s56
      %62 = dma.hbm_to_vmem [thread:$0]  %s55, 4096, %s57, [#allocation10], 256, 256, 16
    $region17: #{tpu_custom_call.1} parent=1 // pred_fallthru
      _
    // Predicated region
    $region18: #{tpu_custom_call.1} parent=1 // pred_check
      _
    $region19: #{tpu_custom_call.1} parent=1 // pred_check_branch
      %64 = sbr.rel (0) target = $region21
    $region20: #{tpu_custom_call.1} parent=1 // pred_region
      %66 = vsyncadd [#allocation10], 0
      %s67 = sshll.u32 %s4, 4
      %s68 = int_to_ptr.hbm [resolvable:$true] %s67
      %s69 = sshll.u32 [#allocation11], 4
      %s70 = int_to_ptr.vmem [resolvable:$true] %s69
      %75 = dma.hbm_to_vmem [thread:$0]  %s68, 4096, %s70, [#allocation10], 256, 256, 16
    $region21: #{tpu_custom_call.1} parent=1 // pred_fallthru
      _
    // Predicated region
    $region22: #{tpu_custom_call.1} parent=1 // pred_check
      _
    $region23: #{tpu_custom_call.1} parent=1 // pred_check_branch
      %77 = sbr.rel (0) target = $region25
    $region24: #{tpu_custom_call.1} parent=1 // pred_region
      _
    $region25: #{tpu_custom_call.1} parent=1 // pred_fallthru
      _
    // Predicated region
    $region26: #{tpu_custom_call.1} parent=1 // pred_check
      _
    $region27: #{tpu_custom_call.1} parent=1 // pred_check_branch
      %79 = sbr.rel (0) target = $region29
    $region28: #{tpu_custom_call.1} parent=1 // pred_region
      %81 = dma.done [#allocation4], 512
    $region29: #{tpu_custom_call.1} parent=1 // pred_fallthru
      _
    // Predicated region
    $region30: #{tpu_custom_call.1} parent=1 // pred_check
      _
    $region31: #{tpu_custom_call.1} parent=1 // pred_check_branch
      %83 = sbr.rel (0) target = $region33
    $region32: #{tpu_custom_call.1} parent=1 // pred_region
      %85 = dma.done [#allocation7], 128
    $region33: #{tpu_custom_call.1} parent=1 // pred_fallthru
      _
    // Predicated region
    $region34: #{tpu_custom_call.1} parent=1 // pred_check
      _
    $region35: #{tpu_custom_call.1} parent=1 // pred_check_branch
      %87 = sbr.rel (0) target = $region37
    $region36: #{tpu_custom_call.1} parent=1 // pred_region
      %89 = dma.done [#allocation7], 128
    $region37: #{tpu_custom_call.1} parent=1 // pred_fallthru
      _
    // Predicated region
    $region38: #{tpu_custom_call.1} parent=1 // pred_check
      _
    $region39: #{tpu_custom_call.1} parent=1 // pred_check_branch
      %91 = sbr.rel (0) target = $region41
    $region40: #{tpu_custom_call.1} parent=1 // pred_region
      %93 = dma.done [#allocation10], 4096
    $region41: #{tpu_custom_call.1} parent=1 // pred_fallthru
      _
    // Predicated region
    $region42: #{tpu_custom_call.1} parent=1 // pred_check
      _
    $region43: #{tpu_custom_call.1} parent=1 // pred_check_branch
      %95 = sbr.rel (0) target = $region45
    $region44: #{tpu_custom_call.1} parent=1 // pred_region
      %97 = dma.done [#allocation10], 4096
    $region45: #{tpu_custom_call.1} parent=1 // pred_fallthru
      _
    %v98 = vld [vmem:[#allocation3] sm:$0xf]
    %v99 = vld [vmem:[#allocation3 + $0x4] sm:$0xf]
    %v100 = vld [vmem:[#allocation3 + $0x8] sm:$0xf]
    %v101 = vld [vmem:[#allocation3 + $0xc] sm:$0xf]
    %v102 = vld [vmem:[#allocation3 + $0x10] sm:$0xf]
    %v103 = vld [vmem:[#allocation3 + $0x14] sm:$0xf]
    %v104 = vld [vmem:[#allocation3 + $0x18] sm:$0xf]
    %v105 = vld [vmem:[#allocation3 + $0x1c] sm:$0xf]
    %v106 = vld [vmem:[#allocation9] sm:$0xff]
    %v107 = vld [vmem:[#allocation9 + $0x8] sm:$0xff]
    %v108 = vld [vmem:[#allocation9 + $0x10] sm:$0xff]
    %v109 = vld [vmem:[#allocation9 + $0x18] sm:$0xff]
    %v110 = vld [vmem:[#allocation9 + $0x20] sm:$0xff]
    %v111 = vld [vmem:[#allocation9 + $0x28] sm:$0xff]
    %v112 = vld [vmem:[#allocation9 + $0x30] sm:$0xff]
    %v113 = vld [vmem:[#allocation9 + $0x38] sm:$0xff]
    %v114 = vld [vmem:[#allocation9 + $0x40] sm:$0xff]
    %v115 = vld [vmem:[#allocation9 + $0x48] sm:$0xff]
    %v116 = vld [vmem:[#allocation9 + $0x50] sm:$0xff]
    %v117 = vld [vmem:[#allocation9 + $0x58] sm:$0xff]
    %v118 = vld [vmem:[#allocation9 + $0x60] sm:$0xff]
    %v119 = vld [vmem:[#allocation9 + $0x68] sm:$0xff]
    %v120 = vld [vmem:[#allocation9 + $0x70] sm:$0xff]
    %v121 = vld [vmem:[#allocation9 + $0x78] sm:$0xff]
    %v122 = vld [vmem:[#allocation9 + $0x80] sm:$0xff]
    %v123 = vld [vmem:[#allocation9 + $0x88] sm:$0xff]
    %v124 = vld [vmem:[#allocation9 + $0x90] sm:$0xff]
    %v125 = vld [vmem:[#allocation9 + $0x98] sm:$0xff]
    %v126 = vld [vmem:[#allocation9 + $0xa0] sm:$0xff]
    %v127 = vld [vmem:[#allocation9 + $0xa8] sm:$0xff]
    %v128 = vld [vmem:[#allocation9 + $0xb0] sm:$0xff]
    %v129 = vld [vmem:[#allocation9 + $0xb8] sm:$0xff]
    %v130 = vld [vmem:[#allocation9 + $0xc0] sm:$0xff]
    %v131 = vld [vmem:[#allocation9 + $0xc8] sm:$0xff]
    %v132 = vld [vmem:[#allocation9 + $0xd0] sm:$0xff]
    %v133 = vld [vmem:[#allocation9 + $0xd8] sm:$0xff]
    %v134 = vld [vmem:[#allocation9 + $0xe0] sm:$0xff]
    %v135 = vld [vmem:[#allocation9 + $0xe8] sm:$0xff]
    %v136 = vld [vmem:[#allocation9 + $0xf0] sm:$0xff]
    %v137 = vld [vmem:[#allocation9 + $0xf8] sm:$0xff]
    %v138 = vld [vmem:[%s5] sm:$0xf]
    %v140 = vperm.slane %v138, 0
    %v141 = vperm.slane %v138, 1
    %v142 = vperm.slane %v138, 2
    %v143 = vperm.slane %v138, 3
    %v156 = vunpack.c.l.b16 %v98
    %v157 = vunpack.c.l.b16 %v99
    %v158 = vunpack.c.l.b16 %v100
    %v159 = vunpack.c.l.b16 %v101
    %v160 = vunpack.c.l.b16 %v102
    %v161 = vunpack.c.l.b16 %v103
    %v162 = vunpack.c.l.b16 %v104
    %v163 = vunpack.c.l.b16 %v105
    %v164 = vpack.c.b16 %v157, %v156
    %v165 = vpack.c.b16 %v159, %v158
    %v166 = vpack.c.b16 %v161, %v160
    %v167 = vpack.c.b16 %v163, %v162
    %v204 = vunpack.c.l.b16 %v106
    %v205 = vunpack.c.h.b16 %v106
    %v206 = vunpack.c.l.b16 %v107
    %v207 = vunpack.c.h.b16 %v107
    %v208 = vunpack.c.l.b16 %v108
    %v209 = vunpack.c.h.b16 %v108
    %v210 = vunpack.c.l.b16 %v109
    %v211 = vunpack.c.h.b16 %v109
    %v212 = vunpack.c.l.b16 %v110
    %v213 = vunpack.c.h.b16 %v110
    %v214 = vunpack.c.l.b16 %v111
    %v215 = vunpack.c.h.b16 %v111
    %v216 = vunpack.c.l.b16 %v112
    %v217 = vunpack.c.h.b16 %v112
    %v218 = vunpack.c.l.b16 %v113
    %v219 = vunpack.c.h.b16 %v113
    %v220 = vunpack.c.l.b16 %v114
    %v221 = vunpack.c.h.b16 %v114
    %v222 = vunpack.c.l.b16 %v115
    %v223 = vunpack.c.h.b16 %v115
    %v224 = vunpack.c.l.b16 %v116
    %v225 = vunpack.c.h.b16 %v116
    %v226 = vunpack.c.l.b16 %v117
    %v227 = vunpack.c.h.b16 %v117
    %v228 = vunpack.c.l.b16 %v118
    %v229 = vunpack.c.h.b16 %v118
    %v230 = vunpack.c.l.b16 %v119
    %v231 = vunpack.c.h.b16 %v119
    %v232 = vunpack.c.l.b16 %v120
    %v233 = vunpack.c.h.b16 %v120
    %v234 = vunpack.c.l.b16 %v121
    %v235 = vunpack.c.h.b16 %v121
    %v236 = vunpack.c.l.b16 %v122
    %v237 = vunpack.c.h.b16 %v122
    %v238 = vunpack.c.l.b16 %v123
    %v239 = vunpack.c.h.b16 %v123
    %v240 = vunpack.c.l.b16 %v124
    %v241 = vunpack.c.h.b16 %v124
    %v242 = vunpack.c.l.b16 %v125
    %v243 = vunpack.c.h.b16 %v125
    %v244 = vunpack.c.l.b16 %v126
    %v245 = vunpack.c.h.b16 %v126
    %v246 = vunpack.c.l.b16 %v127
    %v247 = vunpack.c.h.b16 %v127
    %v248 = vunpack.c.l.b16 %v128
    %v249 = vunpack.c.h.b16 %v128
    %v250 = vunpack.c.l.b16 %v129
    %v251 = vunpack.c.h.b16 %v129
    %v252 = vunpack.c.l.b16 %v130
    %v253 = vunpack.c.h.b16 %v130
    %v254 = vunpack.c.l.b16 %v131
    %v255 = vunpack.c.h.b16 %v131
    %v256 = vunpack.c.l.b16 %v132
    %v257 = vunpack.c.h.b16 %v132
    %v258 = vunpack.c.l.b16 %v133
    %v259 = vunpack.c.h.b16 %v133
    %v260 = vunpack.c.l.b16 %v134
    %v261 = vunpack.c.h.b16 %v134
    %v262 = vunpack.c.l.b16 %v135
    %v263 = vunpack.c.h.b16 %v135
    %v264 = vunpack.c.l.b16 %v136
    %v265 = vunpack.c.h.b16 %v136
    %v266 = vunpack.c.l.b16 %v137
    %v267 = vunpack.c.h.b16 %v137
    %v268 = vpack.c.b16 %v208, %v204
    %v269 = vpack.c.b16 %v209, %v205
    %v270 = vpack.c.b16 %v210, %v206
    %v271 = vpack.c.b16 %v211, %v207
    %v272 = vpack.c.b16 %v216, %v212
    %v273 = vpack.c.b16 %v217, %v213
    %v274 = vpack.c.b16 %v218, %v214
    %v275 = vpack.c.b16 %v219, %v215
    %v276 = vpack.c.b16 %v224, %v220
    %v277 = vpack.c.b16 %v225, %v221
    %v278 = vpack.c.b16 %v226, %v222
    %v279 = vpack.c.b16 %v227, %v223
    %v280 = vpack.c.b16 %v232, %v228
    %v281 = vpack.c.b16 %v233, %v229
    %v282 = vpack.c.b16 %v234, %v230
    %v283 = vpack.c.b16 %v235, %v231
    %v284 = vpack.c.b16 %v240, %v236
    %v285 = vpack.c.b16 %v241, %v237
    %v286 = vpack.c.b16 %v242, %v238
    %v287 = vpack.c.b16 %v243, %v239
    %v288 = vpack.c.b16 %v248, %v244
    %v289 = vpack.c.b16 %v249, %v245
    %v290 = vpack.c.b16 %v250, %v246
    %v291 = vpack.c.b16 %v251, %v247
    %v292 = vpack.c.b16 %v256, %v252
    %v293 = vpack.c.b16 %v257, %v253
    %v294 = vpack.c.b16 %v258, %v254
    %v295 = vpack.c.b16 %v259, %v255
    %v296 = vpack.c.b16 %v264, %v260
    %v297 = vpack.c.b16 %v265, %v261
    %v298 = vpack.c.b16 %v266, %v262
    %v299 = vpack.c.b16 %v267, %v263
    %332 = vmatpush.bf16.msra.mxu0 %v296
    %333 = vmatpush.bf16.msra.mxu0 %v292
    %334 = vmatpush.bf16.msra.mxu0 %v288
    %335 = vmatpush.bf16.msra.mxu0 %v284
    %336 = vmatpush.bf16.msra.mxu0 %v280
    %337 = vmatpush.bf16.msra.mxu0 %v276
    %338 = vmatpush.bf16.msra.mxu0 %v272
    %339 = vmatpush.bf16.msra.mxu0 %v268
    %340 = vmatmul.bf16.gmra.mxu0 %v164
    %v341 = vpop.f32.mrf.mxu0
    %v342 = vadd.f32 %v140, %v341
    %v343 = vpop.f32.mrf.mxu0
    %v344 = vadd.f32 %v140, %v343
    %345 = vmatmul.bf16.gmra.mxu0 %v165
    %v346 = vpop.f32.mrf.mxu0
    %v347 = vadd.f32 %v140, %v346
    %v348 = vpop.f32.mrf.mxu0
    %v349 = vadd.f32 %v140, %v348
    %350 = vmatmul.bf16.gmra.mxu0 %v166
    %v351 = vpop.f32.mrf.mxu0
    %v352 = vadd.f32 %v140, %v351
    %v353 = vpop.f32.mrf.mxu0
    %v354 = vadd.f32 %v140, %v353
    %355 = vmatmul.bf16.gmra.mxu0 %v167
    %v356 = vpop.f32.mrf.mxu0
    %v357 = vadd.f32 %v140, %v356
    %v358 = vpop.f32.mrf.mxu0
    %v359 = vadd.f32 %v140, %v358
    %360 = vdwg.mxu0
    %361 = vmatpush.bf16.msra.mxu0 %v297
    %362 = vmatpush.bf16.msra.mxu0 %v293
    %363 = vmatpush.bf16.msra.mxu0 %v289
    %364 = vmatpush.bf16.msra.mxu0 %v285
    %365 = vmatpush.bf16.msra.mxu0 %v281
    %366 = vmatpush.bf16.msra.mxu0 %v277
    %367 = vmatpush.bf16.msra.mxu0 %v273
    %368 = vmatpush.bf16.msra.mxu0 %v269
    %369 = vmatmul.bf16.gmra.mxu0 %v164
    %v370 = vpop.f32.mrf.mxu0
    %v371 = vadd.f32 %v141, %v370
    %v372 = vpop.f32.mrf.mxu0
    %v373 = vadd.f32 %v141, %v372
    %374 = vmatmul.bf16.gmra.mxu0 %v165
    %v375 = vpop.f32.mrf.mxu0
    %v376 = vadd.f32 %v141, %v375
    %v377 = vpop.f32.mrf.mxu0
    %v378 = vadd.f32 %v141, %v377
    %379 = vmatmul.bf16.gmra.mxu0 %v166
    %v380 = vpop.f32.mrf.mxu0
    %v381 = vadd.f32 %v141, %v380
    %v382 = vpop.f32.mrf.mxu0
    %v383 = vadd.f32 %v141, %v382
    %384 = vmatmul.bf16.gmra.mxu0 %v167
    %v385 = vpop.f32.mrf.mxu0
    %v386 = vadd.f32 %v141, %v385
    %v387 = vpop.f32.mrf.mxu0
    %v388 = vadd.f32 %v141, %v387
    %389 = vdwg.mxu0
    %390 = vmatpush.bf16.msra.mxu0 %v298
    %391 = vmatpush.bf16.msra.mxu0 %v294
    %392 = vmatpush.bf16.msra.mxu0 %v290
    %393 = vmatpush.bf16.msra.mxu0 %v286
    %394 = vmatpush.bf16.msra.mxu0 %v282
    %395 = vmatpush.bf16.msra.mxu0 %v278
    %396 = vmatpush.bf16.msra.mxu0 %v274
    %397 = vmatpush.bf16.msra.mxu0 %v270
    %398 = vmatmul.bf16.gmra.mxu0 %v164
    %v399 = vpop.f32.mrf.mxu0
    %v400 = vadd.f32 %v142, %v399
    %v401 = vpop.f32.mrf.mxu0
    %v402 = vadd.f32 %v142, %v401
    %403 = vmatmul.bf16.gmra.mxu0 %v165
    %v404 = vpop.f32.mrf.mxu0
    %v405 = vadd.f32 %v142, %v404
    %v406 = vpop.f32.mrf.mxu0
    %v407 = vadd.f32 %v142, %v406
    %408 = vmatmul.bf16.gmra.mxu0 %v166
    %v409 = vpop.f32.mrf.mxu0
    %v410 = vadd.f32 %v142, %v409
    %v411 = vpop.f32.mrf.mxu0
    %v412 = vadd.f32 %v142, %v411
    %413 = vmatmul.bf16.gmra.mxu0 %v167
    %v414 = vpop.f32.mrf.mxu0
    %v415 = vadd.f32 %v142, %v414
    %v416 = vpop.f32.mrf.mxu0
    %v417 = vadd.f32 %v142, %v416
    %418 = vdwg.mxu0
    %419 = vmatpush.bf16.msra.mxu0 %v299
    %420 = vmatpush.bf16.msra.mxu0 %v295
    %421 = vmatpush.bf16.msra.mxu0 %v291
    %422 = vmatpush.bf16.msra.mxu0 %v287
    %423 = vmatpush.bf16.msra.mxu0 %v283
    %424 = vmatpush.bf16.msra.mxu0 %v279
    %425 = vmatpush.bf16.msra.mxu0 %v275
    %426 = vmatpush.bf16.msra.mxu0 %v271
    %427 = vmatmul.bf16.gmra.mxu0 %v164
    %v428 = vpop.f32.mrf.mxu0
    %v429 = vadd.f32 %v143, %v428
    %v430 = vpop.f32.mrf.mxu0
    %v431 = vadd.f32 %v143, %v430
    %432 = vmatmul.bf16.gmra.mxu0 %v165
    %v433 = vpop.f32.mrf.mxu0
    %v434 = vadd.f32 %v143, %v433
    %v435 = vpop.f32.mrf.mxu0
    %v436 = vadd.f32 %v143, %v435
    %437 = vmatmul.bf16.gmra.mxu0 %v166
    %v438 = vpop.f32.mrf.mxu0
    %v439 = vadd.f32 %v143, %v438
    %v440 = vpop.f32.mrf.mxu0
    %v441 = vadd.f32 %v143, %v440
    %442 = vmatmul.bf16.gmra.mxu0 %v167
    %v443 = vpop.f32.mrf.mxu0
    %v444 = vadd.f32 %v143, %v443
    %v445 = vpop.f32.mrf.mxu0
    %v446 = vadd.f32 %v143, %v445
    %447 = vdwg.mxu0
    %448 = vst [vmem:[#allocation2] sm:$0xff] %v342
    %449 = vst [vmem:[#allocation2 + $0x8] sm:$0xff] %v371
    %450 = vst [vmem:[#allocation2 + $0x10] sm:$0xff] %v400
    %451 = vst [vmem:[#allocation2 + $0x18] sm:$0xff] %v429
    %452 = vst [vmem:[#allocation2 + $0x20] sm:$0xff] %v344
    %453 = vst [vmem:[#allocation2 + $0x28] sm:$0xff] %v373
    %454 = vst [vmem:[#allocation2 + $0x30] sm:$0xff] %v402
    %455 = vst [vmem:[#allocation2 + $0x38] sm:$0xff] %v431
    %456 = vst [vmem:[#allocation2 + $0x40] sm:$0xff] %v347
    %457 = vst [vmem:[#allocation2 + $0x48] sm:$0xff] %v376
    %458 = vst [vmem:[#allocation2 + $0x50] sm:$0xff] %v405
    %459 = vst [vmem:[#allocation2 + $0x58] sm:$0xff] %v434
    %460 = vst [vmem:[#allocation2 + $0x60] sm:$0xff] %v349
    %461 = vst [vmem:[#allocation2 + $0x68] sm:$0xff] %v378
    %462 = vst [vmem:[#allocation2 + $0x70] sm:$0xff] %v407
    %463 = vst [vmem:[#allocation2 + $0x78] sm:$0xff] %v436
    %464 = vst [vmem:[#allocation2 + $0x80] sm:$0xff] %v352
    %465 = vst [vmem:[#allocation2 + $0x88] sm:$0xff] %v381
    %466 = vst [vmem:[#allocation2 + $0x90] sm:$0xff] %v410
    %467 = vst [vmem:[#allocation2 + $0x98] sm:$0xff] %v439
    %468 = vst [vmem:[#allocation2 + $0xa0] sm:$0xff] %v354
    %469 = vst [vmem:[#allocation2 + $0xa8] sm:$0xff] %v383
    %470 = vst [vmem:[#allocation2 + $0xb0] sm:$0xff] %v412
    %471 = vst [vmem:[#allocation2 + $0xb8] sm:$0xff] %v441
    %472 = vst [vmem:[#allocation2 + $0xc0] sm:$0xff] %v357
    %473 = vst [vmem:[#allocation2 + $0xc8] sm:$0xff] %v386
    %474 = vst [vmem:[#allocation2 + $0xd0] sm:$0xff] %v415
    %475 = vst [vmem:[#allocation2 + $0xd8] sm:$0xff] %v444
    %476 = vst [vmem:[#allocation2 + $0xe0] sm:$0xff] %v359
    %477 = vst [vmem:[#allocation2 + $0xe8] sm:$0xff] %v388
    %478 = vst [vmem:[#allocation2 + $0xf0] sm:$0xff] %v417
    %479 = vst [vmem:[#allocation2 + $0xf8] sm:$0xff] %v446
    %v480 = vld [vmem:[#allocation6] sm:$0xff]
    %v481 = vld [vmem:[#allocation8] sm:$0xff]
    %v482 = vld [vmem:[#allocation2] sm:$0xff]
    %v483 = vld [vmem:[#allocation2 + $0x8] sm:$0xff]
    %v484 = vld [vmem:[#allocation2 + $0x10] sm:$0xff]
    %v485 = vld [vmem:[#allocation2 + $0x18] sm:$0xff]
    %v486 = vpack.c.bf16 %v480, %v480
    %v487 = vld [vmem:[#allocation11] sm:$0xff]
    %v488 = vld [vmem:[#allocation11 + $0x8] sm:$0xff]
    %v489 = vld [vmem:[#allocation11 + $0x10] sm:$0xff]
    %v490 = vld [vmem:[#allocation11 + $0x18] sm:$0xff]
    %v491 = vld [vmem:[#allocation11 + $0x20] sm:$0xff]
    %v492 = vld [vmem:[#allocation11 + $0x28] sm:$0xff]
    %v493 = vld [vmem:[#allocation11 + $0x30] sm:$0xff]
    %v494 = vld [vmem:[#allocation11 + $0x38] sm:$0xff]
    %v495 = vld [vmem:[#allocation11 + $0x40] sm:$0xff]
    %v496 = vld [vmem:[#allocation11 + $0x48] sm:$0xff]
    %v497 = vld [vmem:[#allocation11 + $0x50] sm:$0xff]
    %v498 = vld [vmem:[#allocation11 + $0x58] sm:$0xff]
    %v499 = vld [vmem:[#allocation11 + $0x60] sm:$0xff]
    %v500 = vld [vmem:[#allocation11 + $0x68] sm:$0xff]
    %v501 = vld [vmem:[#allocation11 + $0x70] sm:$0xff]
    %v502 = vld [vmem:[#allocation11 + $0x78] sm:$0xff]
    %v503 = vld [vmem:[#allocation11 + $0x80] sm:$0xff]
    %v504 = vld [vmem:[#allocation11 + $0x88] sm:$0xff]
    %v505 = vld [vmem:[#allocation11 + $0x90] sm:$0xff]
    %v506 = vld [vmem:[#allocation11 + $0x98] sm:$0xff]
    %v507 = vld [vmem:[#allocation11 + $0xa0] sm:$0xff]
    %v508 = vld [vmem:[#allocation11 + $0xa8] sm:$0xff]
    %v509 = vld [vmem:[#allocation11 + $0xb0] sm:$0xff]
    %v510 = vld [vmem:[#allocation11 + $0xb8] sm:$0xff]
    %v511 = vld [vmem:[#allocation11 + $0xc0] sm:$0xff]
    %v512 = vld [vmem:[#allocation11 + $0xc8] sm:$0xff]
    %v513 = vld [vmem:[#allocation11 + $0xd0] sm:$0xff]
    %v514 = vld [vmem:[#allocation11 + $0xd8] sm:$0xff]
    %v515 = vld [vmem:[#allocation11 + $0xe0] sm:$0xff]
    %v516 = vld [vmem:[#allocation11 + $0xe8] sm:$0xff]
    %v517 = vld [vmem:[#allocation11 + $0xf0] sm:$0xff]
    %v518 = vld [vmem:[#allocation11 + $0xf8] sm:$0xff]
    %v551 = vunpack.c.l.b16 %v487
    %v552 = vunpack.c.h.b16 %v487
    %v553 = vunpack.c.l.b16 %v488
    %v554 = vunpack.c.h.b16 %v488
    %v555 = vunpack.c.l.b16 %v489
    %v556 = vunpack.c.h.b16 %v489
    %v557 = vunpack.c.l.b16 %v490
    %v558 = vunpack.c.h.b16 %v490
    %v559 = vunpack.c.l.b16 %v491
    %v560 = vunpack.c.h.b16 %v491
    %v561 = vunpack.c.l.b16 %v492
    %v562 = vunpack.c.h.b16 %v492
    %v563 = vunpack.c.l.b16 %v493
    %v564 = vunpack.c.h.b16 %v493
    %v565 = vunpack.c.l.b16 %v494
    %v566 = vunpack.c.h.b16 %v494
    %v567 = vunpack.c.l.b16 %v495
    %v568 = vunpack.c.h.b16 %v495
    %v569 = vunpack.c.l.b16 %v496
    %v570 = vunpack.c.h.b16 %v496
    %v571 = vunpack.c.l.b16 %v497
    %v572 = vunpack.c.h.b16 %v497
    %v573 = vunpack.c.l.b16 %v498
    %v574 = vunpack.c.h.b16 %v498
    %v575 = vunpack.c.l.b16 %v499
    %v576 = vunpack.c.h.b16 %v499
    %v577 = vunpack.c.l.b16 %v500
    %v578 = vunpack.c.h.b16 %v500
    %v579 = vunpack.c.l.b16 %v501
    %v580 = vunpack.c.h.b16 %v501
    %v581 = vunpack.c.l.b16 %v502
    %v582 = vunpack.c.h.b16 %v502
    %v583 = vunpack.c.l.b16 %v503
    %v584 = vunpack.c.h.b16 %v503
    %v585 = vunpack.c.l.b16 %v504
    %v586 = vunpack.c.h.b16 %v504
    %v587 = vunpack.c.l.b16 %v505
    %v588 = vunpack.c.h.b16 %v505
    %v589 = vunpack.c.l.b16 %v506
    %v590 = vunpack.c.h.b16 %v506
    %v591 = vunpack.c.l.b16 %v507
    %v592 = vunpack.c.h.b16 %v507
    %v593 = vunpack.c.l.b16 %v508
    %v594 = vunpack.c.h.b16 %v508
    %v595 = vunpack.c.l.b16 %v509
    %v596 = vunpack.c.h.b16 %v509
    %v597 = vunpack.c.l.b16 %v510
    %v598 = vunpack.c.h.b16 %v510
    %v599 = vunpack.c.l.b16 %v511
    %v600 = vunpack.c.h.b16 %v511
    %v601 = vunpack.c.l.b16 %v512
    %v602 = vunpack.c.h.b16 %v512
    %v603 = vunpack.c.l.b16 %v513
    %v604 = vunpack.c.h.b16 %v513
    %v605 = vunpack.c.l.b16 %v514
    %v606 = vunpack.c.h.b16 %v514
    %v607 = vunpack.c.l.b16 %v515
    %v608 = vunpack.c.h.b16 %v515
    %v609 = vunpack.c.l.b16 %v516
    %v610 = vunpack.c.h.b16 %v516
    %v611 = vunpack.c.l.b16 %v517
    %v612 = vunpack.c.h.b16 %v517
    %v613 = vunpack.c.l.b16 %v518
    %v614 = vunpack.c.h.b16 %v518
    %v615 = vpack.c.b16 %v555, %v551
    %v616 = vpack.c.b16 %v556, %v552
    %v617 = vpack.c.b16 %v557, %v553
    %v618 = vpack.c.b16 %v558, %v554
    %v619 = vpack.c.b16 %v563, %v559
    %v620 = vpack.c.b16 %v564, %v560
    %v621 = vpack.c.b16 %v565, %v561
    %v622 = vpack.c.b16 %v566, %v562
    %v623 = vpack.c.b16 %v571, %v567
    %v624 = vpack.c.b16 %v572, %v568
    %v625 = vpack.c.b16 %v573, %v569
    %v626 = vpack.c.b16 %v574, %v570
    %v627 = vpack.c.b16 %v579, %v575
    %v628 = vpack.c.b16 %v580, %v576
    %v629 = vpack.c.b16 %v581, %v577
    %v630 = vpack.c.b16 %v582, %v578
    %v631 = vpack.c.b16 %v587, %v583
    %v632 = vpack.c.b16 %v588, %v584
    %v633 = vpack.c.b16 %v589, %v585
    %v634 = vpack.c.b16 %v590, %v586
    %v635 = vpack.c.b16 %v595, %v591
    %v636 = vpack.c.b16 %v596, %v592
    %v637 = vpack.c.b16 %v597, %v593
    %v638 = vpack.c.b16 %v598, %v594
    %v639 = vpack.c.b16 %v603, %v599
    %v640 = vpack.c.b16 %v604, %v600
    %v641 = vpack.c.b16 %v605, %v601
    %v642 = vpack.c.b16 %v606, %v602
    %v643 = vpack.c.b16 %v611, %v607
    %v644 = vpack.c.b16 %v612, %v608
    %v645 = vpack.c.b16 %v613, %v609
    %v646 = vpack.c.b16 %v614, %v610
    %679 = vmatpush.bf16.msra.mxu0 %v643
    %680 = vmatpush.bf16.msra.mxu0 %v639
    %681 = vmatpush.bf16.msra.mxu0 %v635
    %682 = vmatpush.bf16.msra.mxu0 %v631
    %683 = vmatpush.bf16.msra.mxu0 %v627
    %684 = vmatpush.bf16.msra.mxu0 %v623
    %685 = vmatpush.bf16.msra.mxu0 %v619
    %686 = vmatpush.bf16.msra.mxu0 %v615
    %687 = vmatmul.bf16.gmra.mxu0 %v486
    %v688 = vpop.f32.mrf.mxu0
    %v689 = vadd.f32 0.0, %v688
    %v690 = vpop.f32.mrf.mxu0
    %691 = vdwg.mxu0
    %692 = vmatpush.bf16.msra.mxu0 %v644
    %693 = vmatpush.bf16.msra.mxu0 %v640
    %694 = vmatpush.bf16.msra.mxu0 %v636
    %695 = vmatpush.bf16.msra.mxu0 %v632
    %696 = vmatpush.bf16.msra.mxu0 %v628
    %697 = vmatpush.bf16.msra.mxu0 %v624
    %698 = vmatpush.bf16.msra.mxu0 %v620
    %699 = vmatpush.bf16.msra.mxu0 %v616
    %700 = vmatmul.bf16.gmra.mxu0 %v486
    %v701 = vpop.f32.mrf.mxu0
    %v702 = vadd.f32 0.0, %v701
    %v703 = vpop.f32.mrf.mxu0
    %704 = vdwg.mxu0
    %705 = vmatpush.bf16.msra.mxu0 %v645
    %706 = vmatpush.bf16.msra.mxu0 %v641
    %707 = vmatpush.bf16.msra.mxu0 %v637
    %708 = vmatpush.bf16.msra.mxu0 %v633
    %709 = vmatpush.bf16.msra.mxu0 %v629
    %710 = vmatpush.bf16.msra.mxu0 %v625
    %711 = vmatpush.bf16.msra.mxu0 %v621
    %712 = vmatpush.bf16.msra.mxu0 %v617
    %713 = vmatmul.bf16.gmra.mxu0 %v486
    %v714 = vpop.f32.mrf.mxu0
    %v715 = vadd.f32 0.0, %v714
    %v716 = vpop.f32.mrf.mxu0
    %717 = vdwg.mxu0
    %718 = vmatpush.bf16.msra.mxu0 %v646
    %719 = vmatpush.bf16.msra.mxu0 %v642
    %720 = vmatpush.bf16.msra.mxu0 %v638
    %721 = vmatpush.bf16.msra.mxu0 %v634
    %722 = vmatpush.bf16.msra.mxu0 %v630
    %723 = vmatpush.bf16.msra.mxu0 %v626
    %724 = vmatpush.bf16.msra.mxu0 %v622
    %725 = vmatpush.bf16.msra.mxu0 %v618
    %726 = vmatmul.bf16.gmra.mxu0 %v486
    %v727 = vpop.f32.mrf.mxu0
    %v728 = vadd.f32 0.0, %v727
    %v729 = vpop.f32.mrf.mxu0
    %730 = vdwg.mxu0
    %v731 = vadd.f32 %v482, %v689
    %v732 = vadd.f32 %v483, %v702
    %v733 = vadd.f32 %v484, %v715
    %v734 = vadd.f32 %v485, %v728
    %v735 = vxor.u32 %v731, 2147483648
    %v736 = vmul.f32 %v735, 1.442695
    %v737 = vpow.pop %v736
    %v738 = vadd.f32 %v737, 1.0
    %v739 = vrcp.pop %v738
    %v740 = vmul.f32 %v738, %v739
    %v741 = vsub.f32 1.0, %v740
    %v742 = vmul.f32 %v739, %v741
    %v743 = vadd.f32 %v739, %v742
    %vm744 = vweird.f32 %v738
    %vm745 = vweird.f32 %v739
    %vm746 = vmor %vm744, %vm745
    %v747 = vsel %vm746, %v739, %v743
    %v748 = vand.u32 2147483647, %v738
    %vm749 = vcmp.eq.f32.partialorder %v748, 8.507059e+37
    %v750 = vand.u32 %v738, 2147483648
    %v751 = vor.u32 1.1754944e-38, %v750
    %v752 = vsel %vm749, %v751, %v747
    %v753 = vmul.f32 1.0, %v752
    %v754 = vxor.u32 %v732, 2147483648
    %v755 = vmul.f32 %v754, 1.442695
    %v756 = vpow.pop %v755
    %v757 = vadd.f32 %v756, 1.0
    %v758 = vrcp.pop %v757
    %v759 = vmul.f32 %v757, %v758
    %v760 = vsub.f32 1.0, %v759
    %v761 = vmul.f32 %v758, %v760
    %v762 = vadd.f32 %v758, %v761
    %vm763 = vweird.f32 %v757
    %vm764 = vweird.f32 %v758
    %vm765 = vmor %vm763, %vm764
    %v766 = vsel %vm765, %v758, %v762
    %v767 = vand.u32 2147483647, %v757
    %vm768 = vcmp.eq.f32.partialorder %v767, 8.507059e+37
    %v769 = vand.u32 %v757, 2147483648
    %v770 = vor.u32 1.1754944e-38, %v769
    %v771 = vsel %vm768, %v770, %v766
    %v772 = vmul.f32 1.0, %v771
    %v773 = vtanh.pop %v733
    %v774 = vxor.u32 %v734, 2147483648
    %v775 = vmul.f32 %v774, 1.442695
    %v776 = vpow.pop %v775
    %v777 = vadd.f32 %v776, 1.0
    %v778 = vrcp.pop %v777
    %v779 = vmul.f32 %v777, %v778
    %v780 = vsub.f32 1.0, %v779
    %v781 = vmul.f32 %v778, %v780
    %v782 = vadd.f32 %v778, %v781
    %vm783 = vweird.f32 %v777
    %vm784 = vweird.f32 %v778
    %vm785 = vmor %vm783, %vm784
    %v786 = vsel %vm785, %v778, %v782
    %v787 = vand.u32 2147483647, %v777
    %vm788 = vcmp.eq.f32.partialorder %v787, 8.507059e+37
    %v789 = vand.u32 %v777, 2147483648
    %v790 = vor.u32 1.1754944e-38, %v789
    %v791 = vsel %vm788, %v790, %v786
    %v792 = vmul.f32 1.0, %v791
    %v793 = vmul.f32 %v772, %v481
    %v794 = vmul.f32 %v753, %v773
    %v795 = vadd.f32 %v793, %v794
    %v796 = vtanh.pop %v795
    %v797 = vmul.f32 %v792, %v796
    %798 = vst [vmem:[#allocation12] sm:$0xff] %v797
    %s799 = scalar_lea.vmem [#allocation2], 32
    %v800 = vld [vmem:[%s799] sm:$0xff]
    %v801 = vld [vmem:[%s799 + $0x8] sm:$0xff]
    %v802 = vld [vmem:[%s799 + $0x10] sm:$0xff]
    %v803 = vld [vmem:[%s799 + $0x18] sm:$0xff]
    %v804 = vpack.c.bf16 %v797, %v797
    %v805 = vld [vmem:[#allocation11] sm:$0xff]
    %v806 = vld [vmem:[#allocation11 + $0x8] sm:$0xff]
    %v807 = vld [vmem:[#allocation11 + $0x10] sm:$0xff]
    %v808 = vld [vmem:[#allocation11 + $0x18] sm:$0xff]
    %v809 = vld [vmem:[#allocation11 + $0x20] sm:$0xff]
    %v810 = vld [vmem:[#allocation11 + $0x28] sm:$0xff]
    %v811 = vld [vmem:[#allocation11 + $0x30] sm:$0xff]
    %v812 = vld [vmem:[#allocation11 + $0x38] sm:$0xff]
    %v813 = vld [vmem:[#allocation11 + $0x40] sm:$0xff]
    %v814 = vld [vmem:[#allocation11 + $0x48] sm:$0xff]
    %v815 = vld [vmem:[#allocation11 + $0x50] sm:$0xff]
    %v816 = vld [vmem:[#allocation11 + $0x58] sm:$0xff]
    %v817 = vld [vmem:[#allocation11 + $0x60] sm:$0xff]
    %v818 = vld [vmem:[#allocation11 + $0x68] sm:$0xff]
    %v819 = vld [vmem:[#allocation11 + $0x70] sm:$0xff]
    %v820 = vld [vmem:[#allocation11 + $0x78] sm:$0xff]
    %v821 = vld [vmem:[#allocation11 + $0x80] sm:$0xff]
    %v822 = vld [vmem:[#allocation11 + $0x88] sm:$0xff]
    %v823 = vld [vmem:[#allocation11 + $0x90] sm:$0xff]
    %v824 = vld [vmem:[#allocation11 + $0x98] sm:$0xff]
    %v825 = vld [vmem:[#allocation11 + $0xa0] sm:$0xff]
    %v826 = vld [vmem:[#allocation11 + $0xa8] sm:$0xff]
    %v827 = vld [vmem:[#allocation11 + $0xb0] sm:$0xff]
    %v828 = vld [vmem:[#allocation11 + $0xb8] sm:$0xff]
    %v829 = vld [vmem:[#allocation11 + $0xc0] sm:$0xff]
    %v830 = vld [vmem:[#allocation11 + $0xc8] sm:$0xff]
    %v831 = vld [vmem:[#allocation11 + $0xd0] sm:$0xff]
    %v832 = vld [vmem:[#allocation11 + $0xd8] sm:$0xff]
    %v833 = vld [vmem:[#allocation11 + $0xe0] sm:$0xff]
    %v834 = vld [vmem:[#allocation11 + $0xe8] sm:$0xff]
    %v835 = vld [vmem:[#allocation11 + $0xf0] sm:$0xff]
    %v836 = vld [vmem:[#allocation11 + $0xf8] sm:$0xff]
    %v869 = vunpack.c.l.b16 %v805
    %v870 = vunpack.c.h.b16 %v805
    %v871 = vunpack.c.l.b16 %v806
    %v872 = vunpack.c.h.b16 %v806
    %v873 = vunpack.c.l.b16 %v807
    %v874 = vunpack.c.h.b16 %v807
    %v875 = vunpack.c.l.b16 %v808
    %v876 = vunpack.c.h.b16 %v808
    %v877 = vunpack.c.l.b16 %v809
    %v878 = vunpack.c.h.b16 %v809
    %v879 = vunpack.c.l.b16 %v810
    %v880 = vunpack.c.h.b16 %v810
    %v881 = vunpack.c.l.b16 %v811
    %v882 = vunpack.c.h.b16 %v811
    %v883 = vunpack.c.l.b16 %v812
    %v884 = vunpack.c.h.b16 %v812
    %v885 = vunpack.c.l.b16 %v813
    %v886 = vunpack.c.h.b16 %v813
    %v887 = vunpack.c.l.b16 %v814
    %v888 = vunpack.c.h.b16 %v814
    %v889 = vunpack.c.l.b16 %v815
    %v890 = vunpack.c.h.b16 %v815
    %v891 = vunpack.c.l.b16 %v816
    %v892 = vunpack.c.h.b16 %v816
    %v893 = vunpack.c.l.b16 %v817
    %v894 = vunpack.c.h.b16 %v817
    %v895 = vunpack.c.l.b16 %v818
    %v896 = vunpack.c.h.b16 %v818
    %v897 = vunpack.c.l.b16 %v819
    %v898 = vunpack.c.h.b16 %v819
    %v899 = vunpack.c.l.b16 %v820
    %v900 = vunpack.c.h.b16 %v820
    %v901 = vunpack.c.l.b16 %v821
    %v902 = vunpack.c.h.b16 %v821
    %v903 = vunpack.c.l.b16 %v822
    %v904 = vunpack.c.h.b16 %v822
    %v905 = vunpack.c.l.b16 %v823
    %v906 = vunpack.c.h.b16 %v823
    %v907 = vunpack.c.l.b16 %v824
    %v908 = vunpack.c.h.b16 %v824
    %v909 = vunpack.c.l.b16 %v825
    %v910 = vunpack.c.h.b16 %v825
    %v911 = vunpack.c.l.b16 %v826
    %v912 = vunpack.c.h.b16 %v826
    %v913 = vunpack.c.l.b16 %v827
    %v914 = vunpack.c.h.b16 %v827
    %v915 = vunpack.c.l.b16 %v828
    %v916 = vunpack.c.h.b16 %v828
    %v917 = vunpack.c.l.b16 %v829
    %v918 = vunpack.c.h.b16 %v829
    %v919 = vunpack.c.l.b16 %v830
    %v920 = vunpack.c.h.b16 %v830
    %v921 = vunpack.c.l.b16 %v831
    %v922 = vunpack.c.h.b16 %v831
    %v923 = vunpack.c.l.b16 %v832
    %v924 = vunpack.c.h.b16 %v832
    %v925 = vunpack.c.l.b16 %v833
    %v926 = vunpack.c.h.b16 %v833
    %v927 = vunpack.c.l.b16 %v834
    %v928 = vunpack.c.h.b16 %v834
    %v929 = vunpack.c.l.b16 %v835
    %v930 = vunpack.c.h.b16 %v835
    %v931 = vunpack.c.l.b16 %v836
    %v932 = vunpack.c.h.b16 %v836
    %v933 = vpack.c.b16 %v873, %v869
    %v934 = vpack.c.b16 %v874, %v870
    %v935 = vpack.c.b16 %v875, %v871
    %v936 = vpack.c.b16 %v876, %v872
    %v937 = vpack.c.b16 %v881, %v877
    %v938 = vpack.c.b16 %v882, %v878
    %v939 = vpack.c.b16 %v883, %v879
    %v940 = vpack.c.b16 %v884, %v880
    %v941 = vpack.c.b16 %v889, %v885
    %v942 = vpack.c.b16 %v890, %v886
    %v943 = vpack.c.b16 %v891, %v887
    %v944 = vpack.c.b16 %v892, %v888
    %v945 = vpack.c.b16 %v897, %v893
    %v946 = vpack.c.b16 %v898, %v894
    %v947 = vpack.c.b16 %v899, %v895
    %v948 = vpack.c.b16 %v900, %v896
    %v949 = vpack.c.b16 %v905, %v901
    %v950 = vpack.c.b16 %v906, %v902
    %v951 = vpack.c.b16 %v907, %v903
    %v952 = vpack.c.b16 %v908, %v904
    %v953 = vpack.c.b16 %v913, %v909
    %v954 = vpack.c.b16 %v914, %v910
    %v955 = vpack.c.b16 %v915, %v911
    %v956 = vpack.c.b16 %v916, %v912
    %v957 = vpack.c.b16 %v921, %v917
    %v958 = vpack.c.b16 %v922, %v918
    %v959 = vpack.c.b16 %v923, %v919
    %v960 = vpack.c.b16 %v924, %v920
    %v961 = vpack.c.b16 %v929, %v925
    %v962 = vpack.c.b16 %v930, %v926
    %v963 = vpack.c.b16 %v931, %v927
    %v964 = vpack.c.b16 %v932, %v928
    %997 = vmatpush.bf16.msra.mxu0 %v961
    %998 = vmatpush.bf16.msra.mxu0 %v957
    %999 = vmatpush.bf16.msra.mxu0 %v953
    %1000 = vmatpush.bf16.msra.mxu0 %v949
    %1001 = vmatpush.bf16.msra.mxu0 %v945
    %1002 = vmatpush.bf16.msra.mxu0 %v941
    %1003 = vmatpush.bf16.msra.mxu0 %v937
    %1004 = vmatpush.bf16.msra.mxu0 %v933
    %1005 = vmatmul.bf16.gmra.mxu0 %v804
    %v1006 = vpop.f32.mrf.mxu0
    %v1007 = vadd.f32 0.0, %v1006
    %v1008 = vpop.f32.mrf.mxu0
    %1009 = vdwg.mxu0
    %1010 = vmatpush.bf16.msra.mxu0 %v962
    %1011 = vmatpush.bf16.msra.mxu0 %v958
    %1012 = vmatpush.bf16.msra.mxu0 %v954
    %1013 = vmatpush.bf16.msra.mxu0 %v950
    %1014 = vmatpush.bf16.msra.mxu0 %v946
    %1015 = vmatpush.bf16.msra.mxu0 %v942
    %1016 = vmatpush.bf16.msra.mxu0 %v938
    %1017 = vmatpush.bf16.msra.mxu0 %v934
    %1018 = vmatmul.bf16.gmra.mxu0 %v804
    %v1019 = vpop.f32.mrf.mxu0
    %v1020 = vadd.f32 0.0, %v1019
    %v1021 = vpop.f32.mrf.mxu0
    %1022 = vdwg.mxu0
    %1023 = vmatpush.bf16.msra.mxu0 %v963
    %1024 = vmatpush.bf16.msra.mxu0 %v959
    %1025 = vmatpush.bf16.msra.mxu0 %v955
    %1026 = vmatpush.bf16.msra.mxu0 %v951
    %1027 = vmatpush.bf16.msra.mxu0 %v947
    %1028 = vmatpush.bf16.msra.mxu0 %v943
    %1029 = vmatpush.bf16.msra.mxu0 %v939
    %1030 = vmatpush.bf16.msra.mxu0 %v935
    %1031 = vmatmul.bf16.gmra.mxu0 %v804
    %v1032 = vpop.f32.mrf.mxu0
    %v1033 = vadd.f32 0.0, %v1032
    %v1034 = vpop.f32.mrf.mxu0
    %1035 = vdwg.mxu0
    %1036 = vmatpush.bf16.msra.mxu0 %v964
    %1037 = vmatpush.bf16.msra.mxu0 %v960
    %1038 = vmatpush.bf16.msra.mxu0 %v956
    %1039 = vmatpush.bf16.msra.mxu0 %v952
    %1040 = vmatpush.bf16.msra.mxu0 %v948
    %1041 = vmatpush.bf16.msra.mxu0 %v944
    %1042 = vmatpush.bf16.msra.mxu0 %v940
    %1043 = vmatpush.bf16.msra.mxu0 %v936
    %1044 = vmatmul.bf16.gmra.mxu0 %v804
    %v1045 = vpop.f32.mrf.mxu0
    %v1046 = vadd.f32 0.0, %v1045
    %v1047 = vpop.f32.mrf.mxu0
    %1048 = vdwg.mxu0
    %v1049 = vadd.f32 %v800, %v1007
    %v1050 = vadd.f32 %v801, %v1020
    %v1051 = vadd.f32 %v802, %v1033
    %v1052 = vadd.f32 %v803, %v1046
    %v1053 = vxor.u32 %v1049, 2147483648
    %v1054 = vmul.f32 %v1053, 1.442695
    %v1055 = vpow.pop %v1054
    %v1056 = vadd.f32 %v1055, 1.0
    %v1057 = vrcp.pop %v1056
    %v1058 = vmul.f32 %v1056, %v1057
    %v1059 = vsub.f32 1.0, %v1058
    %v1060 = vmul.f32 %v1057, %v1059
    %v1061 = vadd.f32 %v1057, %v1060
    %vm1062 = vweird.f32 %v1056
    %vm1063 = vweird.f32 %v1057
    %vm1064 = vmor %vm1062, %vm1063
    %v1065 = vsel %vm1064, %v1057, %v1061
    %v1066 = vand.u32 2147483647, %v1056
    %vm1067 = vcmp.eq.f32.partialorder %v1066, 8.507059e+37
    %v1068 = vand.u32 %v1056, 2147483648
    %v1069 = vor.u32 1.1754944e-38, %v1068
    %v1070 = vsel %vm1067, %v1069, %v1065
    %v1071 = vmul.f32 1.0, %v1070
    %v1072 = vxor.u32 %v1050, 2147483648
    %v1073 = vmul.f32 %v1072, 1.442695
    %v1074 = vpow.pop %v1073
    %v1075 = vadd.f32 %v1074, 1.0
    %v1076 = vrcp.pop %v1075
    %v1077 = vmul.f32 %v1075, %v1076
    %v1078 = vsub.f32 1.0, %v1077
    %v1079 = vmul.f32 %v1076, %v1078
    %v1080 = vadd.f32 %v1076, %v1079
    %vm1081 = vweird.f32 %v1075
    %vm1082 = vweird.f32 %v1076
    %vm1083 = vmor %vm1081, %vm1082
    %v1084 = vsel %vm1083, %v1076, %v1080
    %v1085 = vand.u32 2147483647, %v1075
    %vm1086 = vcmp.eq.f32.partialorder %v1085, 8.507059e+37
    %v1087 = vand.u32 %v1075, 2147483648
    %v1088 = vor.u32 1.1754944e-38, %v1087
    %v1089 = vsel %vm1086, %v1088, %v1084
    %v1090 = vmul.f32 1.0, %v1089
    %v1091 = vtanh.pop %v1051
    %v1092 = vxor.u32 %v1052, 2147483648
    %v1093 = vmul.f32 %v1092, 1.442695
    %v1094 = vpow.pop %v1093
    %v1095 = vadd.f32 %v1094, 1.0
    %v1096 = vrcp.pop %v1095
    %v1097 = vmul.f32 %v1095, %v1096
    %v1098 = vsub.f32 1.0, %v1097
    %v1099 = vmul.f32 %v1096, %v1098
    %v1100 = vadd.f32 %v1096, %v1099
    %vm1101 = vweird.f32 %v1095
    %vm1102 = vweird.f32 %v1096
    %vm1103 = vmor %vm1101, %vm1102
    %v1104 = vsel %vm1103, %v1096, %v1100
    %v1105 = vand.u32 2147483647, %v1095
    %vm1106 = vcmp.eq.f32.partialorder %v1105, 8.507059e+37
    %v1107 = vand.u32 %v1095, 2147483648
    %v1108 = vor.u32 1.1754944e-38, %v1107
    %v1109 = vsel %vm1106, %v1108, %v1104
    %v1110 = vmul.f32 1.0, %v1109
    %v1111 = vmul.f32 %v1090, %v795
    %v1112 = vmul.f32 %v1071, %v1091
    %v1113 = vadd.f32 %v1111, %v1112
    %v1114 = vtanh.pop %v1113
    %v1115 = vmul.f32 %v1110, %v1114
    %s1116 = scalar_lea.vmem [#allocation12], 8
    %1117 = vst [vmem:[%s1116] sm:$0xff] %v1115
    %s1118 = scalar_lea.vmem [#allocation2], 64
    %v1119 = vld [vmem:[%s1118] sm:$0xff]
    %v1120 = vld [vmem:[%s1118 + $0x8] sm:$0xff]
    %v1121 = vld [vmem:[%s1118 + $0x10] sm:$0xff]
    %v1122 = vld [vmem:[%s1118 + $0x18] sm:$0xff]
    %v1123 = vpack.c.bf16 %v1115, %v1115
    %v1124 = vld [vmem:[#allocation11] sm:$0xff]
    %v1125 = vld [vmem:[#allocation11 + $0x8] sm:$0xff]
    %v1126 = vld [vmem:[#allocation11 + $0x10] sm:$0xff]
    %v1127 = vld [vmem:[#allocation11 + $0x18] sm:$0xff]
    %v1128 = vld [vmem:[#allocation11 + $0x20] sm:$0xff]
    %v1129 = vld [vmem:[#allocation11 + $0x28] sm:$0xff]
    %v1130 = vld [vmem:[#allocation11 + $0x30] sm:$0xff]
    %v1131 = vld [vmem:[#allocation11 + $0x38] sm:$0xff]
    %v1132 = vld [vmem:[#allocation11 + $0x40] sm:$0xff]
    %v1133 = vld [vmem:[#allocation11 + $0x48] sm:$0xff]
    %v1134 = vld [vmem:[#allocation11 + $0x50] sm:$0xff]
    %v1135 = vld [vmem:[#allocation11 + $0x58] sm:$0xff]
    %v1136 = vld [vmem:[#allocation11 + $0x60] sm:$0xff]
    %v1137 = vld [vmem:[#allocation11 + $0x68] sm:$0xff]
    %v1138 = vld [vmem:[#allocation11 + $0x70] sm:$0xff]
    %v1139 = vld [vmem:[#allocation11 + $0x78] sm:$0xff]
    %v1140 = vld [vmem:[#allocation11 + $0x80] sm:$0xff]
    %v1141 = vld [vmem:[#allocation11 + $0x88] sm:$0xff]
    %v1142 = vld [vmem:[#allocation11 + $0x90] sm:$0xff]
    %v1143 = vld [vmem:[#allocation11 + $0x98] sm:$0xff]
    %v1144 = vld [vmem:[#allocation11 + $0xa0] sm:$0xff]
    %v1145 = vld [vmem:[#allocation11 + $0xa8] sm:$0xff]
    %v1146 = vld [vmem:[#allocation11 + $0xb0] sm:$0xff]
    %v1147 = vld [vmem:[#allocation11 + $0xb8] sm:$0xff]
    %v1148 = vld [vmem:[#allocation11 + $0xc0] sm:$0xff]
    %v1149 = vld [vmem:[#allocation11 + $0xc8] sm:$0xff]
    %v1150 = vld [vmem:[#allocation11 + $0xd0] sm:$0xff]
    %v1151 = vld [vmem:[#allocation11 + $0xd8] sm:$0xff]
    %v1152 = vld [vmem:[#allocation11 + $0xe0] sm:$0xff]
    %v1153 = vld [vmem:[#allocation11 + $0xe8] sm:$0xff]
    %v1154 = vld [vmem:[#allocation11 + $0xf0] sm:$0xff]
    %v1155 = vld [vmem:[#allocation11 + $0xf8] sm:$0xff]
    %v1188 = vunpack.c.l.b16 %v1124
    %v1189 = vunpack.c.h.b16 %v1124
    %v1190 = vunpack.c.l.b16 %v1125
    %v1191 = vunpack.c.h.b16 %v1125
    %v1192 = vunpack.c.l.b16 %v1126
    %v1193 = vunpack.c.h.b16 %v1126
    %v1194 = vunpack.c.l.b16 %v1127
    %v1195 = vunpack.c.h.b16 %v1127
    %v1196 = vunpack.c.l.b16 %v1128
    %v1197 = vunpack.c.h.b16 %v1128
    %v1198 = vunpack.c.l.b16 %v1129
    %v1199 = vunpack.c.h.b16 %v1129
    %v1200 = vunpack.c.l.b16 %v1130
    %v1201 = vunpack.c.h.b16 %v1130
    %v1202 = vunpack.c.l.b16 %v1131
    %v1203 = vunpack.c.h.b16 %v1131
    %v1204 = vunpack.c.l.b16 %v1132
    %v1205 = vunpack.c.h.b16 %v1132
    %v1206 = vunpack.c.l.b16 %v1133
    %v1207 = vunpack.c.h.b16 %v1133
    %v1208 = vunpack.c.l.b16 %v1134
    %v1209 = vunpack.c.h.b16 %v1134
    %v1210 = vunpack.c.l.b16 %v1135
    %v1211 = vunpack.c.h.b16 %v1135
    %v1212 = vunpack.c.l.b16 %v1136
    %v1213 = vunpack.c.h.b16 %v1136
    %v1214 = vunpack.c.l.b16 %v1137
    %v1215 = vunpack.c.h.b16 %v1137
    %v1216 = vunpack.c.l.b16 %v1138
    %v1217 = vunpack.c.h.b16 %v1138
    %v1218 = vunpack.c.l.b16 %v1139
    %v1219 = vunpack.c.h.b16 %v1139
    %v1220 = vunpack.c.l.b16 %v1140
    %v1221 = vunpack.c.h.b16 %v1140
    %v1222 = vunpack.c.l.b16 %v1141
    %v1223 = vunpack.c.h.b16 %v1141
    %v1224 = vunpack.c.l.b16 %v1142
    %v1225 = vunpack.c.h.b16 %v1142
    %v1226 = vunpack.c.l.b16 %v1143
    %v1227 = vunpack.c.h.b16 %v1143
    %v1228 = vunpack.c.l.b16 %v1144
    %v1229 = vunpack.c.h.b16 %v1144
    %v1230 = vunpack.c.l.b16 %v1145
    %v1231 = vunpack.c.h.b16 %v1145
    %v1232 = vunpack.c.l.b16 %v1146
    %v1233 = vunpack.c.h.b16 %v1146
    %v1234 = vunpack.c.l.b16 %v1147
    %v1235 = vunpack.c.h.b16 %v1147
    %v1236 = vunpack.c.l.b16 %v1148
    %v1237 = vunpack.c.h.b16 %v1148
    %v1238 = vunpack.c.l.b16 %v1149
    %v1239 = vunpack.c.h.b16 %v1149
    %v1240 = vunpack.c.l.b16 %v1150
    %v1241 = vunpack.c.h.b16 %v1150
    %v1242 = vunpack.c.l.b16 %v1151
    %v1243 = vunpack.c.h.b16 %v1151
    %v1244 = vunpack.c.l.b16 %v1152
    %v1245 = vunpack.c.h.b16 %v1152
    %v1246 = vunpack.c.l.b16 %v1153
    %v1247 = vunpack.c.h.b16 %v1153
    %v1248 = vunpack.c.l.b16 %v1154
    %v1249 = vunpack.c.h.b16 %v1154
    %v1250 = vunpack.c.l.b16 %v1155
    %v1251 = vunpack.c.h.b16 %v1155
    %v1252 = vpack.c.b16 %v1192, %v1188
    %v1253 = vpack.c.b16 %v1193, %v1189
    %v1254 = vpack.c.b16 %v1194, %v1190
    %v1255 = vpack.c.b16 %v1195, %v1191
    %v1256 = vpack.c.b16 %v1200, %v1196
    %v1257 = vpack.c.b16 %v1201, %v1197
    %v1258 = vpack.c.b16 %v1202, %v1198
    %v1259 = vpack.c.b16 %v1203, %v1199
    %v1260 = vpack.c.b16 %v1208, %v1204
    %v1261 = vpack.c.b16 %v1209, %v1205
    %v1262 = vpack.c.b16 %v1210, %v1206
    %v1263 = vpack.c.b16 %v1211, %v1207
    %v1264 = vpack.c.b16 %v1216, %v1212
    %v1265 = vpack.c.b16 %v1217, %v1213
    %v1266 = vpack.c.b16 %v1218, %v1214
    %v1267 = vpack.c.b16 %v1219, %v1215
    %v1268 = vpack.c.b16 %v1224, %v1220
    %v1269 = vpack.c.b16 %v1225, %v1221
    %v1270 = vpack.c.b16 %v1226, %v1222
    %v1271 = vpack.c.b16 %v1227, %v1223
    %v1272 = vpack.c.b16 %v1232, %v1228
    %v1273 = vpack.c.b16 %v1233, %v1229
    %v1274 = vpack.c.b16 %v1234, %v1230
    %v1275 = vpack.c.b16 %v1235, %v1231
    %v1276 = vpack.c.b16 %v1240, %v1236
    %v1277 = vpack.c.b16 %v1241, %v1237
    %v1278 = vpack.c.b16 %v1242, %v1238
    %v1279 = vpack.c.b16 %v1243, %v1239
    %v1280 = vpack.c.b16 %v1248, %v1244
    %v1281 = vpack.c.b16 %v1249, %v1245
    %v1282 = vpack.c.b16 %v1250, %v1246
    %v1283 = vpack.c.b16 %v1251, %v1247
    %1316 = vmatpush.bf16.msra.mxu0 %v1280
    %1317 = vmatpush.bf16.msra.mxu0 %v1276
    %1318 = vmatpush.bf16.msra.mxu0 %v1272
    %1319 = vmatpush.bf16.msra.mxu0 %v1268
    %1320 = vmatpush.bf16.msra.mxu0 %v1264
    %1321 = vmatpush.bf16.msra.mxu0 %v1260
    %1322 = vmatpush.bf16.msra.mxu0 %v1256
    %1323 = vmatpush.bf16.msra.mxu0 %v1252
    %1324 = vmatmul.bf16.gmra.mxu0 %v1123
    %v1325 = vpop.f32.mrf.mxu0
    %v1326 = vadd.f32 0.0, %v1325
    %v1327 = vpop.f32.mrf.mxu0
    %1328 = vdwg.mxu0
    %1329 = vmatpush.bf16.msra.mxu0 %v1281
    %1330 = vmatpush.bf16.msra.mxu0 %v1277
    %1331 = vmatpush.bf16.msra.mxu0 %v1273
    %1332 = vmatpush.bf16.msra.mxu0 %v1269
    %1333 = vmatpush.bf16.msra.mxu0 %v1265
    %1334 = vmatpush.bf16.msra.mxu0 %v1261
    %1335 = vmatpush.bf16.msra.mxu0 %v1257
    %1336 = vmatpush.bf16.msra.mxu0 %v1253
    %1337 = vmatmul.bf16.gmra.mxu0 %v1123
    %v1338 = vpop.f32.mrf.mxu0
    %v1339 = vadd.f32 0.0, %v1338
    %v1340 = vpop.f32.mrf.mxu0
    %1341 = vdwg.mxu0
    %1342 = vmatpush.bf16.msra.mxu0 %v1282
    %1343 = vmatpush.bf16.msra.mxu0 %v1278
    %1344 = vmatpush.bf16.msra.mxu0 %v1274
    %1345 = vmatpush.bf16.msra.mxu0 %v1270
    %1346 = vmatpush.bf16.msra.mxu0 %v1266
    %1347 = vmatpush.bf16.msra.mxu0 %v1262
    %1348 = vmatpush.bf16.msra.mxu0 %v1258
    %1349 = vmatpush.bf16.msra.mxu0 %v1254
    %1350 = vmatmul.bf16.gmra.mxu0 %v1123
    %v1351 = vpop.f32.mrf.mxu0
    %v1352 = vadd.f32 0.0, %v1351
    %v1353 = vpop.f32.mrf.mxu0
    %1354 = vdwg.mxu0
    %1355 = vmatpush.bf16.msra.mxu0 %v1283
    %1356 = vmatpush.bf16.msra.mxu0 %v1279
    %1357 = vmatpush.bf16.msra.mxu0 %v1275
    %1358 = vmatpush.bf16.msra.mxu0 %v1271
    %1359 = vmatpush.bf16.msra.mxu0 %v1267
    %1360 = vmatpush.bf16.msra.mxu0 %v1263
    %1361 = vmatpush.bf16.msra.mxu0 %v1259
    %1362 = vmatpush.bf16.msra.mxu0 %v1255
    %1363 = vmatmul.bf16.gmra.mxu0 %v1123
    %v1364 = vpop.f32.mrf.mxu0
    %v1365 = vadd.f32 0.0, %v1364
    %v1366 = vpop.f32.mrf.mxu0
    %1367 = vdwg.mxu0
    %v1368 = vadd.f32 %v1119, %v1326
    %v1369 = vadd.f32 %v1120, %v1339
    %v1370 = vadd.f32 %v1121, %v1352
    %v1371 = vadd.f32 %v1122, %v1365
    %v1372 = vxor.u32 %v1368, 2147483648
    %v1373 = vmul.f32 %v1372, 1.442695
    %v1374 = vpow.pop %v1373
    %v1375 = vadd.f32 %v1374, 1.0
    %v1376 = vrcp.pop %v1375
    %v1377 = vmul.f32 %v1375, %v1376
    %v1378 = vsub.f32 1.0, %v1377
    %v1379 = vmul.f32 %v1376, %v1378
    %v1380 = vadd.f32 %v1376, %v1379
    %vm1381 = vweird.f32 %v1375
    %vm1382 = vweird.f32 %v1376
    %vm1383 = vmor %vm1381, %vm1382
    %v1384 = vsel %vm1383, %v1376, %v1380
    %v1385 = vand.u32 2147483647, %v1375
    %vm1386 = vcmp.eq.f32.partialorder %v1385, 8.507059e+37
    %v1387 = vand.u32 %v1375, 2147483648
    %v1388 = vor.u32 1.1754944e-38, %v1387
    %v1389 = vsel %vm1386, %v1388, %v1384
    %v1390 = vmul.f32 1.0, %v1389
    %v1391 = vxor.u32 %v1369, 2147483648
    %v1392 = vmul.f32 %v1391, 1.442695
    %v1393 = vpow.pop %v1392
    %v1394 = vadd.f32 %v1393, 1.0
    %v1395 = vrcp.pop %v1394
    %v1396 = vmul.f32 %v1394, %v1395
    %v1397 = vsub.f32 1.0, %v1396
    %v1398 = vmul.f32 %v1395, %v1397
    %v1399 = vadd.f32 %v1395, %v1398
    %vm1400 = vweird.f32 %v1394
    %vm1401 = vweird.f32 %v1395
    %vm1402 = vmor %vm1400, %vm1401
    %v1403 = vsel %vm1402, %v1395, %v1399
    %v1404 = vand.u32 2147483647, %v1394
    %vm1405 = vcmp.eq.f32.partialorder %v1404, 8.507059e+37
    %v1406 = vand.u32 %v1394, 2147483648
    %v1407 = vor.u32 1.1754944e-38, %v1406
    %v1408 = vsel %vm1405, %v1407, %v1403
    %v1409 = vmul.f32 1.0, %v1408
    %v1410 = vtanh.pop %v1370
    %v1411 = vxor.u32 %v1371, 2147483648
    %v1412 = vmul.f32 %v1411, 1.442695
    %v1413 = vpow.pop %v1412
    %v1414 = vadd.f32 %v1413, 1.0
    %v1415 = vrcp.pop %v1414
    %v1416 = vmul.f32 %v1414, %v1415
    %v1417 = vsub.f32 1.0, %v1416
    %v1418 = vmul.f32 %v1415, %v1417
    %v1419 = vadd.f32 %v1415, %v1418
    %vm1420 = vweird.f32 %v1414
    %vm1421 = vweird.f32 %v1415
    %vm1422 = vmor %vm1420, %vm1421
    %v1423 = vsel %vm1422, %v1415, %v1419
    %v1424 = vand.u32 2147483647, %v1414
    %vm1425 = vcmp.eq.f32.partialorder %v1424, 8.507059e+37
    %v1426 = vand.u32 %v1414, 2147483648
    %v1427 = vor.u32 1.1754944e-38, %v1426
    %v1428 = vsel %vm1425, %v1427, %v1423
    %v1429 = vmul.f32 1.0, %v1428
    %v1430 = vmul.f32 %v1409, %v1113
    %v1431 = vmul.f32 %v1390, %v1410
    %v1432 = vadd.f32 %v1430, %v1431
    %v1433 = vtanh.pop %v1432
    %v1434 = vmul.f32 %v1429, %v1433
    %s1435 = scalar_lea.vmem [#allocation12], 16
    %1436 = vst [vmem:[%s1435] sm:$0xff] %v1434
    %s1437 = scalar_lea.vmem [#allocation2], 96
    %v1438 = vld [vmem:[%s1437] sm:$0xff]
    %v1439 = vld [vmem:[%s1437 + $0x8] sm:$0xff]
    %v1440 = vld [vmem:[%s1437 + $0x10] sm:$0xff]
    %v1441 = vld [vmem:[%s1437 + $0x18] sm:$0xff]
    %v1442 = vpack.c.bf16 %v1434, %v1434
    %v1443 = vld [vmem:[#allocation11] sm:$0xff]
    %v1444 = vld [vmem:[#allocation11 + $0x8] sm:$0xff]
    %v1445 = vld [vmem:[#allocation11 + $0x10] sm:$0xff]
    %v1446 = vld [vmem:[#allocation11 + $0x18] sm:$0xff]
    %v1447 = vld [vmem:[#allocation11 + $0x20] sm:$0xff]
    %v1448 = vld [vmem:[#allocation11 + $0x28] sm:$0xff]
    %v1449 = vld [vmem:[#allocation11 + $0x30] sm:$0xff]
    %v1450 = vld [vmem:[#allocation11 + $0x38] sm:$0xff]
    %v1451 = vld [vmem:[#allocation11 + $0x40] sm:$0xff]
    %v1452 = vld [vmem:[#allocation11 + $0x48] sm:$0xff]
    %v1453 = vld [vmem:[#allocation11 + $0x50] sm:$0xff]
    %v1454 = vld [vmem:[#allocation11 + $0x58] sm:$0xff]
    %v1455 = vld [vmem:[#allocation11 + $0x60] sm:$0xff]
    %v1456 = vld [vmem:[#allocation11 + $0x68] sm:$0xff]
    %v1457 = vld [vmem:[#allocation11 + $0x70] sm:$0xff]
    %v1458 = vld [vmem:[#allocation11 + $0x78] sm:$0xff]
    %v1459 = vld [vmem:[#allocation11 + $0x80] sm:$0xff]
    %v1460 = vld [vmem:[#allocation11 + $0x88] sm:$0xff]
    %v1461 = vld [vmem:[#allocation11 + $0x90] sm:$0xff]
    %v1462 = vld [vmem:[#allocation11 + $0x98] sm:$0xff]
    %v1463 = vld [vmem:[#allocation11 + $0xa0] sm:$0xff]
    %v1464 = vld [vmem:[#allocation11 + $0xa8] sm:$0xff]
    %v1465 = vld [vmem:[#allocation11 + $0xb0] sm:$0xff]
    %v1466 = vld [vmem:[#allocation11 + $0xb8] sm:$0xff]
    %v1467 = vld [vmem:[#allocation11 + $0xc0] sm:$0xff]
    %v1468 = vld [vmem:[#allocation11 + $0xc8] sm:$0xff]
    %v1469 = vld [vmem:[#allocation11 + $0xd0] sm:$0xff]
    %v1470 = vld [vmem:[#allocation11 + $0xd8] sm:$0xff]
    %v1471 = vld [vmem:[#allocation11 + $0xe0] sm:$0xff]
    %v1472 = vld [vmem:[#allocation11 + $0xe8] sm:$0xff]
    %v1473 = vld [vmem:[#allocation11 + $0xf0] sm:$0xff]
    %v1474 = vld [vmem:[#allocation11 + $0xf8] sm:$0xff]
    %v1507 = vunpack.c.l.b16 %v1443
    %v1508 = vunpack.c.h.b16 %v1443
    %v1509 = vunpack.c.l.b16 %v1444
    %v1510 = vunpack.c.h.b16 %v1444
    %v1511 = vunpack.c.l.b16 %v1445
    %v1512 = vunpack.c.h.b16 %v1445
    %v1513 = vunpack.c.l.b16 %v1446
    %v1514 = vunpack.c.h.b16 %v1446
    %v1515 = vunpack.c.l.b16 %v1447
    %v1516 = vunpack.c.h.b16 %v1447
    %v1517 = vunpack.c.l.b16 %v1448
    %v1518 = vunpack.c.h.b16 %v1448
    %v1519 = vunpack.c.l.b16 %v1449
    %v1520 = vunpack.c.h.b16 %v1449
    %v1521 = vunpack.c.l.b16 %v1450
    %v1522 = vunpack.c.h.b16 %v1450
    %v1523 = vunpack.c.l.b16 %v1451
    %v1524 = vunpack.c.h.b16 %v1451
    %v1525 = vunpack.c.l.b16 %v1452
    %v1526 = vunpack.c.h.b16 %v1452
    %v1527 = vunpack.c.l.b16 %v1453
    %v1528 = vunpack.c.h.b16 %v1453
    %v1529 = vunpack.c.l.b16 %v1454
    %v1530 = vunpack.c.h.b16 %v1454
    %v1531 = vunpack.c.l.b16 %v1455
    %v1532 = vunpack.c.h.b16 %v1455
    %v1533 = vunpack.c.l.b16 %v1456
    %v1534 = vunpack.c.h.b16 %v1456
    %v1535 = vunpack.c.l.b16 %v1457
    %v1536 = vunpack.c.h.b16 %v1457
    %v1537 = vunpack.c.l.b16 %v1458
    %v1538 = vunpack.c.h.b16 %v1458
    %v1539 = vunpack.c.l.b16 %v1459
    %v1540 = vunpack.c.h.b16 %v1459
    %v1541 = vunpack.c.l.b16 %v1460
    %v1542 = vunpack.c.h.b16 %v1460
    %v1543 = vunpack.c.l.b16 %v1461
    %v1544 = vunpack.c.h.b16 %v1461
    %v1545 = vunpack.c.l.b16 %v1462
    %v1546 = vunpack.c.h.b16 %v1462
    %v1547 = vunpack.c.l.b16 %v1463
    %v1548 = vunpack.c.h.b16 %v1463
    %v1549 = vunpack.c.l.b16 %v1464
    %v1550 = vunpack.c.h.b16 %v1464
    %v1551 = vunpack.c.l.b16 %v1465
    %v1552 = vunpack.c.h.b16 %v1465
    %v1553 = vunpack.c.l.b16 %v1466
    %v1554 = vunpack.c.h.b16 %v1466
    %v1555 = vunpack.c.l.b16 %v1467
    %v1556 = vunpack.c.h.b16 %v1467
    %v1557 = vunpack.c.l.b16 %v1468
    %v1558 = vunpack.c.h.b16 %v1468
    %v1559 = vunpack.c.l.b16 %v1469
    %v1560 = vunpack.c.h.b16 %v1469
    %v1561 = vunpack.c.l.b16 %v1470
    %v1562 = vunpack.c.h.b16 %v1470
    %v1563 = vunpack.c.l.b16 %v1471
    %v1564 = vunpack.c.h.b16 %v1471
    %v1565 = vunpack.c.l.b16 %v1472
    %v1566 = vunpack.c.h.b16 %v1472
    %v1567 = vunpack.c.l.b16 %v1473
    %v1568 = vunpack.c.h.b16 %v1473
    %v1569 = vunpack.c.l.b16 %v1474
    %v1570 = vunpack.c.h.b16 %v1474
    %v1571 = vpack.c.b16 %v1511, %v1507
    %v1572 = vpack.c.b16 %v1512, %v1508
    %v1573 = vpack.c.b16 %v1513, %v1509
    %v1574 = vpack.c.b16 %v1514, %v1510
    %v1575 = vpack.c.b16 %v1519, %v1515
    %v1576 = vpack.c.b16 %v1520, %v1516
    %v1577 = vpack.c.b16 %v1521, %v1517
    %v1578 = vpack.c.b16 %v1522, %v1518
    %v1579 = vpack.c.b16 %v1527, %v1523
    %v1580 = vpack.c.b16 %v1528, %v1524
    %v1581 = vpack.c.b16 %v1529, %v1525
    %v1582 = vpack.c.b16 %v1530, %v1526
    %v1583 = vpack.c.b16 %v1535, %v1531
    %v1584 = vpack.c.b16 %v1536, %v1532
    %v1585 = vpack.c.b16 %v1537, %v1533
    %v1586 = vpack.c.b16 %v1538, %v1534
    %v1587 = vpack.c.b16 %v1543, %v1539
    %v1588 = vpack.c.b16 %v1544, %v1540
    %v1589 = vpack.c.b16 %v1545, %v1541
    %v1590 = vpack.c.b16 %v1546, %v1542
    %v1591 = vpack.c.b16 %v1551, %v1547
    %v1592 = vpack.c.b16 %v1552, %v1548
    %v1593 = vpack.c.b16 %v1553, %v1549
    %v1594 = vpack.c.b16 %v1554, %v1550
    %v1595 = vpack.c.b16 %v1559, %v1555
    %v1596 = vpack.c.b16 %v1560, %v1556
    %v1597 = vpack.c.b16 %v1561, %v1557
    %v1598 = vpack.c.b16 %v1562, %v1558
    %v1599 = vpack.c.b16 %v1567, %v1563
    %v1600 = vpack.c.b16 %v1568, %v1564
    %v1601 = vpack.c.b16 %v1569, %v1565
    %v1602 = vpack.c.b16 %v1570, %v1566
    %1635 = vmatpush.bf16.msra.mxu0 %v1599
    %1636 = vmatpush.bf16.msra.mxu0 %v1595
    %1637 = vmatpush.bf16.msra.mxu0 %v1591
    %1638 = vmatpush.bf16.msra.mxu0 %v1587
    %1639 = vmatpush.bf16.msra.mxu0 %v1583
    %1640 = vmatpush.bf16.msra.mxu0 %v1579
    %1641 = vmatpush.bf16.msra.mxu0 %v1575
    %1642 = vmatpush.bf16.msra.mxu0 %v1571
    %1643 = vmatmul.bf16.gmra.mxu0 %v1442
    %v1644 = vpop.f32.mrf.mxu0
    %v1645 = vadd.f32 0.0, %v1644
    %v1646 = vpop.f32.mrf.mxu0
    %1647 = vdwg.mxu0
    %1648 = vmatpush.bf16.msra.mxu0 %v1600
    %1649 = vmatpush.bf16.msra.mxu0 %v1596
    %1650 = vmatpush.bf16.msra.mxu0 %v1592
    %1651 = vmatpush.bf16.msra.mxu0 %v1588
    %1652 = vmatpush.bf16.msra.mxu0 %v1584
    %1653 = vmatpush.bf16.msra.mxu0 %v1580
    %1654 = vmatpush.bf16.msra.mxu0 %v1576
    %1655 = vmatpush.bf16.msra.mxu0 %v1572
    %1656 = vmatmul.bf16.gmra.mxu0 %v1442
    %v1657 = vpop.f32.mrf.mxu0
    %v1658 = vadd.f32 0.0, %v1657
    %v1659 = vpop.f32.mrf.mxu0
    %1660 = vdwg.mxu0
    %1661 = vmatpush.bf16.msra.mxu0 %v1601
    %1662 = vmatpush.bf16.msra.mxu0 %v1597
    %1663 = vmatpush.bf16.msra.mxu0 %v1593
    %1664 = vmatpush.bf16.msra.mxu0 %v1589
    %1665 = vmatpush.bf16.msra.mxu0 %v1585
    %1666 = vmatpush.bf16.msra.mxu0 %v1581
    %1667 = vmatpush.bf16.msra.mxu0 %v1577
    %1668 = vmatpush.bf16.msra.mxu0 %v1573
    %1669 = vmatmul.bf16.gmra.mxu0 %v1442
    %v1670 = vpop.f32.mrf.mxu0
    %v1671 = vadd.f32 0.0, %v1670
    %v1672 = vpop.f32.mrf.mxu0
    %1673 = vdwg.mxu0
    %1674 = vmatpush.bf16.msra.mxu0 %v1602
    %1675 = vmatpush.bf16.msra.mxu0 %v1598
    %1676 = vmatpush.bf16.msra.mxu0 %v1594
    %1677 = vmatpush.bf16.msra.mxu0 %v1590
    %1678 = vmatpush.bf16.msra.mxu0 %v1586
    %1679 = vmatpush.bf16.msra.mxu0 %v1582
    %1680 = vmatpush.bf16.msra.mxu0 %v1578
    %1681 = vmatpush.bf16.msra.mxu0 %v1574
    %1682 = vmatmul.bf16.gmra.mxu0 %v1442
    %v1683 = vpop.f32.mrf.mxu0
    %v1684 = vadd.f32 0.0, %v1683
    %v1685 = vpop.f32.mrf.mxu0
    %1686 = vdwg.mxu0
    %v1687 = vadd.f32 %v1438, %v1645
    %v1688 = vadd.f32 %v1439, %v1658
    %v1689 = vadd.f32 %v1440, %v1671
    %v1690 = vadd.f32 %v1441, %v1684
    %v1691 = vxor.u32 %v1687, 2147483648
    %v1692 = vmul.f32 %v1691, 1.442695
    %v1693 = vpow.pop %v1692
    %v1694 = vadd.f32 %v1693, 1.0
    %v1695 = vrcp.pop %v1694
    %v1696 = vmul.f32 %v1694, %v1695
    %v1697 = vsub.f32 1.0, %v1696
    %v1698 = vmul.f32 %v1695, %v1697
    %v1699 = vadd.f32 %v1695, %v1698
    %vm1700 = vweird.f32 %v1694
    %vm1701 = vweird.f32 %v1695
    %vm1702 = vmor %vm1700, %vm1701
    %v1703 = vsel %vm1702, %v1695, %v1699
    %v1704 = vand.u32 2147483647, %v1694
    %vm1705 = vcmp.eq.f32.partialorder %v1704, 8.507059e+37
    %v1706 = vand.u32 %v1694, 2147483648
    %v1707 = vor.u32 1.1754944e-38, %v1706
    %v1708 = vsel %vm1705, %v1707, %v1703
    %v1709 = vmul.f32 1.0, %v1708
    %v1710 = vxor.u32 %v1688, 2147483648
    %v1711 = vmul.f32 %v1710, 1.442695
    %v1712 = vpow.pop %v1711
    %v1713 = vadd.f32 %v1712, 1.0
    %v1714 = vrcp.pop %v1713
    %v1715 = vmul.f32 %v1713, %v1714
    %v1716 = vsub.f32 1.0, %v1715
    %v1717 = vmul.f32 %v1714, %v1716
    %v1718 = vadd.f32 %v1714, %v1717
    %vm1719 = vweird.f32 %v1713
    %vm1720 = vweird.f32 %v1714
    %vm1721 = vmor %vm1719, %vm1720
    %v1722 = vsel %vm1721, %v1714, %v1718
    %v1723 = vand.u32 2147483647, %v1713
    %vm1724 = vcmp.eq.f32.partialorder %v1723, 8.507059e+37
    %v1725 = vand.u32 %v1713, 2147483648
    %v1726 = vor.u32 1.1754944e-38, %v1725
    %v1727 = vsel %vm1724, %v1726, %v1722
    %v1728 = vmul.f32 1.0, %v1727
    %v1729 = vtanh.pop %v1689
    %v1730 = vxor.u32 %v1690, 2147483648
    %v1731 = vmul.f32 %v1730, 1.442695
    %v1732 = vpow.pop %v1731
    %v1733 = vadd.f32 %v1732, 1.0
    %v1734 = vrcp.pop %v1733
    %v1735 = vmul.f32 %v1733, %v1734
    %v1736 = vsub.f32 1.0, %v1735
    %v1737 = vmul.f32 %v1734, %v1736
    %v1738 = vadd.f32 %v1734, %v1737
    %vm1739 = vweird.f32 %v1733
    %vm1740 = vweird.f32 %v1734
    %vm1741 = vmor %vm1739, %vm1740
    %v1742 = vsel %vm1741, %v1734, %v1738
    %v1743 = vand.u32 2147483647, %v1733
    %vm1744 = vcmp.eq.f32.partialorder %v1743, 8.507059e+37
    %v1745 = vand.u32 %v1733, 2147483648
    %v1746 = vor.u32 1.1754944e-38, %v1745
    %v1747 = vsel %vm1744, %v1746, %v1742
    %v1748 = vmul.f32 1.0, %v1747
    %v1749 = vmul.f32 %v1728, %v1432
    %v1750 = vmul.f32 %v1709, %v1729
    %v1751 = vadd.f32 %v1749, %v1750
    %v1752 = vtanh.pop %v1751
    %v1753 = vmul.f32 %v1748, %v1752
    %s1754 = scalar_lea.vmem [#allocation12], 24
    %1755 = vst [vmem:[%s1754] sm:$0xff] %v1753
    %s1756 = scalar_lea.vmem [#allocation2], 128
    %v1757 = vld [vmem:[%s1756] sm:$0xff]
    %v1758 = vld [vmem:[%s1756 + $0x8] sm:$0xff]
    %v1759 = vld [vmem:[%s1756 + $0x10] sm:$0xff]
    %v1760 = vld [vmem:[%s1756 + $0x18] sm:$0xff]
    %v1761 = vpack.c.bf16 %v1753, %v1753
    %v1762 = vld [vmem:[#allocation11] sm:$0xff]
    %v1763 = vld [vmem:[#allocation11 + $0x8] sm:$0xff]
    %v1764 = vld [vmem:[#allocation11 + $0x10] sm:$0xff]
    %v1765 = vld [vmem:[#allocation11 + $0x18] sm:$0xff]
    %v1766 = vld [vmem:[#allocation11 + $0x20] sm:$0xff]
    %v1767 = vld [vmem:[#allocation11 + $0x28] sm:$0xff]
    %v1768 = vld [vmem:[#allocation11 + $0x30] sm:$0xff]
    %v1769 = vld [vmem:[#allocation11 + $0x38] sm:$0xff]
    %v1770 = vld [vmem:[#allocation11 + $0x40] sm:$0xff]
    %v1771 = vld [vmem:[#allocation11 + $0x48] sm:$0xff]
    %v1772 = vld [vmem:[#allocation11 + $0x50] sm:$0xff]
    %v1773 = vld [vmem:[#allocation11 + $0x58] sm:$0xff]
    %v1774 = vld [vmem:[#allocation11 + $0x60] sm:$0xff]
    %v1775 = vld [vmem:[#allocation11 + $0x68] sm:$0xff]
    %v1776 = vld [vmem:[#allocation11 + $0x70] sm:$0xff]
    %v1777 = vld [vmem:[#allocation11 + $0x78] sm:$0xff]
    %v1778 = vld [vmem:[#allocation11 + $0x80] sm:$0xff]
    %v1779 = vld [vmem:[#allocation11 + $0x88] sm:$0xff]
    %v1780 = vld [vmem:[#allocation11 + $0x90] sm:$0xff]
    %v1781 = vld [vmem:[#allocation11 + $0x98] sm:$0xff]
    %v1782 = vld [vmem:[#allocation11 + $0xa0] sm:$0xff]
    %v1783 = vld [vmem:[#allocation11 + $0xa8] sm:$0xff]
    %v1784 = vld [vmem:[#allocation11 + $0xb0] sm:$0xff]
    %v1785 = vld [vmem:[#allocation11 + $0xb8] sm:$0xff]
    %v1786 = vld [vmem:[#allocation11 + $0xc0] sm:$0xff]
    %v1787 = vld [vmem:[#allocation11 + $0xc8] sm:$0xff]
    %v1788 = vld [vmem:[#allocation11 + $0xd0] sm:$0xff]
    %v1789 = vld [vmem:[#allocation11 + $0xd8] sm:$0xff]
    %v1790 = vld [vmem:[#allocation11 + $0xe0] sm:$0xff]
    %v1791 = vld [vmem:[#allocation11 + $0xe8] sm:$0xff]
    %v1792 = vld [vmem:[#allocation11 + $0xf0] sm:$0xff]
    %v1793 = vld [vmem:[#allocation11 + $0xf8] sm:$0xff]
    %v1826 = vunpack.c.l.b16 %v1762
    %v1827 = vunpack.c.h.b16 %v1762
    %v1828 = vunpack.c.l.b16 %v1763
    %v1829 = vunpack.c.h.b16 %v1763
    %v1830 = vunpack.c.l.b16 %v1764
    %v1831 = vunpack.c.h.b16 %v1764
    %v1832 = vunpack.c.l.b16 %v1765
    %v1833 = vunpack.c.h.b16 %v1765
    %v1834 = vunpack.c.l.b16 %v1766
    %v1835 = vunpack.c.h.b16 %v1766
    %v1836 = vunpack.c.l.b16 %v1767
    %v1837 = vunpack.c.h.b16 %v1767
    %v1838 = vunpack.c.l.b16 %v1768
    %v1839 = vunpack.c.h.b16 %v1768
    %v1840 = vunpack.c.l.b16 %v1769
    %v1841 = vunpack.c.h.b16 %v1769
    %v1842 = vunpack.c.l.b16 %v1770
    %v1843 = vunpack.c.h.b16 %v1770
    %v1844 = vunpack.c.l.b16 %v1771
    %v1845 = vunpack.c.h.b16 %v1771
    %v1846 = vunpack.c.l.b16 %v1772
    %v1847 = vunpack.c.h.b16 %v1772
    %v1848 = vunpack.c.l.b16 %v1773
    %v1849 = vunpack.c.h.b16 %v1773
    %v1850 = vunpack.c.l.b16 %v1774
    %v1851 = vunpack.c.h.b16 %v1774
    %v1852 = vunpack.c.l.b16 %v1775
    %v1853 = vunpack.c.h.b16 %v1775
    %v1854 = vunpack.c.l.b16 %v1776
    %v1855 = vunpack.c.h.b16 %v1776
    %v1856 = vunpack.c.l.b16 %v1777
    %v1857 = vunpack.c.h.b16 %v1777
    %v1858 = vunpack.c.l.b16 %v1778
    %v1859 = vunpack.c.h.b16 %v1778
    %v1860 = vunpack.c.l.b16 %v1779
    %v1861 = vunpack.c.h.b16 %v1779
    %v1862 = vunpack.c.l.b16 %v1780
    %v1863 = vunpack.c.h.b16 %v1780
    %v1864 = vunpack.c.l.b16 %v1781
    %v1865 = vunpack.c.h.b16 %v1781
    %v1866 = vunpack.c.l.b16 %v1782
    %v1867 = vunpack.c.h.b16 %v1782
    %v1868 = vunpack.c.l.b16 %v1783
    %v1869 = vunpack.c.h.b16 %v1783
    %v1870 = vunpack.c.l.b16 %v1784
    %v1871 = vunpack.c.h.b16 %v1784
    %v1872 = vunpack.c.l.b16 %v1785
    %v1873 = vunpack.c.h.b16 %v1785
    %v1874 = vunpack.c.l.b16 %v1786
    %v1875 = vunpack.c.h.b16 %v1786
    %v1876 = vunpack.c.l.b16 %v1787
    %v1877 = vunpack.c.h.b16 %v1787
    %v1878 = vunpack.c.l.b16 %v1788
    %v1879 = vunpack.c.h.b16 %v1788
    %v1880 = vunpack.c.l.b16 %v1789
    %v1881 = vunpack.c.h.b16 %v1789
    %v1882 = vunpack.c.l.b16 %v1790
    %v1883 = vunpack.c.h.b16 %v1790
    %v1884 = vunpack.c.l.b16 %v1791
    %v1885 = vunpack.c.h.b16 %v1791
    %v1886 = vunpack.c.l.b16 %v1792
    %v1887 = vunpack.c.h.b16 %v1792
    %v1888 = vunpack.c.l.b16 %v1793
    %v1889 = vunpack.c.h.b16 %v1793
    %v1890 = vpack.c.b16 %v1830, %v1826
    %v1891 = vpack.c.b16 %v1831, %v1827
    %v1892 = vpack.c.b16 %v1832, %v1828
    %v1893 = vpack.c.b16 %v1833, %v1829
    %v1894 = vpack.c.b16 %v1838, %v1834
    %v1895 = vpack.c.b16 %v1839, %v1835
    %v1896 = vpack.c.b16 %v1840, %v1836
    %v1897 = vpack.c.b16 %v1841, %v1837
    %v1898 = vpack.c.b16 %v1846, %v1842
    %v1899 = vpack.c.b16 %v1847, %v1843
    %v1900 = vpack.c.b16 %v1848, %v1844
    %v1901 = vpack.c.b16 %v1849, %v1845
    %v1902 = vpack.c.b16 %v1854, %v1850
    %v1903 = vpack.c.b16 %v1855, %v1851
    %v1904 = vpack.c.b16 %v1856, %v1852
    %v1905 = vpack.c.b16 %v1857, %v1853
    %v1906 = vpack.c.b16 %v1862, %v1858
    %v1907 = vpack.c.b16 %v1863, %v1859
    %v1908 = vpack.c.b16 %v1864, %v1860
    %v1909 = vpack.c.b16 %v1865, %v1861
    %v1910 = vpack.c.b16 %v1870, %v1866
    %v1911 = vpack.c.b16 %v1871, %v1867
    %v1912 = vpack.c.b16 %v1872, %v1868
    %v1913 = vpack.c.b16 %v1873, %v1869
    %v1914 = vpack.c.b16 %v1878, %v1874
    %v1915 = vpack.c.b16 %v1879, %v1875
    %v1916 = vpack.c.b16 %v1880, %v1876
    %v1917 = vpack.c.b16 %v1881, %v1877
    %v1918 = vpack.c.b16 %v1886, %v1882
    %v1919 = vpack.c.b16 %v1887, %v1883
    %v1920 = vpack.c.b16 %v1888, %v1884
    %v1921 = vpack.c.b16 %v1889, %v1885
    %1954 = vmatpush.bf16.msra.mxu0 %v1918
    %1955 = vmatpush.bf16.msra.mxu0 %v1914
    %1956 = vmatpush.bf16.msra.mxu0 %v1910
    %1957 = vmatpush.bf16.msra.mxu0 %v1906
    %1958 = vmatpush.bf16.msra.mxu0 %v1902
    %1959 = vmatpush.bf16.msra.mxu0 %v1898
    %1960 = vmatpush.bf16.msra.mxu0 %v1894
    %1961 = vmatpush.bf16.msra.mxu0 %v1890
    %1962 = vmatmul.bf16.gmra.mxu0 %v1761
    %v1963 = vpop.f32.mrf.mxu0
    %v1964 = vadd.f32 0.0, %v1963
    %v1965 = vpop.f32.mrf.mxu0
    %1966 = vdwg.mxu0
    %1967 = vmatpush.bf16.msra.mxu0 %v1919
    %1968 = vmatpush.bf16.msra.mxu0 %v1915
    %1969 = vmatpush.bf16.msra.mxu0 %v1911
    %1970 = vmatpush.bf16.msra.mxu0 %v1907
    %1971 = vmatpush.bf16.msra.mxu0 %v1903
    %1972 = vmatpush.bf16.msra.mxu0 %v1899
    %1973 = vmatpush.bf16.msra.mxu0 %v1895
    %1974 = vmatpush.bf16.msra.mxu0 %v1891
    %1975 = vmatmul.bf16.gmra.mxu0 %v1761
    %v1976 = vpop.f32.mrf.mxu0
    %v1977 = vadd.f32 0.0, %v1976
    %v1978 = vpop.f32.mrf.mxu0
    %1979 = vdwg.mxu0
    %1980 = vmatpush.bf16.msra.mxu0 %v1920
    %1981 = vmatpush.bf16.msra.mxu0 %v1916
    %1982 = vmatpush.bf16.msra.mxu0 %v1912
    %1983 = vmatpush.bf16.msra.mxu0 %v1908
    %1984 = vmatpush.bf16.msra.mxu0 %v1904
    %1985 = vmatpush.bf16.msra.mxu0 %v1900
    %1986 = vmatpush.bf16.msra.mxu0 %v1896
    %1987 = vmatpush.bf16.msra.mxu0 %v1892
    %1988 = vmatmul.bf16.gmra.mxu0 %v1761
    %v1989 = vpop.f32.mrf.mxu0
    %v1990 = vadd.f32 0.0, %v1989
    %v1991 = vpop.f32.mrf.mxu0
    %1992 = vdwg.mxu0
    %1993 = vmatpush.bf16.msra.mxu0 %v1921
    %1994 = vmatpush.bf16.msra.mxu0 %v1917
    %1995 = vmatpush.bf16.msra.mxu0 %v1913
    %1996 = vmatpush.bf16.msra.mxu0 %v1909
    %1997 = vmatpush.bf16.msra.mxu0 %v1905
    %1998 = vmatpush.bf16.msra.mxu0 %v1901
    %1999 = vmatpush.bf16.msra.mxu0 %v1897
    %2000 = vmatpush.bf16.msra.mxu0 %v1893
    %2001 = vmatmul.bf16.gmra.mxu0 %v1761
    %v2002 = vpop.f32.mrf.mxu0
    %v2003 = vadd.f32 0.0, %v2002
    %v2004 = vpop.f32.mrf.mxu0
    %2005 = vdwg.mxu0
    %v2006 = vadd.f32 %v1757, %v1964
    %v2007 = vadd.f32 %v1758, %v1977
    %v2008 = vadd.f32 %v1759, %v1990
    %v2009 = vadd.f32 %v1760, %v2003
    %v2010 = vxor.u32 %v2006, 2147483648
    %v2011 = vmul.f32 %v2010, 1.442695
    %v2012 = vpow.pop %v2011
    %v2013 = vadd.f32 %v2012, 1.0
    %v2014 = vrcp.pop %v2013
    %v2015 = vmul.f32 %v2013, %v2014
    %v2016 = vsub.f32 1.0, %v2015
    %v2017 = vmul.f32 %v2014, %v2016
    %v2018 = vadd.f32 %v2014, %v2017
    %vm2019 = vweird.f32 %v2013
    %vm2020 = vweird.f32 %v2014
    %vm2021 = vmor %vm2019, %vm2020
    %v2022 = vsel %vm2021, %v2014, %v2018
    %v2023 = vand.u32 2147483647, %v2013
    %vm2024 = vcmp.eq.f32.partialorder %v2023, 8.507059e+37
    %v2025 = vand.u32 %v2013, 2147483648
    %v2026 = vor.u32 1.1754944e-38, %v2025
    %v2027 = vsel %vm2024, %v2026, %v2022
    %v2028 = vmul.f32 1.0, %v2027
    %v2029 = vxor.u32 %v2007, 2147483648
    %v2030 = vmul.f32 %v2029, 1.442695
    %v2031 = vpow.pop %v2030
    %v2032 = vadd.f32 %v2031, 1.0
    %v2033 = vrcp.pop %v2032
    %v2034 = vmul.f32 %v2032, %v2033
    %v2035 = vsub.f32 1.0, %v2034
    %v2036 = vmul.f32 %v2033, %v2035
    %v2037 = vadd.f32 %v2033, %v2036
    %vm2038 = vweird.f32 %v2032
    %vm2039 = vweird.f32 %v2033
    %vm2040 = vmor %vm2038, %vm2039
    %v2041 = vsel %vm2040, %v2033, %v2037
    %v2042 = vand.u32 2147483647, %v2032
    %vm2043 = vcmp.eq.f32.partialorder %v2042, 8.507059e+37
    %v2044 = vand.u32 %v2032, 2147483648
    %v2045 = vor.u32 1.1754944e-38, %v2044
    %v2046 = vsel %vm2043, %v2045, %v2041
    %v2047 = vmul.f32 1.0, %v2046
    %v2048 = vtanh.pop %v2008
    %v2049 = vxor.u32 %v2009, 2147483648
    %v2050 = vmul.f32 %v2049, 1.442695
    %v2051 = vpow.pop %v2050
    %v2052 = vadd.f32 %v2051, 1.0
    %v2053 = vrcp.pop %v2052
    %v2054 = vmul.f32 %v2052, %v2053
    %v2055 = vsub.f32 1.0, %v2054
    %v2056 = vmul.f32 %v2053, %v2055
    %v2057 = vadd.f32 %v2053, %v2056
    %vm2058 = vweird.f32 %v2052
    %vm2059 = vweird.f32 %v2053
    %vm2060 = vmor %vm2058, %vm2059
    %v2061 = vsel %vm2060, %v2053, %v2057
    %v2062 = vand.u32 2147483647, %v2052
    %vm2063 = vcmp.eq.f32.partialorder %v2062, 8.507059e+37
    %v2064 = vand.u32 %v2052, 2147483648
    %v2065 = vor.u32 1.1754944e-38, %v2064
    %v2066 = vsel %vm2063, %v2065, %v2061
    %v2067 = vmul.f32 1.0, %v2066
    %v2068 = vmul.f32 %v2047, %v1751
    %v2069 = vmul.f32 %v2028, %v2048
    %v2070 = vadd.f32 %v2068, %v2069
    %v2071 = vtanh.pop %v2070
    %v2072 = vmul.f32 %v2067, %v2071
    %s2073 = scalar_lea.vmem [#allocation12], 32
    %2074 = vst [vmem:[%s2073] sm:$0xff] %v2072
    %s2075 = scalar_lea.vmem [#allocation2], 160
    %v2076 = vld [vmem:[%s2075] sm:$0xff]
    %v2077 = vld [vmem:[%s2075 + $0x8] sm:$0xff]
    %v2078 = vld [vmem:[%s2075 + $0x10] sm:$0xff]
    %v2079 = vld [vmem:[%s2075 + $0x18] sm:$0xff]
    %v2080 = vpack.c.bf16 %v2072, %v2072
    %v2081 = vld [vmem:[#allocation11] sm:$0xff]
    %v2082 = vld [vmem:[#allocation11 + $0x8] sm:$0xff]
    %v2083 = vld [vmem:[#allocation11 + $0x10] sm:$0xff]
    %v2084 = vld [vmem:[#allocation11 + $0x18] sm:$0xff]
    %v2085 = vld [vmem:[#allocation11 + $0x20] sm:$0xff]
    %v2086 = vld [vmem:[#allocation11 + $0x28] sm:$0xff]
    %v2087 = vld [vmem:[#allocation11 + $0x30] sm:$0xff]
    %v2088 = vld [vmem:[#allocation11 + $0x38] sm:$0xff]
    %v2089 = vld [vmem:[#allocation11 + $0x40] sm:$0xff]
    %v2090 = vld [vmem:[#allocation11 + $0x48] sm:$0xff]
    %v2091 = vld [vmem:[#allocation11 + $0x50] sm:$0xff]
    %v2092 = vld [vmem:[#allocation11 + $0x58] sm:$0xff]
    %v2093 = vld [vmem:[#allocation11 + $0x60] sm:$0xff]
    %v2094 = vld [vmem:[#allocation11 + $0x68] sm:$0xff]
    %v2095 = vld [vmem:[#allocation11 + $0x70] sm:$0xff]
    %v2096 = vld [vmem:[#allocation11 + $0x78] sm:$0xff]
    %v2097 = vld [vmem:[#allocation11 + $0x80] sm:$0xff]
    %v2098 = vld [vmem:[#allocation11 + $0x88] sm:$0xff]
    %v2099 = vld [vmem:[#allocation11 + $0x90] sm:$0xff]
    %v2100 = vld [vmem:[#allocation11 + $0x98] sm:$0xff]
    %v2101 = vld [vmem:[#allocation11 + $0xa0] sm:$0xff]
    %v2102 = vld [vmem:[#allocation11 + $0xa8] sm:$0xff]
    %v2103 = vld [vmem:[#allocation11 + $0xb0] sm:$0xff]
    %v2104 = vld [vmem:[#allocation11 + $0xb8] sm:$0xff]
    %v2105 = vld [vmem:[#allocation11 + $0xc0] sm:$0xff]
    %v2106 = vld [vmem:[#allocation11 + $0xc8] sm:$0xff]
    %v2107 = vld [vmem:[#allocation11 + $0xd0] sm:$0xff]
    %v2108 = vld [vmem:[#allocation11 + $0xd8] sm:$0xff]
    %v2109 = vld [vmem:[#allocation11 + $0xe0] sm:$0xff]
    %v2110 = vld [vmem:[#allocation11 + $0xe8] sm:$0xff]
    %v2111 = vld [vmem:[#allocation11 + $0xf0] sm:$0xff]
    %v2112 = vld [vmem:[#allocation11 + $0xf8] sm:$0xff]
    %v2145 = vunpack.c.l.b16 %v2081
    %v2146 = vunpack.c.h.b16 %v2081
    %v2147 = vunpack.c.l.b16 %v2082
    %v2148 = vunpack.c.h.b16 %v2082
    %v2149 = vunpack.c.l.b16 %v2083
    %v2150 = vunpack.c.h.b16 %v2083
    %v2151 = vunpack.c.l.b16 %v2084
    %v2152 = vunpack.c.h.b16 %v2084
    %v2153 = vunpack.c.l.b16 %v2085
    %v2154 = vunpack.c.h.b16 %v2085
    %v2155 = vunpack.c.l.b16 %v2086
    %v2156 = vunpack.c.h.b16 %v2086
    %v2157 = vunpack.c.l.b16 %v2087
    %v2158 = vunpack.c.h.b16 %v2087
    %v2159 = vunpack.c.l.b16 %v2088
    %v2160 = vunpack.c.h.b16 %v2088
    %v2161 = vunpack.c.l.b16 %v2089
    %v2162 = vunpack.c.h.b16 %v2089
    %v2163 = vunpack.c.l.b16 %v2090
    %v2164 = vunpack.c.h.b16 %v2090
    %v2165 = vunpack.c.l.b16 %v2091
    %v2166 = vunpack.c.h.b16 %v2091
    %v2167 = vunpack.c.l.b16 %v2092
    %v2168 = vunpack.c.h.b16 %v2092
    %v2169 = vunpack.c.l.b16 %v2093
    %v2170 = vunpack.c.h.b16 %v2093
    %v2171 = vunpack.c.l.b16 %v2094
    %v2172 = vunpack.c.h.b16 %v2094
    %v2173 = vunpack.c.l.b16 %v2095
    %v2174 = vunpack.c.h.b16 %v2095
    %v2175 = vunpack.c.l.b16 %v2096
    %v2176 = vunpack.c.h.b16 %v2096
    %v2177 = vunpack.c.l.b16 %v2097
    %v2178 = vunpack.c.h.b16 %v2097
    %v2179 = vunpack.c.l.b16 %v2098
    %v2180 = vunpack.c.h.b16 %v2098
    %v2181 = vunpack.c.l.b16 %v2099
    %v2182 = vunpack.c.h.b16 %v2099
    %v2183 = vunpack.c.l.b16 %v2100
    %v2184 = vunpack.c.h.b16 %v2100
    %v2185 = vunpack.c.l.b16 %v2101
    %v2186 = vunpack.c.h.b16 %v2101
    %v2187 = vunpack.c.l.b16 %v2102
    %v2188 = vunpack.c.h.b16 %v2102
    %v2189 = vunpack.c.l.b16 %v2103
    %v2190 = vunpack.c.h.b16 %v2103
    %v2191 = vunpack.c.l.b16 %v2104
    %v2192 = vunpack.c.h.b16 %v2104
    %v2193 = vunpack.c.l.b16 %v2105
    %v2194 = vunpack.c.h.b16 %v2105
    %v2195 = vunpack.c.l.b16 %v2106
    %v2196 = vunpack.c.h.b16 %v2106
    %v2197 = vunpack.c.l.b16 %v2107
    %v2198 = vunpack.c.h.b16 %v2107
    %v2199 = vunpack.c.l.b16 %v2108
    %v2200 = vunpack.c.h.b16 %v2108
    %v2201 = vunpack.c.l.b16 %v2109
    %v2202 = vunpack.c.h.b16 %v2109
    %v2203 = vunpack.c.l.b16 %v2110
    %v2204 = vunpack.c.h.b16 %v2110
    %v2205 = vunpack.c.l.b16 %v2111
    %v2206 = vunpack.c.h.b16 %v2111
    %v2207 = vunpack.c.l.b16 %v2112
    %v2208 = vunpack.c.h.b16 %v2112
    %v2209 = vpack.c.b16 %v2149, %v2145
    %v2210 = vpack.c.b16 %v2150, %v2146
    %v2211 = vpack.c.b16 %v2151, %v2147
    %v2212 = vpack.c.b16 %v2152, %v2148
    %v2213 = vpack.c.b16 %v2157, %v2153
    %v2214 = vpack.c.b16 %v2158, %v2154
    %v2215 = vpack.c.b16 %v2159, %v2155
    %v2216 = vpack.c.b16 %v2160, %v2156
    %v2217 = vpack.c.b16 %v2165, %v2161
    %v2218 = vpack.c.b16 %v2166, %v2162
    %v2219 = vpack.c.b16 %v2167, %v2163
    %v2220 = vpack.c.b16 %v2168, %v2164
    %v2221 = vpack.c.b16 %v2173, %v2169
    %v2222 = vpack.c.b16 %v2174, %v2170
    %v2223 = vpack.c.b16 %v2175, %v2171
    %v2224 = vpack.c.b16 %v2176, %v2172
    %v2225 = vpack.c.b16 %v2181, %v2177
    %v2226 = vpack.c.b16 %v2182, %v2178
    %v2227 = vpack.c.b16 %v2183, %v2179
    %v2228 = vpack.c.b16 %v2184, %v2180
    %v2229 = vpack.c.b16 %v2189, %v2185
    %v2230 = vpack.c.b16 %v2190, %v2186
    %v2231 = vpack.c.b16 %v2191, %v2187
    %v2232 = vpack.c.b16 %v2192, %v2188
    %v2233 = vpack.c.b16 %v2197, %v2193
    %v2234 = vpack.c.b16 %v2198, %v2194
    %v2235 = vpack.c.b16 %v2199, %v2195
    %v2236 = vpack.c.b16 %v2200, %v2196
    %v2237 = vpack.c.b16 %v2205, %v2201
    %v2238 = vpack.c.b16 %v2206, %v2202
    %v2239 = vpack.c.b16 %v2207, %v2203
    %v2240 = vpack.c.b16 %v2208, %v2204
    %2273 = vmatpush.bf16.msra.mxu0 %v2237
    %2274 = vmatpush.bf16.msra.mxu0 %v2233
    %2275 = vmatpush.bf16.msra.mxu0 %v2229
    %2276 = vmatpush.bf16.msra.mxu0 %v2225
    %2277 = vmatpush.bf16.msra.mxu0 %v2221
    %2278 = vmatpush.bf16.msra.mxu0 %v2217
    %2279 = vmatpush.bf16.msra.mxu0 %v2213
    %2280 = vmatpush.bf16.msra.mxu0 %v2209
    %2281 = vmatmul.bf16.gmra.mxu0 %v2080
    %v2282 = vpop.f32.mrf.mxu0
    %v2283 = vadd.f32 0.0, %v2282
    %v2284 = vpop.f32.mrf.mxu0
    %2285 = vdwg.mxu0
    %2286 = vmatpush.bf16.msra.mxu0 %v2238
    %2287 = vmatpush.bf16.msra.mxu0 %v2234
    %2288 = vmatpush.bf16.msra.mxu0 %v2230
    %2289 = vmatpush.bf16.msra.mxu0 %v2226
    %2290 = vmatpush.bf16.msra.mxu0 %v2222
    %2291 = vmatpush.bf16.msra.mxu0 %v2218
    %2292 = vmatpush.bf16.msra.mxu0 %v2214
    %2293 = vmatpush.bf16.msra.mxu0 %v2210
    %2294 = vmatmul.bf16.gmra.mxu0 %v2080
    %v2295 = vpop.f32.mrf.mxu0
    %v2296 = vadd.f32 0.0, %v2295
    %v2297 = vpop.f32.mrf.mxu0
    %2298 = vdwg.mxu0
    %2299 = vmatpush.bf16.msra.mxu0 %v2239
    %2300 = vmatpush.bf16.msra.mxu0 %v2235
    %2301 = vmatpush.bf16.msra.mxu0 %v2231
    %2302 = vmatpush.bf16.msra.mxu0 %v2227
    %2303 = vmatpush.bf16.msra.mxu0 %v2223
    %2304 = vmatpush.bf16.msra.mxu0 %v2219
    %2305 = vmatpush.bf16.msra.mxu0 %v2215
    %2306 = vmatpush.bf16.msra.mxu0 %v2211
    %2307 = vmatmul.bf16.gmra.mxu0 %v2080
    %v2308 = vpop.f32.mrf.mxu0
    %v2309 = vadd.f32 0.0, %v2308
    %v2310 = vpop.f32.mrf.mxu0
    %2311 = vdwg.mxu0
    %2312 = vmatpush.bf16.msra.mxu0 %v2240
    %2313 = vmatpush.bf16.msra.mxu0 %v2236
    %2314 = vmatpush.bf16.msra.mxu0 %v2232
    %2315 = vmatpush.bf16.msra.mxu0 %v2228
    %2316 = vmatpush.bf16.msra.mxu0 %v2224
    %2317 = vmatpush.bf16.msra.mxu0 %v2220
    %2318 = vmatpush.bf16.msra.mxu0 %v2216
    %2319 = vmatpush.bf16.msra.mxu0 %v2212
    %2320 = vmatmul.bf16.gmra.mxu0 %v2080
    %v2321 = vpop.f32.mrf.mxu0
    %v2322 = vadd.f32 0.0, %v2321
    %v2323 = vpop.f32.mrf.mxu0
    %2324 = vdwg.mxu0
    %v2325 = vadd.f32 %v2076, %v2283
    %v2326 = vadd.f32 %v2077, %v2296
    %v2327 = vadd.f32 %v2078, %v2309
    %v2328 = vadd.f32 %v2079, %v2322
    %v2329 = vxor.u32 %v2325, 2147483648
    %v2330 = vmul.f32 %v2329, 1.442695
    %v2331 = vpow.pop %v2330
    %v2332 = vadd.f32 %v2331, 1.0
    %v2333 = vrcp.pop %v2332
    %v2334 = vmul.f32 %v2332, %v2333
    %v2335 = vsub.f32 1.0, %v2334
    %v2336 = vmul.f32 %v2333, %v2335
    %v2337 = vadd.f32 %v2333, %v2336
    %vm2338 = vweird.f32 %v2332
    %vm2339 = vweird.f32 %v2333
    %vm2340 = vmor %vm2338, %vm2339
    %v2341 = vsel %vm2340, %v2333, %v2337
    %v2342 = vand.u32 2147483647, %v2332
    %vm2343 = vcmp.eq.f32.partialorder %v2342, 8.507059e+37
    %v2344 = vand.u32 %v2332, 2147483648
    %v2345 = vor.u32 1.1754944e-38, %v2344
    %v2346 = vsel %vm2343, %v2345, %v2341
    %v2347 = vmul.f32 1.0, %v2346
    %v2348 = vxor.u32 %v2326, 2147483648
    %v2349 = vmul.f32 %v2348, 1.442695
    %v2350 = vpow.pop %v2349
    %v2351 = vadd.f32 %v2350, 1.0
    %v2352 = vrcp.pop %v2351
    %v2353 = vmul.f32 %v2351, %v2352
    %v2354 = vsub.f32 1.0, %v2353
    %v2355 = vmul.f32 %v2352, %v2354
    %v2356 = vadd.f32 %v2352, %v2355
    %vm2357 = vweird.f32 %v2351
    %vm2358 = vweird.f32 %v2352
    %vm2359 = vmor %vm2357, %vm2358
    %v2360 = vsel %vm2359, %v2352, %v2356
    %v2361 = vand.u32 2147483647, %v2351
    %vm2362 = vcmp.eq.f32.partialorder %v2361, 8.507059e+37
    %v2363 = vand.u32 %v2351, 2147483648
    %v2364 = vor.u32 1.1754944e-38, %v2363
    %v2365 = vsel %vm2362, %v2364, %v2360
    %v2366 = vmul.f32 1.0, %v2365
    %v2367 = vtanh.pop %v2327
    %v2368 = vxor.u32 %v2328, 2147483648
    %v2369 = vmul.f32 %v2368, 1.442695
    %v2370 = vpow.pop %v2369
    %v2371 = vadd.f32 %v2370, 1.0
    %v2372 = vrcp.pop %v2371
    %v2373 = vmul.f32 %v2371, %v2372
    %v2374 = vsub.f32 1.0, %v2373
    %v2375 = vmul.f32 %v2372, %v2374
    %v2376 = vadd.f32 %v2372, %v2375
    %vm2377 = vweird.f32 %v2371
    %vm2378 = vweird.f32 %v2372
    %vm2379 = vmor %vm2377, %vm2378
    %v2380 = vsel %vm2379, %v2372, %v2376
    %v2381 = vand.u32 2147483647, %v2371
    %vm2382 = vcmp.eq.f32.partialorder %v2381, 8.507059e+37
    %v2383 = vand.u32 %v2371, 2147483648
    %v2384 = vor.u32 1.1754944e-38, %v2383
    %v2385 = vsel %vm2382, %v2384, %v2380
    %v2386 = vmul.f32 1.0, %v2385
    %v2387 = vmul.f32 %v2366, %v2070
    %v2388 = vmul.f32 %v2347, %v2367
    %v2389 = vadd.f32 %v2387, %v2388
    %v2390 = vtanh.pop %v2389
    %v2391 = vmul.f32 %v2386, %v2390
    %s2392 = scalar_lea.vmem [#allocation12], 40
    %2393 = vst [vmem:[%s2392] sm:$0xff] %v2391
    %s2394 = scalar_lea.vmem [#allocation2], 192
    %v2395 = vld [vmem:[%s2394] sm:$0xff]
    %v2396 = vld [vmem:[%s2394 + $0x8] sm:$0xff]
    %v2397 = vld [vmem:[%s2394 + $0x10] sm:$0xff]
    %v2398 = vld [vmem:[%s2394 + $0x18] sm:$0xff]
    %v2399 = vpack.c.bf16 %v2391, %v2391
    %v2400 = vld [vmem:[#allocation11] sm:$0xff]
    %v2401 = vld [vmem:[#allocation11 + $0x8] sm:$0xff]
    %v2402 = vld [vmem:[#allocation11 + $0x10] sm:$0xff]
    %v2403 = vld [vmem:[#allocation11 + $0x18] sm:$0xff]
    %v2404 = vld [vmem:[#allocation11 + $0x20] sm:$0xff]
    %v2405 = vld [vmem:[#allocation11 + $0x28] sm:$0xff]
    %v2406 = vld [vmem:[#allocation11 + $0x30] sm:$0xff]
    %v2407 = vld [vmem:[#allocation11 + $0x38] sm:$0xff]
    %v2408 = vld [vmem:[#allocation11 + $0x40] sm:$0xff]
    %v2409 = vld [vmem:[#allocation11 + $0x48] sm:$0xff]
    %v2410 = vld [vmem:[#allocation11 + $0x50] sm:$0xff]
    %v2411 = vld [vmem:[#allocation11 + $0x58] sm:$0xff]
    %v2412 = vld [vmem:[#allocation11 + $0x60] sm:$0xff]
    %v2413 = vld [vmem:[#allocation11 + $0x68] sm:$0xff]
    %v2414 = vld [vmem:[#allocation11 + $0x70] sm:$0xff]
    %v2415 = vld [vmem:[#allocation11 + $0x78] sm:$0xff]
    %v2416 = vld [vmem:[#allocation11 + $0x80] sm:$0xff]
    %v2417 = vld [vmem:[#allocation11 + $0x88] sm:$0xff]
    %v2418 = vld [vmem:[#allocation11 + $0x90] sm:$0xff]
    %v2419 = vld [vmem:[#allocation11 + $0x98] sm:$0xff]
    %v2420 = vld [vmem:[#allocation11 + $0xa0] sm:$0xff]
    %v2421 = vld [vmem:[#allocation11 + $0xa8] sm:$0xff]
    %v2422 = vld [vmem:[#allocation11 + $0xb0] sm:$0xff]
    %v2423 = vld [vmem:[#allocation11 + $0xb8] sm:$0xff]
    %v2424 = vld [vmem:[#allocation11 + $0xc0] sm:$0xff]
    %v2425 = vld [vmem:[#allocation11 + $0xc8] sm:$0xff]
    %v2426 = vld [vmem:[#allocation11 + $0xd0] sm:$0xff]
    %v2427 = vld [vmem:[#allocation11 + $0xd8] sm:$0xff]
    %v2428 = vld [vmem:[#allocation11 + $0xe0] sm:$0xff]
    %v2429 = vld [vmem:[#allocation11 + $0xe8] sm:$0xff]
    %v2430 = vld [vmem:[#allocation11 + $0xf0] sm:$0xff]
    %v2431 = vld [vmem:[#allocation11 + $0xf8] sm:$0xff]
    %v2464 = vunpack.c.l.b16 %v2400
    %v2465 = vunpack.c.h.b16 %v2400
    %v2466 = vunpack.c.l.b16 %v2401
    %v2467 = vunpack.c.h.b16 %v2401
    %v2468 = vunpack.c.l.b16 %v2402
    %v2469 = vunpack.c.h.b16 %v2402
    %v2470 = vunpack.c.l.b16 %v2403
    %v2471 = vunpack.c.h.b16 %v2403
    %v2472 = vunpack.c.l.b16 %v2404
    %v2473 = vunpack.c.h.b16 %v2404
    %v2474 = vunpack.c.l.b16 %v2405
    %v2475 = vunpack.c.h.b16 %v2405
    %v2476 = vunpack.c.l.b16 %v2406
    %v2477 = vunpack.c.h.b16 %v2406
    %v2478 = vunpack.c.l.b16 %v2407
    %v2479 = vunpack.c.h.b16 %v2407
    %v2480 = vunpack.c.l.b16 %v2408
    %v2481 = vunpack.c.h.b16 %v2408
    %v2482 = vunpack.c.l.b16 %v2409
    %v2483 = vunpack.c.h.b16 %v2409
    %v2484 = vunpack.c.l.b16 %v2410
    %v2485 = vunpack.c.h.b16 %v2410
    %v2486 = vunpack.c.l.b16 %v2411
    %v2487 = vunpack.c.h.b16 %v2411
    %v2488 = vunpack.c.l.b16 %v2412
    %v2489 = vunpack.c.h.b16 %v2412
    %v2490 = vunpack.c.l.b16 %v2413
    %v2491 = vunpack.c.h.b16 %v2413
    %v2492 = vunpack.c.l.b16 %v2414
    %v2493 = vunpack.c.h.b16 %v2414
    %v2494 = vunpack.c.l.b16 %v2415
    %v2495 = vunpack.c.h.b16 %v2415
    %v2496 = vunpack.c.l.b16 %v2416
    %v2497 = vunpack.c.h.b16 %v2416
    %v2498 = vunpack.c.l.b16 %v2417
    %v2499 = vunpack.c.h.b16 %v2417
    %v2500 = vunpack.c.l.b16 %v2418
    %v2501 = vunpack.c.h.b16 %v2418
    %v2502 = vunpack.c.l.b16 %v2419
    %v2503 = vunpack.c.h.b16 %v2419
    %v2504 = vunpack.c.l.b16 %v2420
    %v2505 = vunpack.c.h.b16 %v2420
    %v2506 = vunpack.c.l.b16 %v2421
    %v2507 = vunpack.c.h.b16 %v2421
    %v2508 = vunpack.c.l.b16 %v2422
    %v2509 = vunpack.c.h.b16 %v2422
    %v2510 = vunpack.c.l.b16 %v2423
    %v2511 = vunpack.c.h.b16 %v2423
    %v2512 = vunpack.c.l.b16 %v2424
    %v2513 = vunpack.c.h.b16 %v2424
    %v2514 = vunpack.c.l.b16 %v2425
    %v2515 = vunpack.c.h.b16 %v2425
    %v2516 = vunpack.c.l.b16 %v2426
    %v2517 = vunpack.c.h.b16 %v2426
    %v2518 = vunpack.c.l.b16 %v2427
    %v2519 = vunpack.c.h.b16 %v2427
    %v2520 = vunpack.c.l.b16 %v2428
    %v2521 = vunpack.c.h.b16 %v2428
    %v2522 = vunpack.c.l.b16 %v2429
    %v2523 = vunpack.c.h.b16 %v2429
    %v2524 = vunpack.c.l.b16 %v2430
    %v2525 = vunpack.c.h.b16 %v2430
    %v2526 = vunpack.c.l.b16 %v2431
    %v2527 = vunpack.c.h.b16 %v2431
    %v2528 = vpack.c.b16 %v2468, %v2464
    %v2529 = vpack.c.b16 %v2469, %v2465
    %v2530 = vpack.c.b16 %v2470, %v2466
    %v2531 = vpack.c.b16 %v2471, %v2467
    %v2532 = vpack.c.b16 %v2476, %v2472
    %v2533 = vpack.c.b16 %v2477, %v2473
    %v2534 = vpack.c.b16 %v2478, %v2474
    %v2535 = vpack.c.b16 %v2479, %v2475
    %v2536 = vpack.c.b16 %v2484, %v2480
    %v2537 = vpack.c.b16 %v2485, %v2481
    %v2538 = vpack.c.b16 %v2486, %v2482
    %v2539 = vpack.c.b16 %v2487, %v2483
    %v2540 = vpack.c.b16 %v2492, %v2488
    %v2541 = vpack.c.b16 %v2493, %v2489
    %v2542 = vpack.c.b16 %v2494, %v2490
    %v2543 = vpack.c.b16 %v2495, %v2491
    %v2544 = vpack.c.b16 %v2500, %v2496
    %v2545 = vpack.c.b16 %v2501, %v2497
    %v2546 = vpack.c.b16 %v2502, %v2498
    %v2547 = vpack.c.b16 %v2503, %v2499
    %v2548 = vpack.c.b16 %v2508, %v2504
    %v2549 = vpack.c.b16 %v2509, %v2505
    %v2550 = vpack.c.b16 %v2510, %v2506
    %v2551 = vpack.c.b16 %v2511, %v2507
    %v2552 = vpack.c.b16 %v2516, %v2512
    %v2553 = vpack.c.b16 %v2517, %v2513
    %v2554 = vpack.c.b16 %v2518, %v2514
    %v2555 = vpack.c.b16 %v2519, %v2515
    %v2556 = vpack.c.b16 %v2524, %v2520
    %v2557 = vpack.c.b16 %v2525, %v2521
    %v2558 = vpack.c.b16 %v2526, %v2522
    %v2559 = vpack.c.b16 %v2527, %v2523
    %2592 = vmatpush.bf16.msra.mxu0 %v2556
    %2593 = vmatpush.bf16.msra.mxu0 %v2552
    %2594 = vmatpush.bf16.msra.mxu0 %v2548
    %2595 = vmatpush.bf16.msra.mxu0 %v2544
    %2596 = vmatpush.bf16.msra.mxu0 %v2540
    %2597 = vmatpush.bf16.msra.mxu0 %v2536
    %2598 = vmatpush.bf16.msra.mxu0 %v2532
    %2599 = vmatpush.bf16.msra.mxu0 %v2528
    %2600 = vmatmul.bf16.gmra.mxu0 %v2399
    %v2601 = vpop.f32.mrf.mxu0
    %v2602 = vadd.f32 0.0, %v2601
    %v2603 = vpop.f32.mrf.mxu0
    %2604 = vdwg.mxu0
    %2605 = vmatpush.bf16.msra.mxu0 %v2557
    %2606 = vmatpush.bf16.msra.mxu0 %v2553
    %2607 = vmatpush.bf16.msra.mxu0 %v2549
    %2608 = vmatpush.bf16.msra.mxu0 %v2545
    %2609 = vmatpush.bf16.msra.mxu0 %v2541
    %2610 = vmatpush.bf16.msra.mxu0 %v2537
    %2611 = vmatpush.bf16.msra.mxu0 %v2533
    %2612 = vmatpush.bf16.msra.mxu0 %v2529
    %2613 = vmatmul.bf16.gmra.mxu0 %v2399
    %v2614 = vpop.f32.mrf.mxu0
    %v2615 = vadd.f32 0.0, %v2614
    %v2616 = vpop.f32.mrf.mxu0
    %2617 = vdwg.mxu0
    %2618 = vmatpush.bf16.msra.mxu0 %v2558
    %2619 = vmatpush.bf16.msra.mxu0 %v2554
    %2620 = vmatpush.bf16.msra.mxu0 %v2550
    %2621 = vmatpush.bf16.msra.mxu0 %v2546
    %2622 = vmatpush.bf16.msra.mxu0 %v2542
    %2623 = vmatpush.bf16.msra.mxu0 %v2538
    %2624 = vmatpush.bf16.msra.mxu0 %v2534
    %2625 = vmatpush.bf16.msra.mxu0 %v2530
    %2626 = vmatmul.bf16.gmra.mxu0 %v2399
    %v2627 = vpop.f32.mrf.mxu0
    %v2628 = vadd.f32 0.0, %v2627
    %v2629 = vpop.f32.mrf.mxu0
    %2630 = vdwg.mxu0
    %2631 = vmatpush.bf16.msra.mxu0 %v2559
    %2632 = vmatpush.bf16.msra.mxu0 %v2555
    %2633 = vmatpush.bf16.msra.mxu0 %v2551
    %2634 = vmatpush.bf16.msra.mxu0 %v2547
    %2635 = vmatpush.bf16.msra.mxu0 %v2543
    %2636 = vmatpush.bf16.msra.mxu0 %v2539
    %2637 = vmatpush.bf16.msra.mxu0 %v2535
    %2638 = vmatpush.bf16.msra.mxu0 %v2531
    %2639 = vmatmul.bf16.gmra.mxu0 %v2399
    %v2640 = vpop.f32.mrf.mxu0
    %v2641 = vadd.f32 0.0, %v2640
    %v2642 = vpop.f32.mrf.mxu0
    %2643 = vdwg.mxu0
    %v2644 = vadd.f32 %v2395, %v2602
    %v2645 = vadd.f32 %v2396, %v2615
    %v2646 = vadd.f32 %v2397, %v2628
    %v2647 = vadd.f32 %v2398, %v2641
    %v2648 = vxor.u32 %v2644, 2147483648
    %v2649 = vmul.f32 %v2648, 1.442695
    %v2650 = vpow.pop %v2649
    %v2651 = vadd.f32 %v2650, 1.0
    %v2652 = vrcp.pop %v2651
    %v2653 = vmul.f32 %v2651, %v2652
    %v2654 = vsub.f32 1.0, %v2653
    %v2655 = vmul.f32 %v2652, %v2654
    %v2656 = vadd.f32 %v2652, %v2655
    %vm2657 = vweird.f32 %v2651
    %vm2658 = vweird.f32 %v2652
    %vm2659 = vmor %vm2657, %vm2658
    %v2660 = vsel %vm2659, %v2652, %v2656
    %v2661 = vand.u32 2147483647, %v2651
    %vm2662 = vcmp.eq.f32.partialorder %v2661, 8.507059e+37
    %v2663 = vand.u32 %v2651, 2147483648
    %v2664 = vor.u32 1.1754944e-38, %v2663
    %v2665 = vsel %vm2662, %v2664, %v2660
    %v2666 = vmul.f32 1.0, %v2665
    %v2667 = vxor.u32 %v2645, 2147483648
    %v2668 = vmul.f32 %v2667, 1.442695
    %v2669 = vpow.pop %v2668
    %v2670 = vadd.f32 %v2669, 1.0
    %v2671 = vrcp.pop %v2670
    %v2672 = vmul.f32 %v2670, %v2671
    %v2673 = vsub.f32 1.0, %v2672
    %v2674 = vmul.f32 %v2671, %v2673
    %v2675 = vadd.f32 %v2671, %v2674
    %vm2676 = vweird.f32 %v2670
    %vm2677 = vweird.f32 %v2671
    %vm2678 = vmor %vm2676, %vm2677
    %v2679 = vsel %vm2678, %v2671, %v2675
    %v2680 = vand.u32 2147483647, %v2670
    %vm2681 = vcmp.eq.f32.partialorder %v2680, 8.507059e+37
    %v2682 = vand.u32 %v2670, 2147483648
    %v2683 = vor.u32 1.1754944e-38, %v2682
    %v2684 = vsel %vm2681, %v2683, %v2679
    %v2685 = vmul.f32 1.0, %v2684
    %v2686 = vtanh.pop %v2646
    %v2687 = vxor.u32 %v2647, 2147483648
    %v2688 = vmul.f32 %v2687, 1.442695
    %v2689 = vpow.pop %v2688
    %v2690 = vadd.f32 %v2689, 1.0
    %v2691 = vrcp.pop %v2690
    %v2692 = vmul.f32 %v2690, %v2691
    %v2693 = vsub.f32 1.0, %v2692
    %v2694 = vmul.f32 %v2691, %v2693
    %v2695 = vadd.f32 %v2691, %v2694
    %vm2696 = vweird.f32 %v2690
    %vm2697 = vweird.f32 %v2691
    %vm2698 = vmor %vm2696, %vm2697
    %v2699 = vsel %vm2698, %v2691, %v2695
    %v2700 = vand.u32 2147483647, %v2690
    %vm2701 = vcmp.eq.f32.partialorder %v2700, 8.507059e+37
    %v2702 = vand.u32 %v2690, 2147483648
    %v2703 = vor.u32 1.1754944e-38, %v2702
    %v2704 = vsel %vm2701, %v2703, %v2699
    %v2705 = vmul.f32 1.0, %v2704
    %v2706 = vmul.f32 %v2685, %v2389
    %v2707 = vmul.f32 %v2666, %v2686
    %v2708 = vadd.f32 %v2706, %v2707
    %v2709 = vtanh.pop %v2708
    %v2710 = vmul.f32 %v2705, %v2709
    %s2711 = scalar_lea.vmem [#allocation12], 48
    %2712 = vst [vmem:[%s2711] sm:$0xff] %v2710
    %s2713 = scalar_lea.vmem [#allocation2], 224
    %v2714 = vld [vmem:[%s2713] sm:$0xff]
    %v2715 = vld [vmem:[%s2713 + $0x8] sm:$0xff]
    %v2716 = vld [vmem:[%s2713 + $0x10] sm:$0xff]
    %v2717 = vld [vmem:[%s2713 + $0x18] sm:$0xff]
    %v2718 = vpack.c.bf16 %v2710, %v2710
    %v2719 = vld [vmem:[#allocation11] sm:$0xff]
    %v2720 = vld [vmem:[#allocation11 + $0x8] sm:$0xff]
    %v2721 = vld [vmem:[#allocation11 + $0x10] sm:$0xff]
    %v2722 = vld [vmem:[#allocation11 + $0x18] sm:$0xff]
    %v2723 = vld [vmem:[#allocation11 + $0x20] sm:$0xff]
    %v2724 = vld [vmem:[#allocation11 + $0x28] sm:$0xff]
    %v2725 = vld [vmem:[#allocation11 + $0x30] sm:$0xff]
    %v2726 = vld [vmem:[#allocation11 + $0x38] sm:$0xff]
    %v2727 = vld [vmem:[#allocation11 + $0x40] sm:$0xff]
    %v2728 = vld [vmem:[#allocation11 + $0x48] sm:$0xff]
    %v2729 = vld [vmem:[#allocation11 + $0x50] sm:$0xff]
    %v2730 = vld [vmem:[#allocation11 + $0x58] sm:$0xff]
    %v2731 = vld [vmem:[#allocation11 + $0x60] sm:$0xff]
    %v2732 = vld [vmem:[#allocation11 + $0x68] sm:$0xff]
    %v2733 = vld [vmem:[#allocation11 + $0x70] sm:$0xff]
    %v2734 = vld [vmem:[#allocation11 + $0x78] sm:$0xff]
    %v2735 = vld [vmem:[#allocation11 + $0x80] sm:$0xff]
    %v2736 = vld [vmem:[#allocation11 + $0x88] sm:$0xff]
    %v2737 = vld [vmem:[#allocation11 + $0x90] sm:$0xff]
    %v2738 = vld [vmem:[#allocation11 + $0x98] sm:$0xff]
    %v2739 = vld [vmem:[#allocation11 + $0xa0] sm:$0xff]
    %v2740 = vld [vmem:[#allocation11 + $0xa8] sm:$0xff]
    %v2741 = vld [vmem:[#allocation11 + $0xb0] sm:$0xff]
    %v2742 = vld [vmem:[#allocation11 + $0xb8] sm:$0xff]
    %v2743 = vld [vmem:[#allocation11 + $0xc0] sm:$0xff]
    %v2744 = vld [vmem:[#allocation11 + $0xc8] sm:$0xff]
    %v2745 = vld [vmem:[#allocation11 + $0xd0] sm:$0xff]
    %v2746 = vld [vmem:[#allocation11 + $0xd8] sm:$0xff]
    %v2747 = vld [vmem:[#allocation11 + $0xe0] sm:$0xff]
    %v2748 = vld [vmem:[#allocation11 + $0xe8] sm:$0xff]
    %v2749 = vld [vmem:[#allocation11 + $0xf0] sm:$0xff]
    %v2750 = vld [vmem:[#allocation11 + $0xf8] sm:$0xff]
    %v2783 = vunpack.c.l.b16 %v2719
    %v2784 = vunpack.c.h.b16 %v2719
    %v2785 = vunpack.c.l.b16 %v2720
    %v2786 = vunpack.c.h.b16 %v2720
    %v2787 = vunpack.c.l.b16 %v2721
    %v2788 = vunpack.c.h.b16 %v2721
    %v2789 = vunpack.c.l.b16 %v2722
    %v2790 = vunpack.c.h.b16 %v2722
    %v2791 = vunpack.c.l.b16 %v2723
    %v2792 = vunpack.c.h.b16 %v2723
    %v2793 = vunpack.c.l.b16 %v2724
    %v2794 = vunpack.c.h.b16 %v2724
    %v2795 = vunpack.c.l.b16 %v2725
    %v2796 = vunpack.c.h.b16 %v2725
    %v2797 = vunpack.c.l.b16 %v2726
    %v2798 = vunpack.c.h.b16 %v2726
    %v2799 = vunpack.c.l.b16 %v2727
    %v2800 = vunpack.c.h.b16 %v2727
    %v2801 = vunpack.c.l.b16 %v2728
    %v2802 = vunpack.c.h.b16 %v2728
    %v2803 = vunpack.c.l.b16 %v2729
    %v2804 = vunpack.c.h.b16 %v2729
    %v2805 = vunpack.c.l.b16 %v2730
    %v2806 = vunpack.c.h.b16 %v2730
    %v2807 = vunpack.c.l.b16 %v2731
    %v2808 = vunpack.c.h.b16 %v2731
    %v2809 = vunpack.c.l.b16 %v2732
    %v2810 = vunpack.c.h.b16 %v2732
    %v2811 = vunpack.c.l.b16 %v2733
    %v2812 = vunpack.c.h.b16 %v2733
    %v2813 = vunpack.c.l.b16 %v2734
    %v2814 = vunpack.c.h.b16 %v2734
    %v2815 = vunpack.c.l.b16 %v2735
    %v2816 = vunpack.c.h.b16 %v2735
    %v2817 = vunpack.c.l.b16 %v2736
    %v2818 = vunpack.c.h.b16 %v2736
    %v2819 = vunpack.c.l.b16 %v2737
    %v2820 = vunpack.c.h.b16 %v2737
    %v2821 = vunpack.c.l.b16 %v2738
    %v2822 = vunpack.c.h.b16 %v2738
    %v2823 = vunpack.c.l.b16 %v2739
    %v2824 = vunpack.c.h.b16 %v2739
    %v2825 = vunpack.c.l.b16 %v2740
    %v2826 = vunpack.c.h.b16 %v2740
    %v2827 = vunpack.c.l.b16 %v2741
    %v2828 = vunpack.c.h.b16 %v2741
    %v2829 = vunpack.c.l.b16 %v2742
    %v2830 = vunpack.c.h.b16 %v2742
    %v2831 = vunpack.c.l.b16 %v2743
    %v2832 = vunpack.c.h.b16 %v2743
    %v2833 = vunpack.c.l.b16 %v2744
    %v2834 = vunpack.c.h.b16 %v2744
    %v2835 = vunpack.c.l.b16 %v2745
    %v2836 = vunpack.c.h.b16 %v2745
    %v2837 = vunpack.c.l.b16 %v2746
    %v2838 = vunpack.c.h.b16 %v2746
    %v2839 = vunpack.c.l.b16 %v2747
    %v2840 = vunpack.c.h.b16 %v2747
    %v2841 = vunpack.c.l.b16 %v2748
    %v2842 = vunpack.c.h.b16 %v2748
    %v2843 = vunpack.c.l.b16 %v2749
    %v2844 = vunpack.c.h.b16 %v2749
    %v2845 = vunpack.c.l.b16 %v2750
    %v2846 = vunpack.c.h.b16 %v2750
    %v2847 = vpack.c.b16 %v2787, %v2783
    %v2848 = vpack.c.b16 %v2788, %v2784
    %v2849 = vpack.c.b16 %v2789, %v2785
    %v2850 = vpack.c.b16 %v2790, %v2786
    %v2851 = vpack.c.b16 %v2795, %v2791
    %v2852 = vpack.c.b16 %v2796, %v2792
    %v2853 = vpack.c.b16 %v2797, %v2793
    %v2854 = vpack.c.b16 %v2798, %v2794
    %v2855 = vpack.c.b16 %v2803, %v2799
    %v2856 = vpack.c.b16 %v2804, %v2800
    %v2857 = vpack.c.b16 %v2805, %v2801
    %v2858 = vpack.c.b16 %v2806, %v2802
    %v2859 = vpack.c.b16 %v2811, %v2807
    %v2860 = vpack.c.b16 %v2812, %v2808
    %v2861 = vpack.c.b16 %v2813, %v2809
    %v2862 = vpack.c.b16 %v2814, %v2810
    %v2863 = vpack.c.b16 %v2819, %v2815
    %v2864 = vpack.c.b16 %v2820, %v2816
    %v2865 = vpack.c.b16 %v2821, %v2817
    %v2866 = vpack.c.b16 %v2822, %v2818
    %v2867 = vpack.c.b16 %v2827, %v2823
    %v2868 = vpack.c.b16 %v2828, %v2824
    %v2869 = vpack.c.b16 %v2829, %v2825
    %v2870 = vpack.c.b16 %v2830, %v2826
    %v2871 = vpack.c.b16 %v2835, %v2831
    %v2872 = vpack.c.b16 %v2836, %v2832
    %v2873 = vpack.c.b16 %v2837, %v2833
    %v2874 = vpack.c.b16 %v2838, %v2834
    %v2875 = vpack.c.b16 %v2843, %v2839
    %v2876 = vpack.c.b16 %v2844, %v2840
    %v2877 = vpack.c.b16 %v2845, %v2841
    %v2878 = vpack.c.b16 %v2846, %v2842
    %2911 = vmatpush.bf16.msra.mxu0 %v2875
    %2912 = vmatpush.bf16.msra.mxu0 %v2871
    %2913 = vmatpush.bf16.msra.mxu0 %v2867
    %2914 = vmatpush.bf16.msra.mxu0 %v2863
    %2915 = vmatpush.bf16.msra.mxu0 %v2859
    %2916 = vmatpush.bf16.msra.mxu0 %v2855
    %2917 = vmatpush.bf16.msra.mxu0 %v2851
    %2918 = vmatpush.bf16.msra.mxu0 %v2847
    %2919 = vmatmul.bf16.gmra.mxu0 %v2718
    %v2920 = vpop.f32.mrf.mxu0
    %v2921 = vadd.f32 0.0, %v2920
    %v2922 = vpop.f32.mrf.mxu0
    %2923 = vdwg.mxu0
    %2924 = vmatpush.bf16.msra.mxu0 %v2876
    %2925 = vmatpush.bf16.msra.mxu0 %v2872
    %2926 = vmatpush.bf16.msra.mxu0 %v2868
    %2927 = vmatpush.bf16.msra.mxu0 %v2864
    %2928 = vmatpush.bf16.msra.mxu0 %v2860
    %2929 = vmatpush.bf16.msra.mxu0 %v2856
    %2930 = vmatpush.bf16.msra.mxu0 %v2852
    %2931 = vmatpush.bf16.msra.mxu0 %v2848
    %2932 = vmatmul.bf16.gmra.mxu0 %v2718
    %v2933 = vpop.f32.mrf.mxu0
    %v2934 = vadd.f32 0.0, %v2933
    %v2935 = vpop.f32.mrf.mxu0
    %2936 = vdwg.mxu0
    %2937 = vmatpush.bf16.msra.mxu0 %v2877
    %2938 = vmatpush.bf16.msra.mxu0 %v2873
    %2939 = vmatpush.bf16.msra.mxu0 %v2869
    %2940 = vmatpush.bf16.msra.mxu0 %v2865
    %2941 = vmatpush.bf16.msra.mxu0 %v2861
    %2942 = vmatpush.bf16.msra.mxu0 %v2857
    %2943 = vmatpush.bf16.msra.mxu0 %v2853
    %2944 = vmatpush.bf16.msra.mxu0 %v2849
    %2945 = vmatmul.bf16.gmra.mxu0 %v2718
    %v2946 = vpop.f32.mrf.mxu0
    %v2947 = vadd.f32 0.0, %v2946
    %v2948 = vpop.f32.mrf.mxu0
    %2949 = vdwg.mxu0
    %2950 = vmatpush.bf16.msra.mxu0 %v2878
    %2951 = vmatpush.bf16.msra.mxu0 %v2874
    %2952 = vmatpush.bf16.msra.mxu0 %v2870
    %2953 = vmatpush.bf16.msra.mxu0 %v2866
    %2954 = vmatpush.bf16.msra.mxu0 %v2862
    %2955 = vmatpush.bf16.msra.mxu0 %v2858
    %2956 = vmatpush.bf16.msra.mxu0 %v2854
    %2957 = vmatpush.bf16.msra.mxu0 %v2850
    %2958 = vmatmul.bf16.gmra.mxu0 %v2718
    %v2959 = vpop.f32.mrf.mxu0
    %v2960 = vadd.f32 0.0, %v2959
    %v2961 = vpop.f32.mrf.mxu0
    %2962 = vdwg.mxu0
    %v2963 = vadd.f32 %v2714, %v2921
    %v2964 = vadd.f32 %v2715, %v2934
    %v2965 = vadd.f32 %v2716, %v2947
    %v2966 = vadd.f32 %v2717, %v2960
    %v2967 = vxor.u32 %v2963, 2147483648
    %v2968 = vmul.f32 %v2967, 1.442695
    %v2969 = vpow.pop %v2968
    %v2970 = vadd.f32 %v2969, 1.0
    %v2971 = vrcp.pop %v2970
    %v2972 = vmul.f32 %v2970, %v2971
    %v2973 = vsub.f32 1.0, %v2972
    %v2974 = vmul.f32 %v2971, %v2973
    %v2975 = vadd.f32 %v2971, %v2974
    %vm2976 = vweird.f32 %v2970
    %vm2977 = vweird.f32 %v2971
    %vm2978 = vmor %vm2976, %vm2977
    %v2979 = vsel %vm2978, %v2971, %v2975
    %v2980 = vand.u32 2147483647, %v2970
    %vm2981 = vcmp.eq.f32.partialorder %v2980, 8.507059e+37
    %v2982 = vand.u32 %v2970, 2147483648
    %v2983 = vor.u32 1.1754944e-38, %v2982
    %v2984 = vsel %vm2981, %v2983, %v2979
    %v2985 = vmul.f32 1.0, %v2984
    %v2986 = vxor.u32 %v2964, 2147483648
    %v2987 = vmul.f32 %v2986, 1.442695
    %v2988 = vpow.pop %v2987
    %v2989 = vadd.f32 %v2988, 1.0
    %v2990 = vrcp.pop %v2989
    %v2991 = vmul.f32 %v2989, %v2990
    %v2992 = vsub.f32 1.0, %v2991
    %v2993 = vmul.f32 %v2990, %v2992
    %v2994 = vadd.f32 %v2990, %v2993
    %vm2995 = vweird.f32 %v2989
    %vm2996 = vweird.f32 %v2990
    %vm2997 = vmor %vm2995, %vm2996
    %v2998 = vsel %vm2997, %v2990, %v2994
    %v2999 = vand.u32 2147483647, %v2989
    %vm3000 = vcmp.eq.f32.partialorder %v2999, 8.507059e+37
    %v3001 = vand.u32 %v2989, 2147483648
    %v3002 = vor.u32 1.1754944e-38, %v3001
    %v3003 = vsel %vm3000, %v3002, %v2998
    %v3004 = vmul.f32 1.0, %v3003
    %v3005 = vtanh.pop %v2965
    %v3006 = vxor.u32 %v2966, 2147483648
    %v3007 = vmul.f32 %v3006, 1.442695
    %v3008 = vpow.pop %v3007
    %v3009 = vadd.f32 %v3008, 1.0
    %v3010 = vrcp.pop %v3009
    %v3011 = vmul.f32 %v3009, %v3010
    %v3012 = vsub.f32 1.0, %v3011
    %v3013 = vmul.f32 %v3010, %v3012
    %v3014 = vadd.f32 %v3010, %v3013
    %vm3015 = vweird.f32 %v3009
    %vm3016 = vweird.f32 %v3010
    %vm3017 = vmor %vm3015, %vm3016
    %v3018 = vsel %vm3017, %v3010, %v3014
    %v3019 = vand.u32 2147483647, %v3009
    %vm3020 = vcmp.eq.f32.partialorder %v3019, 8.507059e+37
    %v3021 = vand.u32 %v3009, 2147483648
    %v3022 = vor.u32 1.1754944e-38, %v3021
    %v3023 = vsel %vm3020, %v3022, %v3018
    %v3024 = vmul.f32 1.0, %v3023
    %v3025 = vmul.f32 %v3004, %v2708
    %v3026 = vmul.f32 %v2985, %v3005
    %v3027 = vadd.f32 %v3025, %v3026
    %v3028 = vtanh.pop %v3027
    %v3029 = vmul.f32 %v3024, %v3028
    %s3030 = scalar_lea.vmem [#allocation12], 56
    %3031 = vst [vmem:[%s3030] sm:$0xff] %v3029
    // Predicated region
    $region46: #{tpu_custom_call.1} parent=1 // pred_check
      _
    $region47: #{tpu_custom_call.1} parent=1 // pred_check_branch
      %3033 = sbr.rel (0) target = $region49
    $region48: #{tpu_custom_call.1} parent=1 // pred_region
      %3035 = vsyncadd [#allocation5], 0
      %s3036 = sshll.u32 [#allocation12], 4
      %s3037 = int_to_ptr.vmem [resolvable:$true] %s3036
      %s3038 = sshll.u32 %s6, 4
      %s3039 = int_to_ptr.hbm [resolvable:$true] %s3038
      %3044 = dma.vmem_to_hbm [thread:$0]  %s3037, 1024, %s3039, [#allocation5], 128, 128, 8
    $region49: #{tpu_custom_call.1} parent=1 // pred_fallthru
      _
    // Predicated region
    $region50: #{tpu_custom_call.1} parent=1 // pred_check
      _
    $region51: #{tpu_custom_call.1} parent=1 // pred_check_branch
      %3046 = sbr.rel (0) target = $region53
    $region52: #{tpu_custom_call.1} parent=1 // pred_region
      %3048 = dma.done [#allocation5], 1024
    $region53: #{tpu_custom_call.1} parent=1 // pred_fallthru
      _
    %3049 = vsyncpa [#allocation4], 1
    %3050 = vsyncpa [#allocation7], 1
    %3051 = vsyncpa [#allocation10], 1
    %3052 = vsyncpa [#allocation5], 1

</llo_original>
